<compile_context>
chip_gen: v6e
topology: v6e:2x2x1
jax: 0.10.0
libtpu: 0.0.40
codegen_flags: <defaults>
</compile_context>

<pallas_src>
import functools

import jax
import jax.numpy as jnp
from jax.experimental import pallas as pl
from jax.experimental.pallas import tpu as pltpu

LN_EPS = 1e-5                       # PyTorch nn.LayerNorm default
VMEM_LIMIT_BYTES = 48 * 1024 * 1024 # above the 32 MiB scoped default, safe on v5e/v6e/v7x


def _layernorm(x, gamma, beta):
    mu = jnp.mean(x, axis=-1, keepdims=True)
    var = jnp.mean((x - mu) ** 2, axis=-1, keepdims=True)
    return (x - mu) * jax.lax.rsqrt(var + LN_EPS) * gamma + beta


def _pick_tile(n, target, align):
    """Largest multiple of `align` that divides n and is <= target, else n (full block)."""
    if n <= target:
        return n
    start = (target // align) * align
    for cand in range(start, 0, -align):
        if n % cand == 0:
            return cand
    return n


# --------------------------------------------------------------------------
# Kernel 1: feature embedding (1x1 conv == matmul over channels) + pos embed
# --------------------------------------------------------------------------
def embed_kernel(x_ref, w_ref, b_ref, pos_ref, o_ref):
    y = jnp.dot(x_ref[...].astype(jnp.bfloat16), w_ref[...],
                preferred_element_type=jnp.float32)
    o_ref[...] = (y + b_ref[...] + pos_ref[...]).astype(o_ref.dtype)


def feature_embed(x_tok, w_bf16, b, pos, *, tile_hw):
    B, HW, C = x_tok.shape
    D = w_bf16.shape[1]
    nt = HW // tile_hw
    return pl.pallas_call(
        embed_kernel,
        out_shape=jax.ShapeDtypeStruct((B, HW, D), jnp.float32),
        grid=(B, nt),
        in_specs=[
            pl.BlockSpec((None, tile_hw, C), lambda b, t: (b, t, 0)),
            pl.BlockSpec((C, D), lambda b, t: (0, 0)),
            pl.BlockSpec((1, D), lambda b, t: (0, 0)),
            pl.BlockSpec((tile_hw, D), lambda b, t: (t, 0)),
        ],
        out_specs=pl.BlockSpec((None, tile_hw, D), lambda b, t: (b, t, 0)),
        compiler_params=pltpu.CompilerParams(
            dimension_semantics=("parallel", "parallel"),
            vmem_limit_bytes=VMEM_LIMIT_BYTES),
    )(x_tok, w_bf16, b, pos)


# --------------------------------------------------------------------------
# Kernel 2: one pre-norm transformer block (MHSA + GELU MLP), tiled over tokens
# --------------------------------------------------------------------------
def block_kernel(x_ref, ln1g_ref, ln1b_ref, wqkv_ref, bqkv_ref, wo_ref, bo_ref,
                 ln2g_ref, ln2b_ref, w1_ref, b1_ref, w2_ref, b2_ref,
                 o_ref, qs_ref, ks_ref, vs_ref, ctx_ref, *, nhead, tq):
    t = pl.program_id(1)
    N, D = x_ref.shape
    hd = D // nhead
    scale = hd ** -0.5

    # Once per batch item: LN1 + fused QKV projection for ALL tokens, stored
    # head-major in bf16 scratch (Q/K/V stay resident across the query tiles).
    # The softmax scale is folded into Q here (N*D mults) instead of into every
    # (nhead, tq, N) score tile.
    @pl.when(t == 0)
    def _():
        xn = _layernorm(x_ref[...], ln1g_ref[...], ln1b_ref[...])
        qkv = jnp.dot(xn.astype(jnp.bfloat16), wqkv_ref[...],
                      preferred_element_type=jnp.float32) + bqkv_ref[...]
        for h in range(nhead):                       # static lane slices -> per-head layout
            qs_ref[h] = (qkv[:, h * hd:(h + 1) * hd] * scale).astype(jnp.bfloat16)
            ks_ref[h] = qkv[:, D + h * hd:D + (h + 1) * hd].astype(jnp.bfloat16)
            vs_ref[h] = qkv[:, 2 * D + h * hd:2 * D + (h + 1) * hd].astype(jnp.bfloat16)

    # ---- attention for this query tile (all heads batched through the MXU) ----
    row0 = pl.multiple_of(t * tq, tq)
    x_t = x_ref[pl.ds(row0, tq), :]                          # (tq, D) residual input, f32
    qh = qs_ref[:, pl.ds(row0, tq), :]                       # (h, tq, hd) bf16, pre-scaled
    s = jnp.einsum('hqd,hkd->hqk', qh, ks_ref[...],
                   preferred_element_type=jnp.float32)
    s = s - jnp.max(s, axis=-1, keepdims=True)
    p = jnp.exp(s)
    # EUP reciprocal instead of a VALU divide (approx; swap for exact div if bit-parity needed)
    p = p * pl.reciprocal(jnp.sum(p, axis=-1, keepdims=True), approx=True)
    ctx = jnp.einsum('hqk,hkd->hqd', p.astype(jnp.bfloat16), vs_ref[...],
                     preferred_element_type=jnp.float32)     # (h, tq, hd)
    for h in range(nhead):                                   # concat heads along lanes
        ctx_ref[:, h * hd:(h + 1) * hd] = ctx[h].astype(jnp.bfloat16)
    attn = jnp.dot(ctx_ref[...], wo_ref[...],                # ONE full-width output matmul
                   preferred_element_type=jnp.float32) + bo_ref[...]
    x_t = x_t + attn

    # ---- MLP ----
    xn2 = _layernorm(x_t, ln2g_ref[...], ln2b_ref[...])
    h1 = jnp.dot(xn2.astype(jnp.bfloat16), w1_ref[...],
                 preferred_element_type=jnp.float32) + b1_ref[...]
    # TODO(synk): PyTorch nn.GELU default is the exact erf form; tanh approximation used here.
    h1 = jax.nn.gelu(h1, approximate=True)
    mlp = jnp.dot(h1.astype(jnp.bfloat16), w2_ref[...],
                  preferred_element_type=jnp.float32) + b2_ref[...]
    o_ref[...] = (x_t + mlp).astype(o_ref.dtype)


def transformer_block(x, p, *, nhead, tq):
    B, N, D = x.shape
    F = p['w1'].shape[1]
    nt = N // tq
    const = lambda shape: pl.BlockSpec(shape, lambda b, t: (0,) * len(shape))
    return pl.pallas_call(
        functools.partial(block_kernel, nhead=nhead, tq=tq),
        out_shape=jax.ShapeDtypeStruct((B, N, D), jnp.float32),
        grid=(B, nt),
        in_specs=[
            pl.BlockSpec((None, N, D), lambda b, t: (b, 0, 0)),   # full seq, resident per b
            const((1, D)), const((1, D)),          # ln1 gamma/beta
            const((D, 3 * D)), const((1, 3 * D)),  # qkv (bf16) / bias
            const((D, D)), const((1, D)),          # out proj (bf16) / bias
            const((1, D)), const((1, D)),          # ln2 gamma/beta
            const((D, F)), const((1, F)),          # mlp fc1 (bf16) / bias
            const((F, D)), const((1, D)),          # mlp fc2 (bf16) / bias
        ],
        out_specs=pl.BlockSpec((None, tq, D), lambda b, t: (b, t, 0)),
        scratch_shapes=[
            pltpu.VMEM((nhead, N, D // nhead), jnp.bfloat16),     # Q (head-major, pre-scaled)
            pltpu.VMEM((nhead, N, D // nhead), jnp.bfloat16),     # K
            pltpu.VMEM((nhead, N, D // nhead), jnp.bfloat16),     # V
            pltpu.VMEM((tq, D), jnp.bfloat16),                    # concat(ctx heads)
        ],
        input_output_aliases={0: 0},               # update the residual stream in place
        compiler_params=pltpu.CompilerParams(
            dimension_semantics=("parallel", "arbitrary"),
            vmem_limit_bytes=VMEM_LIMIT_BYTES),
    )(x, p['ln1_g'], p['ln1_b'], p['wqkv'], p['bqkv'], p['wo'], p['bo'],
      p['ln2_g'], p['ln2_b'], p['w1'], p['b1'], p['w2'], p['b2'])


# --------------------------------------------------------------------------
# Kernel 3: segmentation head; masks produced transposed (n_cls, HW) -> lane-dense
# --------------------------------------------------------------------------
def head_kernel(xp_ref, xc_ref, dng_ref, dnb_ref, pp_ref, pc_ref, mng_ref, mnb_ref,
                o_ref, cls_ref):
    t = pl.program_id(1)

    # Once per batch item: decoder LN + class projection + L2 normalize class feats.
    @pl.when(t == 0)
    def _():
        c = _layernorm(xc_ref[...], dng_ref[...], dnb_ref[...])
        c = jnp.dot(c.astype(jnp.bfloat16), pc_ref[...],
                    preferred_element_type=jnp.float32)
        c = c * jax.lax.rsqrt(jnp.sum(c * c, axis=-1, keepdims=True))
        cls_ref[...] = c.astype(jnp.bfloat16)

    p = _layernorm(xp_ref[...], dng_ref[...], dnb_ref[...])
    p = jnp.dot(p.astype(jnp.bfloat16), pp_ref[...],
                preferred_element_type=jnp.float32)
    p = p * jax.lax.rsqrt(jnp.sum(p * p, axis=-1, keepdims=True))
    # masks transposed: (n_cls, thw)  == cls @ patches^T  (HW on the lane axis)
    m = jax.lax.dot_general(cls_ref[...], p.astype(jnp.bfloat16),
                            dimension_numbers=(((1,), (1,)), ((), ())),
                            preferred_element_type=jnp.float32)
    # mask_norm: LayerNorm over the class axis (= axis 0 in this transposed layout)
    mu = jnp.mean(m, axis=0, keepdims=True)
    var = jnp.mean((m - mu) ** 2, axis=0, keepdims=True)
    m = (m - mu) * jax.lax.rsqrt(var + LN_EPS) * mng_ref[...] + mnb_ref[...]
    o_ref[...] = m.astype(o_ref.dtype)


def seg_head(x_patch, x_cls, dn_g, dn_b, pp_bf, pc_bf, mn_g, mn_b, *, tile_hw):
    B, HW, D = x_patch.shape
    n_cls = x_cls.shape[1]
    nt = HW // tile_hw
    return pl.pallas_call(
        head_kernel,
        out_shape=jax.ShapeDtypeStruct((B, n_cls, HW), jnp.float32),
        grid=(B, nt),
        in_specs=[
            pl.BlockSpec((None, tile_hw, D), lambda b, t: (b, t, 0)),
            pl.BlockSpec((None, n_cls, D), lambda b, t: (b, 0, 0)),
            pl.BlockSpec((1, D), lambda b, t: (0, 0)),
            pl.BlockSpec((1, D), lambda b, t: (0, 0)),
            pl.BlockSpec((D, D), lambda b, t: (0, 0)),
            pl.BlockSpec((D, D), lambda b, t: (0, 0)),
            pl.BlockSpec((n_cls, 1), lambda b, t: (0, 0)),
            pl.BlockSpec((n_cls, 1), lambda b, t: (0, 0)),
        ],
        out_specs=pl.BlockSpec((None, n_cls, tile_hw), lambda b, t: (b, 0, t)),
        scratch_shapes=[pltpu.VMEM((n_cls, D), jnp.bfloat16)],
        compiler_params=pltpu.CompilerParams(
            dimension_semantics=("parallel", "arbitrary"),
            vmem_limit_bytes=VMEM_LIMIT_BYTES),
    )(x_patch, x_cls, dn_g, dn_b, pp_bf, pc_bf, mn_g, mn_b)


# --------------------------------------------------------------------------
# Full forward (glue in plain JAX)
# --------------------------------------------------------------------------
def transformer_head_forward(x_nchw, params, *, nhead):
    B, C, H, W = x_nchw.shape
    HW = H * W
    D = params['emb_w'].shape[1]
    n_cls = params['class_tokens'].shape[1]
    bf16 = jnp.bfloat16

    # NCHW -> (B, HW, C)   ('b c h w -> b (h w) c')
    x_tok = jnp.transpose(x_nchw, (0, 2, 3, 1)).reshape(B, HW, C)
    pos = jnp.transpose(params['pos_embed'][0], (1, 2, 0)).reshape(HW, D)
    x = feature_embed(x_tok, params['emb_w'].astype(bf16), params['emb_b'], pos,
                      tile_hw=_pick_tile(HW, 256, 8))

    cls = jnp.broadcast_to(params['class_tokens'], (B, n_cls, D))
    x = jnp.concatenate([x, cls], axis=1)                    # (B, HW + n_cls, D)
    N = HW + n_cls
    tq = _pick_tile(N, 256, 8)
    for blk in params['blocks']:
        blk_c = dict(blk, wqkv=blk['wqkv'].astype(bf16), wo=blk['wo'].astype(bf16),
                     w1=blk['w1'].astype(bf16), w2=blk['w2'].astype(bf16))
        x = transformer_block(x, blk_c, nhead=nhead, tq=tq)

    masks_t = seg_head(x[:, :HW], x[:, HW:],                 # split patches / class rows
                       params['dn_g'], params['dn_b'],
                       params['proj_patch'].astype(bf16),
                       params['proj_classes'].astype(bf16),
                       params['mn_g'], params['mn_b'],
                       tile_hw=_pick_tile(HW, 512, 128))
    # lane-dense (B, n_cls, HW) kernel output -> (B, n_cls, H, W); no transpose needed
    return masks_t.reshape(B, n_cls, H, W)


# --------------------------------------------------------------------------
# Deterministic parameter init (synthetic; mirrors module __init__ shapes)
# --------------------------------------------------------------------------
def init_params(key, in_channels, d_model, num_patches, n_cls, dim_ff, num_layers):
    keys = iter(jax.random.split(key, 8 + 4 * num_layers))
    nrm = lambda shape, std=0.02: std * jax.random.normal(next(keys), shape, jnp.float32)
    ones = lambda n: jnp.ones((1, n), jnp.float32)
    zeros = lambda n: jnp.zeros((1, n), jnp.float32)

    params = {
        'emb_w': nrm((in_channels, d_model)),        # 1x1 conv weight, (C_in, D)
        'emb_b': zeros(d_model),
        'pos_embed': jax.random.normal(next(keys),
                                       (1, d_model, num_patches, num_patches), jnp.float32),
        'class_tokens': nrm((1, n_cls, d_model)),
        'dn_g': ones(d_model), 'dn_b': zeros(d_model),
        'mn_g': jnp.ones((n_cls, 1), jnp.float32),   # stored column-wise for the transposed
        'mn_b': jnp.zeros((n_cls, 1), jnp.float32),  # (n_cls, HW) mask layout
    }
    scale = d_model ** (-0.5)
    params['proj_patch'] = scale * jax.random.normal(next(keys), (d_model, d_model), jnp.float32)
    params['proj_classes'] = scale * jax.random.normal(next(keys), (d_model, d_model), jnp.float32)
    blocks = []
    for _ in range(num_layers):
        blocks.append(dict(
            ln1_g=ones(d_model), ln1_b=zeros(d_model),
            wqkv=nrm((d_model, 3 * d_model)), bqkv=zeros(3 * d_model),
            wo=nrm((d_model, d_model)), bo=zeros(d_model),
            ln2_g=ones(d_model), ln2_b=zeros(d_model),
            w1=nrm((d_model, dim_ff)), b1=zeros(dim_ff),
            w2=nrm((dim_ff, d_model)), b2=zeros(d_model),
        ))
    params['blocks'] = blocks
    return params


if __name__ == "__main__":
    # small config: crop_size=64 -> num_patches = 64 // 16 = 4  (HW = 16, N = 24)
    B, C_in, n_patch = 2, 8, 4
    d_model, nhead, dim_ff, n_layers, n_cls = 128, 4, 256, 2, 8

    key = jax.random.PRNGKey(0)
    kx, kp = jax.random.split(key)
    x = jax.random.normal(kx, (B, C_in, n_patch, n_patch), jnp.float32)
    params = init_params(kp, C_in, d_model, n_patch, n_cls, dim_ff, n_layers)

    fwd = jax.jit(functools.partial(transformer_head_forward, nhead=nhead))
    masks = fwd(x, params)
    jax.block_until_ready(masks)
    assert masks.shape == (B, n_cls, n_patch, n_patch), masks.shape
    assert bool(jnp.all(jnp.isfinite(masks)))
    print("KERNEL_OK")
</pallas_src>

<mosaic_0001>
module attributes {stable_mosaic.version = 11 : i64} {
  func.func @embed_kernel(%arg0: i32, %arg1: i32, %arg2: memref<1x16x8xf32, #tpu.memory_space<vmem>>, %arg3: memref<8x128xbf16, #tpu.memory_space<vmem>>, %arg4: memref<1x128xf32, #tpu.memory_space<vmem>>, %arg5: memref<16x128xf32, #tpu.memory_space<vmem>>, %arg6: memref<1x16x128xf32, #tpu.memory_space<vmem>>) attributes {dimension_semantics = [#tpu.dimension_semantics<parallel>, #tpu.dimension_semantics<parallel>], iteration_bounds = array<i64: 2, 1>, scalar_prefetch = 0 : i64, scratch_operands = 0 : i64, tpu.core_type = #tpu.core_type<tc>, window_params = [{transform_indices = @transform_0, window_bounds = array<i64: 1, 16, 8>}, {pipeline_mode = #tpu.pipeline_mode<synchronous>, transform_indices = @transform_1, window_bounds = array<i64: 8, 128>}, {pipeline_mode = #tpu.pipeline_mode<synchronous>, transform_indices = @transform_2, window_bounds = array<i64: 1, 128>}, {transform_indices = @transform_3, window_bounds = array<i64: 16, 128>}, {transform_indices = @transform_4, window_bounds = array<i64: 1, 16, 128>}]} {
    %c0 = arith.constant 0 : index
    %c0_0 = arith.constant 0 : index
    %c0_1 = arith.constant 0 : index
    %0 = vector.load %arg2[%c0, %c0_0, %c0_1] : memref<1x16x8xf32, #tpu.memory_space<vmem>>, vector<1x16x8xf32>
    %1 = vector.shape_cast %0 : vector<1x16x8xf32> to vector<16x8xf32>
    %2 = arith.truncf %1 : vector<16x8xf32> to vector<16x8xbf16>
    %c0_2 = arith.constant 0 : index
    %c0_3 = arith.constant 0 : index
    %3 = vector.load %arg3[%c0_2, %c0_3] : memref<8x128xbf16, #tpu.memory_space<vmem>>, vector<8x128xbf16>
    %cst = arith.constant dense<0.000000e+00> : vector<16x128xf32>
    %4 = tpu.matmul %2, %3, %cst {dimension_numbers = #tpu.dot_dimension_numbers<[1], [0], [0], [1], [0, 0, 1, 1], [], []>} : vector<16x8xbf16>, vector<8x128xbf16>, vector<16x128xf32> -> vector<16x128xf32>
    %c0_4 = arith.constant 0 : index
    %c0_5 = arith.constant 0 : index
    %5 = vector.load %arg4[%c0_4, %c0_5] : memref<1x128xf32, #tpu.memory_space<vmem>>, vector<1x128xf32>
    %6 = vector.broadcast %5 : vector<1x128xf32> to vector<16x128xf32>
    %7 = arith.addf %4, %6 : vector<16x128xf32>
    %c0_6 = arith.constant 0 : index
    %c0_7 = arith.constant 0 : index
    %8 = vector.load %arg5[%c0_6, %c0_7] : memref<16x128xf32, #tpu.memory_space<vmem>>, vector<16x128xf32>
    %9 = arith.addf %7, %8 : vector<16x128xf32>
    %c0_8 = arith.constant 0 : index
    %c0_9 = arith.constant 0 : index
    %c0_10 = arith.constant 0 : index
    %10 = vector.load %arg6[%c0_8, %c0_9, %c0_10] : memref<1x16x128xf32, #tpu.memory_space<vmem>>, vector<1x16x128xf32>
    %11 = vector.shape_cast %10 : vector<1x16x128xf32> to vector<16x128xf32>
    %12 = vector.shape_cast %9 : vector<16x128xf32> to vector<1x16x128xf32>
    tpu.vector_store %arg6[%c0_8, %c0_9, %c0_10], %12 {strides = array<i32>} : memref<1x16x128xf32, #tpu.memory_space<vmem>>, vector<1x16x128xf32>,
    return
  }
  func.func @transform_0(%arg0: i32, %arg1: i32) -> (i32, i32, i32) {
    %c0_i32 = arith.constant 0 : i32
    %c0_i32_0 = arith.constant 0 : i32
    return %arg0, %arg1, %c0_i32 : i32, i32, i32
  }
  func.func @transform_1(%arg0: i32, %arg1: i32) -> (i32, i32) {
    %c0_i32 = arith.constant 0 : i32
    %c0_i32_0 = arith.constant 0 : i32
    %c0_i32_1 = arith.constant 0 : i32
    return %c0_i32, %c0_i32_0 : i32, i32
  }
  func.func @transform_2(%arg0: i32, %arg1: i32) -> (i32, i32) {
    %c0_i32 = arith.constant 0 : i32
    %c0_i32_0 = arith.constant 0 : i32
    %c0_i32_1 = arith.constant 0 : i32
    return %c0_i32, %c0_i32_0 : i32, i32
  }
  func.func @transform_3(%arg0: i32, %arg1: i32) -> (i32, i32) {
    %c0_i32 = arith.constant 0 : i32
    %c0_i32_0 = arith.constant 0 : i32
    return %arg1, %c0_i32 : i32, i32
  }
  func.func @transform_4(%arg0: i32, %arg1: i32) -> (i32, i32, i32) {
    %c0_i32 = arith.constant 0 : i32
    %c0_i32_0 = arith.constant 0 : i32
    return %arg0, %arg1, %c0_i32 : i32, i32, i32
  }
}

module attributes {stable_mosaic.version = 11 : i64} {
  func.func @block_kernel(%arg0: i32, %arg1: i32, %arg2: memref<1x24x128xf32, #tpu.memory_space<vmem>>, %arg3: memref<1x128xf32, #tpu.memory_space<vmem>>, %arg4: memref<1x128xf32, #tpu.memory_space<vmem>>, %arg5: memref<128x384xbf16, #tpu.memory_space<vmem>>, %arg6: memref<1x384xf32, #tpu.memory_space<vmem>>, %arg7: memref<128x128xbf16, #tpu.memory_space<vmem>>, %arg8: memref<1x128xf32, #tpu.memory_space<vmem>>, %arg9: memref<1x128xf32, #tpu.memory_space<vmem>>, %arg10: memref<1x128xf32, #tpu.memory_space<vmem>>, %arg11: memref<128x256xbf16, #tpu.memory_space<vmem>>, %arg12: memref<1x256xf32, #tpu.memory_space<vmem>>, %arg13: memref<256x128xbf16, #tpu.memory_space<vmem>>, %arg14: memref<1x128xf32, #tpu.memory_space<vmem>>, %arg15: memref<1x24x128xf32, #tpu.memory_space<vmem>>, %arg16: memref<4x24x32xbf16, #tpu.memory_space<vmem>>, %arg17: memref<4x24x32xbf16, #tpu.memory_space<vmem>>, %arg18: memref<4x24x32xbf16, #tpu.memory_space<vmem>>, %arg19: memref<24x128xbf16, #tpu.memory_space<vmem>>) attributes {dimension_semantics = [#tpu.dimension_semantics<parallel>, #tpu.dimension_semantics<arbitrary>], iteration_bounds = array<i64: 2, 1>, scalar_prefetch = 0 : i64, scratch_operands = 4 : i64, tpu.core_type = #tpu.core_type<tc>, window_params = [{transform_indices = @transform_0, window_bounds = array<i64: 1, 24, 128>}, {pipeline_mode = #tpu.pipeline_mode<synchronous>, transform_indices = @transform_1, window_bounds = array<i64: 1, 128>}, {pipeline_mode = #tpu.pipeline_mode<synchronous>, transform_indices = @transform_2, window_bounds = array<i64: 1, 128>}, {pipeline_mode = #tpu.pipeline_mode<synchronous>, transform_indices = @transform_3, window_bounds = array<i64: 128, 384>}, {pipeline_mode = #tpu.pipeline_mode<synchronous>, transform_indices = @transform_4, window_bounds = array<i64: 1, 384>}, {pipeline_mode = #tpu.pipeline_mode<synchronous>, transform_indices = @transform_5, window_bounds = array<i64: 128, 128>}, {pipeline_mode = #tpu.pipeline_mode<synchronous>, transform_indices = @transform_6, window_bounds = array<i64: 1, 128>}, {pipeline_mode = #tpu.pipeline_mode<synchronous>, transform_indices = @transform_7, window_bounds = array<i64: 1, 128>}, {pipeline_mode = #tpu.pipeline_mode<synchronous>, transform_indices = @transform_8, window_bounds = array<i64: 1, 128>}, {pipeline_mode = #tpu.pipeline_mode<synchronous>, transform_indices = @transform_9, window_bounds = array<i64: 128, 256>}, {pipeline_mode = #tpu.pipeline_mode<synchronous>, transform_indices = @transform_10, window_bounds = array<i64: 1, 256>}, {pipeline_mode = #tpu.pipeline_mode<synchronous>, transform_indices = @transform_11, window_bounds = array<i64: 256, 128>}, {pipeline_mode = #tpu.pipeline_mode<synchronous>, transform_indices = @transform_12, window_bounds = array<i64: 1, 128>}, {transform_indices = @transform_13, window_bounds = array<i64: 1, 24, 128>}]} {
    %c0_i32 = arith.constant 0 : i32
    %0 = arith.cmpi eq, %arg1, %c0_i32 : i32
    %1 = arith.extui %0 : i1 to i32
    %c0_i32_0 = arith.constant 0 : i32
    %2 = arith.cmpi ne, %1, %c0_i32_0 : i32
    scf.if %2 {
      %c0_51 = arith.constant 0 : index
      %c0_52 = arith.constant 0 : index
      %c0_53 = arith.constant 0 : index
      %101 = vector.load %arg2[%c0_51, %c0_52, %c0_53] : memref<1x24x128xf32, #tpu.memory_space<vmem>>, vector<1x24x128xf32>
      %102 = vector.shape_cast %101 : vector<1x24x128xf32> to vector<24x128xf32>
      %c0_54 = arith.constant 0 : index
      %c0_55 = arith.constant 0 : index
      %103 = vector.load %arg3[%c0_54, %c0_55] : memref<1x128xf32, #tpu.memory_space<vmem>>, vector<1x128xf32>
      %c0_56 = arith.constant 0 : index
      %c0_57 = arith.constant 0 : index
      %104 = vector.load %arg4[%c0_56, %c0_57] : memref<1x128xf32, #tpu.memory_space<vmem>>, vector<1x128xf32>
      %cst_58 = arith.constant dense<0.000000e+00> : vector<24xf32>
      %105 = vector.multi_reduction <add>, %102, %cst_58 [1] : vector<24x128xf32> to vector<24xf32>
      %106 = vector.shape_cast %105 : vector<24xf32> to vector<24x1xf32>
      %cst_59 = arith.constant 1.280000e+02 : f32
      %107 = vector.broadcast %cst_59 : f32 to vector<24x1xf32>
      %108 = arith.divf %106, %107 : vector<24x1xf32>
      %109 = vector.broadcast %108 : vector<24x1xf32> to vector<24x128xf32>
      %110 = arith.subf %102, %109 : vector<24x128xf32>
      %111 = arith.mulf %110, %110 : vector<24x128xf32>
      %cst_60 = arith.constant dense<0.000000e+00> : vector<24xf32>
      %112 = vector.multi_reduction <add>, %111, %cst_60 [1] : vector<24x128xf32> to vector<24xf32>
      %113 = vector.shape_cast %112 : vector<24xf32> to vector<24x1xf32>
      %cst_61 = arith.constant 1.280000e+02 : f32
      %114 = vector.broadcast %cst_61 : f32 to vector<24x1xf32>
      %115 = arith.divf %113, %114 : vector<24x1xf32>
      %116 = vector.broadcast %108 : vector<24x1xf32> to vector<24x128xf32>
      %117 = arith.subf %102, %116 : vector<24x128xf32>
      %cst_62 = arith.constant 9.99999974E-6 : f32
      %118 = vector.broadcast %cst_62 : f32 to vector<24x1xf32>
      %119 = arith.addf %115, %118 : vector<24x1xf32>
      %120 = math.rsqrt %119 : vector<24x1xf32>
      %121 = vector.broadcast %120 : vector<24x1xf32> to vector<24x128xf32>
      %122 = arith.mulf %117, %121 : vector<24x128xf32>
      %123 = vector.broadcast %103 : vector<1x128xf32> to vector<24x128xf32>
      %124 = arith.mulf %122, %123 : vector<24x128xf32>
      %125 = vector.broadcast %104 : vector<1x128xf32> to vector<24x128xf32>
      %126 = arith.addf %124, %125 : vector<24x128xf32>
      %127 = arith.truncf %126 : vector<24x128xf32> to vector<24x128xbf16>
      %c0_63 = arith.constant 0 : index
      %c0_64 = arith.constant 0 : index
      %128 = vector.load %arg5[%c0_63, %c0_64] : memref<128x384xbf16, #tpu.memory_space<vmem>>, vector<128x384xbf16>
      %cst_65 = arith.constant dense<0.000000e+00> : vector<24x384xf32>
      %129 = tpu.matmul %127, %128, %cst_65 {dimension_numbers = #tpu.dot_dimension_numbers<[1], [0], [0], [1], [0, 0, 1, 1], [], []>} : vector<24x128xbf16>, vector<128x384xbf16>, vector<24x384xf32> -> vector<24x384xf32>
      %c0_66 = arith.constant 0 : index
      %c0_67 = arith.constant 0 : index
      %130 = vector.load %arg6[%c0_66, %c0_67] : memref<1x384xf32, #tpu.memory_space<vmem>>, vector<1x384xf32>
      %131 = vector.broadcast %130 : vector<1x384xf32> to vector<24x384xf32>
      %132 = arith.addf %129, %131 : vector<24x384xf32>
      %133 = vector.extract_strided_slice %132 {offsets = [0, 0], sizes = [24, 32], strides = [1, 1]} : vector<24x384xf32> to vector<24x32xf32>
      %cst_68 = arith.constant 0.176776692 : f32
      %134 = vector.broadcast %cst_68 : f32 to vector<24x32xf32>
      %135 = arith.mulf %133, %134 : vector<24x32xf32>
      %136 = arith.truncf %135 : vector<24x32xf32> to vector<24x32xbf16>
      %c0_69 = arith.constant 0 : index
      %c0_70 = arith.constant 0 : index
      %c0_71 = arith.constant 0 : index
      %137 = vector.load %arg16[%c0_69, %c0_70, %c0_71] : memref<4x24x32xbf16, #tpu.memory_space<vmem>>, vector<1x24x32xbf16>
      %138 = vector.shape_cast %137 : vector<1x24x32xbf16> to vector<24x32xbf16>
      %139 = vector.shape_cast %136 : vector<24x32xbf16> to vector<1x24x32xbf16>
      tpu.vector_store %arg16[%c0_69, %c0_70, %c0_71], %139 {strides = array<i32>} : memref<4x24x32xbf16, #tpu.memory_space<vmem>>, vector<1x24x32xbf16>,
      %140 = vector.extract_strided_slice %132 {offsets = [0, 128], sizes = [24, 32], strides = [1, 1]} : vector<24x384xf32> to vector<24x32xf32>
      %141 = arith.truncf %140 : vector<24x32xf32> to vector<24x32xbf16>
      %c0_72 = arith.constant 0 : index
      %c0_73 = arith.constant 0 : index
      %c0_74 = arith.constant 0 : index
      %142 = vector.load %arg17[%c0_72, %c0_73, %c0_74] : memref<4x24x32xbf16, #tpu.memory_space<vmem>>, vector<1x24x32xbf16>
      %143 = vector.shape_cast %142 : vector<1x24x32xbf16> to vector<24x32xbf16>
      %144 = vector.shape_cast %141 : vector<24x32xbf16> to vector<1x24x32xbf16>
      tpu.vector_store %arg17[%c0_72, %c0_73, %c0_74], %144 {strides = array<i32>} : memref<4x24x32xbf16, #tpu.memory_space<vmem>>, vector<1x24x32xbf16>,
      %145 = vector.extract_strided_slice %132 {offsets = [0, 256], sizes = [24, 32], strides = [1, 1]} : vector<24x384xf32> to vector<24x32xf32>
      %146 = arith.truncf %145 : vector<24x32xf32> to vector<24x32xbf16>
      %c0_75 = arith.constant 0 : index
      %c0_76 = arith.constant 0 : index
      %c0_77 = arith.constant 0 : index
      %147 = vector.load %arg18[%c0_75, %c0_76, %c0_77] : memref<4x24x32xbf16, #tpu.memory_space<vmem>>, vector<1x24x32xbf16>
      %148 = vector.shape_cast %147 : vector<1x24x32xbf16> to vector<24x32xbf16>
      %149 = vector.shape_cast %146 : vector<24x32xbf16> to vector<1x24x32xbf16>
      tpu.vector_store %arg18[%c0_75, %c0_76, %c0_77], %149 {strides = array<i32>} : memref<4x24x32xbf16, #tpu.memory_space<vmem>>, vector<1x24x32xbf16>,
      %150 = vector.extract_strided_slice %132 {offsets = [0, 32], sizes = [24, 32], strides = [1, 1]} : vector<24x384xf32> to vector<24x32xf32>
      %cst_78 = arith.constant 0.176776692 : f32
      %151 = vector.broadcast %cst_78 : f32 to vector<24x32xf32>
      %152 = arith.mulf %150, %151 : vector<24x32xf32>
      %153 = arith.truncf %152 : vector<24x32xf32> to vector<24x32xbf16>
      %c1 = arith.constant 1 : index
      %c0_79 = arith.constant 0 : index
      %c0_80 = arith.constant 0 : index
      %154 = vector.load %arg16[%c1, %c0_79, %c0_80] : memref<4x24x32xbf16, #tpu.memory_space<vmem>>, vector<1x24x32xbf16>
      %155 = vector.shape_cast %154 : vector<1x24x32xbf16> to vector<24x32xbf16>
      %156 = vector.shape_cast %153 : vector<24x32xbf16> to vector<1x24x32xbf16>
      tpu.vector_store %arg16[%c1, %c0_79, %c0_80], %156 {strides = array<i32>} : memref<4x24x32xbf16, #tpu.memory_space<vmem>>, vector<1x24x32xbf16>,
      %157 = vector.extract_strided_slice %132 {offsets = [0, 160], sizes = [24, 32], strides = [1, 1]} : vector<24x384xf32> to vector<24x32xf32>
      %158 = arith.truncf %157 : vector<24x32xf32> to vector<24x32xbf16>
      %c1_81 = arith.constant 1 : index
      %c0_82 = arith.constant 0 : index
      %c0_83 = arith.constant 0 : index
      %159 = vector.load %arg17[%c1_81, %c0_82, %c0_83] : memref<4x24x32xbf16, #tpu.memory_space<vmem>>, vector<1x24x32xbf16>
      %160 = vector.shape_cast %159 : vector<1x24x32xbf16> to vector<24x32xbf16>
      %161 = vector.shape_cast %158 : vector<24x32xbf16> to vector<1x24x32xbf16>
      tpu.vector_store %arg17[%c1_81, %c0_82, %c0_83], %161 {strides = array<i32>} : memref<4x24x32xbf16, #tpu.memory_space<vmem>>, vector<1x24x32xbf16>,
      %162 = vector.extract_strided_slice %132 {offsets = [0, 288], sizes = [24, 32], strides = [1, 1]} : vector<24x384xf32> to vector<24x32xf32>
      %163 = arith.truncf %162 : vector<24x32xf32> to vector<24x32xbf16>
      %c1_84 = arith.constant 1 : index
      %c0_85 = arith.constant 0 : index
      %c0_86 = arith.constant 0 : index
      %164 = vector.load %arg18[%c1_84, %c0_85, %c0_86] : memref<4x24x32xbf16, #tpu.memory_space<vmem>>, vector<1x24x32xbf16>
      %165 = vector.shape_cast %164 : vector<1x24x32xbf16> to vector<24x32xbf16>
      %166 = vector.shape_cast %163 : vector<24x32xbf16> to vector<1x24x32xbf16>
      tpu.vector_store %arg18[%c1_84, %c0_85, %c0_86], %166 {strides = array<i32>} : memref<4x24x32xbf16, #tpu.memory_space<vmem>>, vector<1x24x32xbf16>,
      %167 = vector.extract_strided_slice %132 {offsets = [0, 64], sizes = [24, 32], strides = [1, 1]} : vector<24x384xf32> to vector<24x32xf32>
      %cst_87 = arith.constant 0.176776692 : f32
      %168 = vector.broadcast %cst_87 : f32 to vector<24x32xf32>
      %169 = arith.mulf %167, %168 : vector<24x32xf32>
      %170 = arith.truncf %169 : vector<24x32xf32> to vector<24x32xbf16>
      %c2 = arith.constant 2 : index
      %c0_88 = arith.constant 0 : index
      %c0_89 = arith.constant 0 : index
      %171 = vector.load %arg16[%c2, %c0_88, %c0_89] : memref<4x24x32xbf16, #tpu.memory_space<vmem>>, vector<1x24x32xbf16>
      %172 = vector.shape_cast %171 : vector<1x24x32xbf16> to vector<24x32xbf16>
      %173 = vector.shape_cast %170 : vector<24x32xbf16> to vector<1x24x32xbf16>
      tpu.vector_store %arg16[%c2, %c0_88, %c0_89], %173 {strides = array<i32>} : memref<4x24x32xbf16, #tpu.memory_space<vmem>>, vector<1x24x32xbf16>,
      %174 = vector.extract_strided_slice %132 {offsets = [0, 192], sizes = [24, 32], strides = [1, 1]} : vector<24x384xf32> to vector<24x32xf32>
      %175 = arith.truncf %174 : vector<24x32xf32> to vector<24x32xbf16>
      %c2_90 = arith.constant 2 : index
      %c0_91 = arith.constant 0 : index
      %c0_92 = arith.constant 0 : index
      %176 = vector.load %arg17[%c2_90, %c0_91, %c0_92] : memref<4x24x32xbf16, #tpu.memory_space<vmem>>, vector<1x24x32xbf16>
      %177 = vector.shape_cast %176 : vector<1x24x32xbf16> to vector<24x32xbf16>
      %178 = vector.shape_cast %175 : vector<24x32xbf16> to vector<1x24x32xbf16>
      tpu.vector_store %arg17[%c2_90, %c0_91, %c0_92], %178 {strides = array<i32>} : memref<4x24x32xbf16, #tpu.memory_space<vmem>>, vector<1x24x32xbf16>,
      %179 = vector.extract_strided_slice %132 {offsets = [0, 320], sizes = [24, 32], strides = [1, 1]} : vector<24x384xf32> to vector<24x32xf32>
      %180 = arith.truncf %179 : vector<24x32xf32> to vector<24x32xbf16>
      %c2_93 = arith.constant 2 : index
      %c0_94 = arith.constant 0 : index
      %c0_95 = arith.constant 0 : index
      %181 = vector.load %arg18[%c2_93, %c0_94, %c0_95] : memref<4x24x32xbf16, #tpu.memory_space<vmem>>, vector<1x24x32xbf16>
      %182 = vector.shape_cast %181 : vector<1x24x32xbf16> to vector<24x32xbf16>
      %183 = vector.shape_cast %180 : vector<24x32xbf16> to vector<1x24x32xbf16>
      tpu.vector_store %arg18[%c2_93, %c0_94, %c0_95], %183 {strides = array<i32>} : memref<4x24x32xbf16, #tpu.memory_space<vmem>>, vector<1x24x32xbf16>,
      %184 = vector.extract_strided_slice %132 {offsets = [0, 96], sizes = [24, 32], strides = [1, 1]} : vector<24x384xf32> to vector<24x32xf32>
      %cst_96 = arith.constant 0.176776692 : f32
      %185 = vector.broadcast %cst_96 : f32 to vector<24x32xf32>
      %186 = arith.mulf %184, %185 : vector<24x32xf32>
      %187 = arith.truncf %186 : vector<24x32xf32> to vector<24x32xbf16>
      %c3 = arith.constant 3 : index
      %c0_97 = arith.constant 0 : index
      %c0_98 = arith.constant 0 : index
      %188 = vector.load %arg16[%c3, %c0_97, %c0_98] : memref<4x24x32xbf16, #tpu.memory_space<vmem>>, vector<1x24x32xbf16>
      %189 = vector.shape_cast %188 : vector<1x24x32xbf16> to vector<24x32xbf16>
      %190 = vector.shape_cast %187 : vector<24x32xbf16> to vector<1x24x32xbf16>
      tpu.vector_store %arg16[%c3, %c0_97, %c0_98], %190 {strides = array<i32>} : memref<4x24x32xbf16, #tpu.memory_space<vmem>>, vector<1x24x32xbf16>,
      %191 = vector.extract_strided_slice %132 {offsets = [0, 224], sizes = [24, 32], strides = [1, 1]} : vector<24x384xf32> to vector<24x32xf32>
      %192 = arith.truncf %191 : vector<24x32xf32> to vector<24x32xbf16>
      %c3_99 = arith.constant 3 : index
      %c0_100 = arith.constant 0 : index
      %c0_101 = arith.constant 0 : index
      %193 = vector.load %arg17[%c3_99, %c0_100, %c0_101] : memref<4x24x32xbf16, #tpu.memory_space<vmem>>, vector<1x24x32xbf16>
      %194 = vector.shape_cast %193 : vector<1x24x32xbf16> to vector<24x32xbf16>
      %195 = vector.shape_cast %192 : vector<24x32xbf16> to vector<1x24x32xbf16>
      tpu.vector_store %arg17[%c3_99, %c0_100, %c0_101], %195 {strides = array<i32>} : memref<4x24x32xbf16, #tpu.memory_space<vmem>>, vector<1x24x32xbf16>,
      %196 = vector.extract_strided_slice %132 {offsets = [0, 352], sizes = [24, 32], strides = [1, 1]} : vector<24x384xf32> to vector<24x32xf32>
      %197 = arith.truncf %196 : vector<24x32xf32> to vector<24x32xbf16>
      %c3_102 = arith.constant 3 : index
      %c0_103 = arith.constant 0 : index
      %c0_104 = arith.constant 0 : index
      %198 = vector.load %arg18[%c3_102, %c0_103, %c0_104] : memref<4x24x32xbf16, #tpu.memory_space<vmem>>, vector<1x24x32xbf16>
      %199 = vector.shape_cast %198 : vector<1x24x32xbf16> to vector<24x32xbf16>
      %200 = vector.shape_cast %197 : vector<24x32xbf16> to vector<1x24x32xbf16>
      tpu.vector_store %arg18[%c3_102, %c0_103, %c0_104], %200 {strides = array<i32>} : memref<4x24x32xbf16, #tpu.memory_space<vmem>>, vector<1x24x32xbf16>,
    } else {
    }
    %c24_i32 = arith.constant 24 : i32
    %3 = arith.muli %arg1, %c24_i32 : i32
    %4 = tpu.assume_multiple %3, 24 : i32
    %c0 = arith.constant 0 : index
    %5 = arith.index_cast %4 : i32 to index
    %c0_1 = arith.constant 0 : index
    %6 = vector.load %arg2[%c0, %5, %c0_1] : memref<1x24x128xf32, #tpu.memory_space<vmem>>, vector<1x24x128xf32>
    %7 = vector.shape_cast %6 : vector<1x24x128xf32> to vector<24x128xf32>
    %c0_2 = arith.constant 0 : index
    %8 = arith.index_cast %4 : i32 to index
    %c0_3 = arith.constant 0 : index
    %9 = vector.load %arg16[%c0_2, %8, %c0_3] : memref<4x24x32xbf16, #tpu.memory_space<vmem>>, vector<4x24x32xbf16>
    %c0_4 = arith.constant 0 : index
    %c0_5 = arith.constant 0 : index
    %c0_6 = arith.constant 0 : index
    %10 = vector.load %arg17[%c0_4, %c0_5, %c0_6] : memref<4x24x32xbf16, #tpu.memory_space<vmem>>, vector<4x24x32xbf16>
    "tpu.trace_start"() <{level = 10 : i32, message = "hqd,hkd->hqk"}> : () -> ()
    %cst = arith.constant dense<0.000000e+00> : vector<4x24x24xf32>
    %11 = tpu.matmul %9, %10, %cst {dimension_numbers = #tpu.dot_dimension_numbers<[2], [2], [1], [1], [0, 0, 0, 1, 1, 1], [0], [0]>} : vector<4x24x32xbf16>, vector<4x24x32xbf16>, vector<4x24x24xf32> -> vector<4x24x24xf32>
    "tpu.trace_stop"() : () -> ()
    %cst_7 = arith.constant dense<0xFF800000> : vector<4x24xf32>
    %12 = vector.multi_reduction <maximumf>, %11, %cst_7 [2] : vector<4x24x24xf32> to vector<4x24xf32>
    %13 = vector.shape_cast %12 : vector<4x24xf32> to vector<4x24x1xf32>
    %14 = vector.broadcast %13 : vector<4x24x1xf32> to vector<4x24x24xf32>
    %15 = arith.subf %11, %14 : vector<4x24x24xf32>
    %16 = math.exp %15 : vector<4x24x24xf32>
    %cst_8 = arith.constant dense<0.000000e+00> : vector<4x24xf32>
    %17 = vector.multi_reduction <add>, %16, %cst_8 [2] : vector<4x24x24xf32> to vector<4x24xf32>
    %18 = vector.shape_cast %17 : vector<4x24xf32> to vector<4x24x1xf32>
    %19 = tpu.reciprocal %18 {approx = true} : vector<4x24x1xf32> -> vector<4x24x1xf32>
    %20 = vector.broadcast %19 : vector<4x24x1xf32> to vector<4x24x24xf32>
    %21 = arith.mulf %16, %20 : vector<4x24x24xf32>
    %22 = arith.truncf %21 : vector<4x24x24xf32> to vector<4x24x24xbf16>
    %c0_9 = arith.constant 0 : index
    %c0_10 = arith.constant 0 : index
    %c0_11 = arith.constant 0 : index
    %23 = vector.load %arg18[%c0_9, %c0_10, %c0_11] : memref<4x24x32xbf16, #tpu.memory_space<vmem>>, vector<4x24x32xbf16>
    "tpu.trace_start"() <{level = 10 : i32, message = "hqk,hkd->hqd"}> : () -> ()
    %cst_12 = arith.constant dense<0.000000e+00> : vector<4x24x32xf32>
    %24 = tpu.matmul %22, %23, %cst_12 {dimension_numbers = #tpu.dot_dimension_numbers<[2], [1], [1], [2], [0, 0, 0, 1, 1, 2], [0], [0]>} : vector<4x24x24xbf16>, vector<4x24x32xbf16>, vector<4x24x32xf32> -> vector<4x24x32xf32>
    "tpu.trace_stop"() : () -> ()
    %25 = vector.extract_strided_slice %24 {offsets = [0, 0, 0], sizes = [1, 24, 32], strides = [1, 1, 1]} : vector<4x24x32xf32> to vector<1x24x32xf32>
    %26 = vector.shape_cast %25 : vector<1x24x32xf32> to vector<24x32xf32>
    %27 = arith.truncf %26 : vector<24x32xf32> to vector<24x32xbf16>
    %c0_13 = arith.constant 0 : index
    %c0_14 = arith.constant 0 : index
    %28 = vector.load %arg19[%c0_13, %c0_14] : memref<24x128xbf16, #tpu.memory_space<vmem>>, vector<24x32xbf16>
    tpu.vector_store %arg19[%c0_13, %c0_14], %27 {strides = array<i32>} : memref<24x128xbf16, #tpu.memory_space<vmem>>, vector<24x32xbf16>,
    %29 = vector.extract_strided_slice %24 {offsets = [1, 0, 0], sizes = [1, 24, 32], strides = [1, 1, 1]} : vector<4x24x32xf32> to vector<1x24x32xf32>
    %30 = vector.shape_cast %29 : vector<1x24x32xf32> to vector<24x32xf32>
    %31 = arith.truncf %30 : vector<24x32xf32> to vector<24x32xbf16>
    %c0_15 = arith.constant 0 : index
    %c32 = arith.constant 32 : index
    %32 = vector.load %arg19[%c0_15, %c32] : memref<24x128xbf16, #tpu.memory_space<vmem>>, vector<24x32xbf16>
    tpu.vector_store %arg19[%c0_15, %c32], %31 {strides = array<i32>} : memref<24x128xbf16, #tpu.memory_space<vmem>>, vector<24x32xbf16>,
    %33 = vector.extract_strided_slice %24 {offsets = [2, 0, 0], sizes = [1, 24, 32], strides = [1, 1, 1]} : vector<4x24x32xf32> to vector<1x24x32xf32>
    %34 = vector.shape_cast %33 : vector<1x24x32xf32> to vector<24x32xf32>
    %35 = arith.truncf %34 : vector<24x32xf32> to vector<24x32xbf16>
    %c0_16 = arith.constant 0 : index
    %c64 = arith.constant 64 : index
    %36 = vector.load %arg19[%c0_16, %c64] : memref<24x128xbf16, #tpu.memory_space<vmem>>, vector<24x32xbf16>
    tpu.vector_store %arg19[%c0_16, %c64], %35 {strides = array<i32>} : memref<24x128xbf16, #tpu.memory_space<vmem>>, vector<24x32xbf16>,
    %37 = vector.extract_strided_slice %24 {offsets = [3, 0, 0], sizes = [1, 24, 32], strides = [1, 1, 1]} : vector<4x24x32xf32> to vector<1x24x32xf32>
    %38 = vector.shape_cast %37 : vector<1x24x32xf32> to vector<24x32xf32>
    %39 = arith.truncf %38 : vector<24x32xf32> to vector<24x32xbf16>
    %c0_17 = arith.constant 0 : index
    %c96 = arith.constant 96 : index
    %40 = vector.load %arg19[%c0_17, %c96] : memref<24x128xbf16, #tpu.memory_space<vmem>>, vector<24x32xbf16>
    tpu.vector_store %arg19[%c0_17, %c96], %39 {strides = array<i32>} : memref<24x128xbf16, #tpu.memory_space<vmem>>, vector<24x32xbf16>,
    %c0_18 = arith.constant 0 : index
    %c0_19 = arith.constant 0 : index
    %41 = vector.load %arg19[%c0_18, %c0_19] : memref<24x128xbf16, #tpu.memory_space<vmem>>, vector<24x128xbf16>
    %c0_20 = arith.constant 0 : index
    %c0_21 = arith.constant 0 : index
    %42 = vector.load %arg7[%c0_20, %c0_21] : memref<128x128xbf16, #tpu.memory_space<vmem>>, vector<128x128xbf16>
    %cst_22 = arith.constant dense<0.000000e+00> : vector<24x128xf32>
    %43 = tpu.matmul %41, %42, %cst_22 {dimension_numbers = #tpu.dot_dimension_numbers<[1], [0], [0], [1], [0, 0, 1, 1], [], []>} : vector<24x128xbf16>, vector<128x128xbf16>, vector<24x128xf32> -> vector<24x128xf32>
    %c0_23 = arith.constant 0 : index
    %c0_24 = arith.constant 0 : index
    %44 = vector.load %arg8[%c0_23, %c0_24] : memref<1x128xf32, #tpu.memory_space<vmem>>, vector<1x128xf32>
    %45 = vector.broadcast %44 : vector<1x128xf32> to vector<24x128xf32>
    %46 = arith.addf %43, %45 : vector<24x128xf32>
    %47 = arith.addf %7, %46 : vector<24x128xf32>
    %c0_25 = arith.constant 0 : index
    %c0_26 = arith.constant 0 : index
    %48 = vector.load %arg9[%c0_25, %c0_26] : memref<1x128xf32, #tpu.memory_space<vmem>>, vector<1x128xf32>
    %c0_27 = arith.constant 0 : index
    %c0_28 = arith.constant 0 : index
    %49 = vector.load %arg10[%c0_27, %c0_28] : memref<1x128xf32, #tpu.memory_space<vmem>>, vector<1x128xf32>
    %cst_29 = arith.constant dense<0.000000e+00> : vector<24xf32>
    %50 = vector.multi_reduction <add>, %47, %cst_29 [1] : vector<24x128xf32> to vector<24xf32>
    %51 = vector.shape_cast %50 : vector<24xf32> to vector<24x1xf32>
    %cst_30 = arith.constant 1.280000e+02 : f32
    %52 = vector.broadcast %cst_30 : f32 to vector<24x1xf32>
    %53 = arith.divf %51, %52 : vector<24x1xf32>
    %54 = vector.broadcast %53 : vector<24x1xf32> to vector<24x128xf32>
    %55 = arith.subf %47, %54 : vector<24x128xf32>
    %56 = arith.mulf %55, %55 : vector<24x128xf32>
    %cst_31 = arith.constant dense<0.000000e+00> : vector<24xf32>
    %57 = vector.multi_reduction <add>, %56, %cst_31 [1] : vector<24x128xf32> to vector<24xf32>
    %58 = vector.shape_cast %57 : vector<24xf32> to vector<24x1xf32>
    %cst_32 = arith.constant 1.280000e+02 : f32
    %59 = vector.broadcast %cst_32 : f32 to vector<24x1xf32>
    %60 = arith.divf %58, %59 : vector<24x1xf32>
    %61 = vector.broadcast %53 : vector<24x1xf32> to vector<24x128xf32>
    %62 = arith.subf %47, %61 : vector<24x128xf32>
    %cst_33 = arith.constant 9.99999974E-6 : f32
    %63 = vector.broadcast %cst_33 : f32 to vector<24x1xf32>
    %64 = arith.addf %60, %63 : vector<24x1xf32>
    %65 = math.rsqrt %64 : vector<24x1xf32>
    %66 = vector.broadcast %65 : vector<24x1xf32> to vector<24x128xf32>
    %67 = arith.mulf %62, %66 : vector<24x128xf32>
    %68 = vector.broadcast %48 : vector<1x128xf32> to vector<24x128xf32>
    %69 = arith.mulf %67, %68 : vector<24x128xf32>
    %70 = vector.broadcast %49 : vector<1x128xf32> to vector<24x128xf32>
    %71 = arith.addf %69, %70 : vector<24x128xf32>
    %72 = arith.truncf %71 : vector<24x128xf32> to vector<24x128xbf16>
    %c0_34 = arith.constant 0 : index
    %c0_35 = arith.constant 0 : index
    %73 = vector.load %arg11[%c0_34, %c0_35] : memref<128x256xbf16, #tpu.memory_space<vmem>>, vector<128x256xbf16>
    %cst_36 = arith.constant dense<0.000000e+00> : vector<24x256xf32>
    %74 = tpu.matmul %72, %73, %cst_36 {dimension_numbers = #tpu.dot_dimension_numbers<[1], [0], [0], [1], [0, 0, 1, 1], [], []>} : vector<24x128xbf16>, vector<128x256xbf16>, vector<24x256xf32> -> vector<24x256xf32>
    %c0_37 = arith.constant 0 : index
    %c0_38 = arith.constant 0 : index
    %75 = vector.load %arg12[%c0_37, %c0_38] : memref<1x256xf32, #tpu.memory_space<vmem>>, vector<1x256xf32>
    %76 = vector.broadcast %75 : vector<1x256xf32> to vector<24x256xf32>
    %77 = arith.addf %74, %76 : vector<24x256xf32>
    %78 = arith.mulf %77, %77 : vector<24x256xf32>
    %79 = arith.mulf %77, %78 : vector<24x256xf32>
    %cst_39 = arith.constant 4.471500e-02 : f32
    %80 = vector.broadcast %cst_39 : f32 to vector<24x256xf32>
    %81 = arith.mulf %80, %79 : vector<24x256xf32>
    %82 = arith.addf %77, %81 : vector<24x256xf32>
    %cst_40 = arith.constant 0.797884583 : f32
    %83 = vector.broadcast %cst_40 : f32 to vector<24x256xf32>
    %84 = arith.mulf %83, %82 : vector<24x256xf32>
    %85 = math.tanh %84 : vector<24x256xf32>
    %cst_41 = arith.constant 1.000000e+00 : f32
    %86 = vector.broadcast %cst_41 : f32 to vector<24x256xf32>
    %87 = arith.addf %86, %85 : vector<24x256xf32>
    %cst_42 = arith.constant 5.000000e-01 : f32
    %88 = vector.broadcast %cst_42 : f32 to vector<24x256xf32>
    %89 = arith.mulf %88, %87 : vector<24x256xf32>
    %90 = arith.mulf %77, %89 : vector<24x256xf32>
    %91 = arith.truncf %90 : vector<24x256xf32> to vector<24x256xbf16>
    %c0_43 = arith.constant 0 : index
    %c0_44 = arith.constant 0 : index
    %92 = vector.load %arg13[%c0_43, %c0_44] : memref<256x128xbf16, #tpu.memory_space<vmem>>, vector<256x128xbf16>
    %cst_45 = arith.constant dense<0.000000e+00> : vector<24x128xf32>
    %93 = tpu.matmul %91, %92, %cst_45 {dimension_numbers = #tpu.dot_dimension_numbers<[1], [0], [0], [1], [0, 0, 1, 1], [], []>} : vector<24x256xbf16>, vector<256x128xbf16>, vector<24x128xf32> -> vector<24x128xf32>
    %c0_46 = arith.constant 0 : index
    %c0_47 = arith.constant 0 : index
    %94 = vector.load %arg14[%c0_46, %c0_47] : memref<1x128xf32, #tpu.memory_space<vmem>>, vector<1x128xf32>
    %95 = vector.broadcast %94 : vector<1x128xf32> to vector<24x128xf32>
    %96 = arith.addf %93, %95 : vector<24x128xf32>
    %97 = arith.addf %47, %96 : vector<24x128xf32>
    %c0_48 = arith.constant 0 : index
    %c0_49 = arith.constant 0 : index
    %c0_50 = arith.constant 0 : index
    %98 = vector.load %arg15[%c0_48, %c0_49, %c0_50] : memref<1x24x128xf32, #tpu.memory_space<vmem>>, vector<1x24x128xf32>
    %99 = vector.shape_cast %98 : vector<1x24x128xf32> to vector<24x128xf32>
    %100 = vector.shape_cast %97 : vector<24x128xf32> to vector<1x24x128xf32>
    tpu.vector_store %arg15[%c0_48, %c0_49, %c0_50], %100 {strides = array<i32>} : memref<1x24x128xf32, #tpu.memory_space<vmem>>, vector<1x24x128xf32>,
    return
  }
  func.func @transform_0(%arg0: i32, %arg1: i32) -> (i32, i32, i32) {
    %c0_i32 = arith.constant 0 : i32
    %c0_i32_0 = arith.constant 0 : i32
    %c0_i32_1 = arith.constant 0 : i32
    return %arg0, %c0_i32, %c0_i32_0 : i32, i32, i32
  }
  func.func @transform_1(%arg0: i32, %arg1: i32) -> (i32, i32) {
    %c0_i32 = arith.constant 0 : i32
    %c0_i32_0 = arith.constant 0 : i32
    %c0_i32_1 = arith.constant 0 : i32
    return %c0_i32, %c0_i32_0 : i32, i32
  }
  func.func @transform_2(%arg0: i32, %arg1: i32) -> (i32, i32) {
    %c0_i32 = arith.constant 0 : i32
    %c0_i32_0 = arith.constant 0 : i32
    %c0_i32_1 = arith.constant 0 : i32
    return %c0_i32, %c0_i32_0 : i32, i32
  }
  func.func @transform_3(%arg0: i32, %arg1: i32) -> (i32, i32) {
    %c0_i32 = arith.constant 0 : i32
    %c0_i32_0 = arith.constant 0 : i32
    %c0_i32_1 = arith.constant 0 : i32
    return %c0_i32, %c0_i32_0 : i32, i32
  }
  func.func @transform_4(%arg0: i32, %arg1: i32) -> (i32, i32) {
    %c0_i32 = arith.constant 0 : i32
    %c0_i32_0 = arith.constant 0 : i32
    %c0_i32_1 = arith.constant 0 : i32
    return %c0_i32, %c0_i32_0 : i32, i32
  }
  func.func @transform_5(%arg0: i32, %arg1: i32) -> (i32, i32) {
    %c0_i32 = arith.constant 0 : i32
    %c0_i32_0 = arith.constant 0 : i32
    %c0_i32_1 = arith.constant 0 : i32
    return %c0_i32, %c0_i32_0 : i32, i32
  }
  func.func @transform_6(%arg0: i32, %arg1: i32) -> (i32, i32) {
    %c0_i32 = arith.constant 0 : i32
    %c0_i32_0 = arith.constant 0 : i32
    %c0_i32_1 = arith.constant 0 : i32
    return %c0_i32, %c0_i32_0 : i32, i32
  }
  func.func @transform_7(%arg0: i32, %arg1: i32) -> (i32, i32) {
    %c0_i32 = arith.constant 0 : i32
    %c0_i32_0 = arith.constant 0 : i32
    %c0_i32_1 = arith.constant 0 : i32
    return %c0_i32, %c0_i32_0 : i32, i32
  }
  func.func @transform_8(%arg0: i32, %arg1: i32) -> (i32, i32) {
    %c0_i32 = arith.constant 0 : i32
    %c0_i32_0 = arith.constant 0 : i32
    %c0_i32_1 = arith.constant 0 : i32
    return %c0_i32, %c0_i32_0 : i32, i32
  }
  func.func @transform_9(%arg0: i32, %arg1: i32) -> (i32, i32) {
    %c0_i32 = arith.constant 0 : i32
    %c0_i32_0 = arith.constant 0 : i32
    %c0_i32_1 = arith.constant 0 : i32
    return %c0_i32, %c0_i32_0 : i32, i32
  }
  func.func @transform_10(%arg0: i32, %arg1: i32) -> (i32, i32) {
    %c0_i32 = arith.constant 0 : i32
    %c0_i32_0 = arith.constant 0 : i32
    %c0_i32_1 = arith.constant 0 : i32
    return %c0_i32, %c0_i32_0 : i32, i32
  }
  func.func @transform_11(%arg0: i32, %arg1: i32) -> (i32, i32) {
    %c0_i32 = arith.constant 0 : i32
    %c0_i32_0 = arith.constant 0 : i32
    %c0_i32_1 = arith.constant 0 : i32
    return %c0_i32, %c0_i32_0 : i32, i32
  }
  func.func @transform_12(%arg0: i32, %arg1: i32) -> (i32, i32) {
    %c0_i32 = arith.constant 0 : i32
    %c0_i32_0 = arith.constant 0 : i32
    %c0_i32_1 = arith.constant 0 : i32
    return %c0_i32, %c0_i32_0 : i32, i32
  }
  func.func @transform_13(%arg0: i32, %arg1: i32) -> (i32, i32, i32) {
    %c0_i32 = arith.constant 0 : i32
    %c0_i32_0 = arith.constant 0 : i32
    return %arg0, %arg1, %c0_i32 : i32, i32, i32
  }
}

module attributes {stable_mosaic.version = 11 : i64} {
  func.func @head_kernel(%arg0: i32, %arg1: i32, %arg2: memref<1x16x128xf32, #tpu.memory_space<vmem>>, %arg3: memref<1x8x128xf32, #tpu.memory_space<vmem>>, %arg4: memref<1x128xf32, #tpu.memory_space<vmem>>, %arg5: memref<1x128xf32, #tpu.memory_space<vmem>>, %arg6: memref<128x128xbf16, #tpu.memory_space<vmem>>, %arg7: memref<128x128xbf16, #tpu.memory_space<vmem>>, %arg8: memref<8x1xf32, #tpu.memory_space<vmem>>, %arg9: memref<8x1xf32, #tpu.memory_space<vmem>>, %arg10: memref<1x8x16xf32, #tpu.memory_space<vmem>>, %arg11: memref<8x128xbf16, #tpu.memory_space<vmem>>) attributes {dimension_semantics = [#tpu.dimension_semantics<parallel>, #tpu.dimension_semantics<arbitrary>], iteration_bounds = array<i64: 2, 1>, scalar_prefetch = 0 : i64, scratch_operands = 1 : i64, tpu.core_type = #tpu.core_type<tc>, window_params = [{transform_indices = @transform_0, window_bounds = array<i64: 1, 16, 128>}, {transform_indices = @transform_1, window_bounds = array<i64: 1, 8, 128>}, {pipeline_mode = #tpu.pipeline_mode<synchronous>, transform_indices = @transform_2, window_bounds = array<i64: 1, 128>}, {pipeline_mode = #tpu.pipeline_mode<synchronous>, transform_indices = @transform_3, window_bounds = array<i64: 1, 128>}, {pipeline_mode = #tpu.pipeline_mode<synchronous>, transform_indices = @transform_4, window_bounds = array<i64: 128, 128>}, {pipeline_mode = #tpu.pipeline_mode<synchronous>, transform_indices = @transform_5, window_bounds = array<i64: 128, 128>}, {pipeline_mode = #tpu.pipeline_mode<synchronous>, transform_indices = @transform_6, window_bounds = array<i64: 8, 1>}, {pipeline_mode = #tpu.pipeline_mode<synchronous>, transform_indices = @transform_7, window_bounds = array<i64: 8, 1>}, {transform_indices = @transform_8, window_bounds = array<i64: 1, 8, 16>}]} {
    %c0_i32 = arith.constant 0 : i32
    %0 = arith.cmpi eq, %arg1, %c0_i32 : i32
    %1 = arith.extui %0 : i1 to i32
    %c0_i32_0 = arith.constant 0 : i32
    %2 = arith.cmpi ne, %1, %c0_i32_0 : i32
    scf.if %2 {
      %c0_30 = arith.constant 0 : index
      %c0_31 = arith.constant 0 : index
      %c0_32 = arith.constant 0 : index
      %68 = vector.load %arg3[%c0_30, %c0_31, %c0_32] : memref<1x8x128xf32, #tpu.memory_space<vmem>>, vector<1x8x128xf32>
      %69 = vector.shape_cast %68 : vector<1x8x128xf32> to vector<8x128xf32>
      %c0_33 = arith.constant 0 : index
      %c0_34 = arith.constant 0 : index
      %70 = vector.load %arg4[%c0_33, %c0_34] : memref<1x128xf32, #tpu.memory_space<vmem>>, vector<1x128xf32>
      %c0_35 = arith.constant 0 : index
      %c0_36 = arith.constant 0 : index
      %71 = vector.load %arg5[%c0_35, %c0_36] : memref<1x128xf32, #tpu.memory_space<vmem>>, vector<1x128xf32>
      %cst_37 = arith.constant dense<0.000000e+00> : vector<8xf32>
      %72 = vector.multi_reduction <add>, %69, %cst_37 [1] : vector<8x128xf32> to vector<8xf32>
      %73 = vector.shape_cast %72 : vector<8xf32> to vector<8x1xf32>
      %cst_38 = arith.constant 1.280000e+02 : f32
      %74 = vector.broadcast %cst_38 : f32 to vector<8x1xf32>
      %75 = arith.divf %73, %74 : vector<8x1xf32>
      %76 = vector.broadcast %75 : vector<8x1xf32> to vector<8x128xf32>
      %77 = arith.subf %69, %76 : vector<8x128xf32>
      %78 = arith.mulf %77, %77 : vector<8x128xf32>
      %cst_39 = arith.constant dense<0.000000e+00> : vector<8xf32>
      %79 = vector.multi_reduction <add>, %78, %cst_39 [1] : vector<8x128xf32> to vector<8xf32>
      %80 = vector.shape_cast %79 : vector<8xf32> to vector<8x1xf32>
      %cst_40 = arith.constant 1.280000e+02 : f32
      %81 = vector.broadcast %cst_40 : f32 to vector<8x1xf32>
      %82 = arith.divf %80, %81 : vector<8x1xf32>
      %83 = vector.broadcast %75 : vector<8x1xf32> to vector<8x128xf32>
      %84 = arith.subf %69, %83 : vector<8x128xf32>
      %cst_41 = arith.constant 9.99999974E-6 : f32
      %85 = vector.broadcast %cst_41 : f32 to vector<8x1xf32>
      %86 = arith.addf %82, %85 : vector<8x1xf32>
      %87 = math.rsqrt %86 : vector<8x1xf32>
      %88 = vector.broadcast %87 : vector<8x1xf32> to vector<8x128xf32>
      %89 = arith.mulf %84, %88 : vector<8x128xf32>
      %90 = vector.broadcast %70 : vector<1x128xf32> to vector<8x128xf32>
      %91 = arith.mulf %89, %90 : vector<8x128xf32>
      %92 = vector.broadcast %71 : vector<1x128xf32> to vector<8x128xf32>
      %93 = arith.addf %91, %92 : vector<8x128xf32>
      %94 = arith.truncf %93 : vector<8x128xf32> to vector<8x128xbf16>
      %c0_42 = arith.constant 0 : index
      %c0_43 = arith.constant 0 : index
      %95 = vector.load %arg7[%c0_42, %c0_43] : memref<128x128xbf16, #tpu.memory_space<vmem>>, vector<128x128xbf16>
      %cst_44 = arith.constant dense<0.000000e+00> : vector<8x128xf32>
      %96 = tpu.matmul %94, %95, %cst_44 {dimension_numbers = #tpu.dot_dimension_numbers<[1], [0], [0], [1], [0, 0, 1, 1], [], []>} : vector<8x128xbf16>, vector<128x128xbf16>, vector<8x128xf32> -> vector<8x128xf32>
      %97 = arith.mulf %96, %96 : vector<8x128xf32>
      %cst_45 = arith.constant dense<0.000000e+00> : vector<8xf32>
      %98 = vector.multi_reduction <add>, %97, %cst_45 [1] : vector<8x128xf32> to vector<8xf32>
      %99 = vector.shape_cast %98 : vector<8xf32> to vector<8x1xf32>
      %100 = math.rsqrt %99 : vector<8x1xf32>
      %101 = vector.broadcast %100 : vector<8x1xf32> to vector<8x128xf32>
      %102 = arith.mulf %96, %101 : vector<8x128xf32>
      %103 = arith.truncf %102 : vector<8x128xf32> to vector<8x128xbf16>
      %c0_46 = arith.constant 0 : index
      %c0_47 = arith.constant 0 : index
      %104 = vector.load %arg11[%c0_46, %c0_47] : memref<8x128xbf16, #tpu.memory_space<vmem>>, vector<8x128xbf16>
      tpu.vector_store %arg11[%c0_46, %c0_47], %103 {strides = array<i32>} : memref<8x128xbf16, #tpu.memory_space<vmem>>, vector<8x128xbf16>,
    } else {
    }
    %c0 = arith.constant 0 : index
    %c0_1 = arith.constant 0 : index
    %c0_2 = arith.constant 0 : index
    %3 = vector.load %arg2[%c0, %c0_1, %c0_2] : memref<1x16x128xf32, #tpu.memory_space<vmem>>, vector<1x16x128xf32>
    %4 = vector.shape_cast %3 : vector<1x16x128xf32> to vector<16x128xf32>
    %c0_3 = arith.constant 0 : index
    %c0_4 = arith.constant 0 : index
    %5 = vector.load %arg4[%c0_3, %c0_4] : memref<1x128xf32, #tpu.memory_space<vmem>>, vector<1x128xf32>
    %c0_5 = arith.constant 0 : index
    %c0_6 = arith.constant 0 : index
    %6 = vector.load %arg5[%c0_5, %c0_6] : memref<1x128xf32, #tpu.memory_space<vmem>>, vector<1x128xf32>
    %cst = arith.constant dense<0.000000e+00> : vector<16xf32>
    %7 = vector.multi_reduction <add>, %4, %cst [1] : vector<16x128xf32> to vector<16xf32>
    %8 = vector.shape_cast %7 : vector<16xf32> to vector<16x1xf32>
    %cst_7 = arith.constant 1.280000e+02 : f32
    %9 = vector.broadcast %cst_7 : f32 to vector<16x1xf32>
    %10 = arith.divf %8, %9 : vector<16x1xf32>
    %11 = vector.broadcast %10 : vector<16x1xf32> to vector<16x128xf32>
    %12 = arith.subf %4, %11 : vector<16x128xf32>
    %13 = arith.mulf %12, %12 : vector<16x128xf32>
    %cst_8 = arith.constant dense<0.000000e+00> : vector<16xf32>
    %14 = vector.multi_reduction <add>, %13, %cst_8 [1] : vector<16x128xf32> to vector<16xf32>
    %15 = vector.shape_cast %14 : vector<16xf32> to vector<16x1xf32>
    %cst_9 = arith.constant 1.280000e+02 : f32
    %16 = vector.broadcast %cst_9 : f32 to vector<16x1xf32>
    %17 = arith.divf %15, %16 : vector<16x1xf32>
    %18 = vector.broadcast %10 : vector<16x1xf32> to vector<16x128xf32>
    %19 = arith.subf %4, %18 : vector<16x128xf32>
    %cst_10 = arith.constant 9.99999974E-6 : f32
    %20 = vector.broadcast %cst_10 : f32 to vector<16x1xf32>
    %21 = arith.addf %17, %20 : vector<16x1xf32>
    %22 = math.rsqrt %21 : vector<16x1xf32>
    %23 = vector.broadcast %22 : vector<16x1xf32> to vector<16x128xf32>
    %24 = arith.mulf %19, %23 : vector<16x128xf32>
    %25 = vector.broadcast %5 : vector<1x128xf32> to vector<16x128xf32>
    %26 = arith.mulf %24, %25 : vector<16x128xf32>
    %27 = vector.broadcast %6 : vector<1x128xf32> to vector<16x128xf32>
    %28 = arith.addf %26, %27 : vector<16x128xf32>
    %29 = arith.truncf %28 : vector<16x128xf32> to vector<16x128xbf16>
    %c0_11 = arith.constant 0 : index
    %c0_12 = arith.constant 0 : index
    %30 = vector.load %arg6[%c0_11, %c0_12] : memref<128x128xbf16, #tpu.memory_space<vmem>>, vector<128x128xbf16>
    %cst_13 = arith.constant dense<0.000000e+00> : vector<16x128xf32>
    %31 = tpu.matmul %29, %30, %cst_13 {dimension_numbers = #tpu.dot_dimension_numbers<[1], [0], [0], [1], [0, 0, 1, 1], [], []>} : vector<16x128xbf16>, vector<128x128xbf16>, vector<16x128xf32> -> vector<16x128xf32>
    %32 = arith.mulf %31, %31 : vector<16x128xf32>
    %cst_14 = arith.constant dense<0.000000e+00> : vector<16xf32>
    %33 = vector.multi_reduction <add>, %32, %cst_14 [1] : vector<16x128xf32> to vector<16xf32>
    %34 = vector.shape_cast %33 : vector<16xf32> to vector<16x1xf32>
    %35 = math.rsqrt %34 : vector<16x1xf32>
    %36 = vector.broadcast %35 : vector<16x1xf32> to vector<16x128xf32>
    %37 = arith.mulf %31, %36 : vector<16x128xf32>
    %c0_15 = arith.constant 0 : index
    %c0_16 = arith.constant 0 : index
    %38 = vector.load %arg11[%c0_15, %c0_16] : memref<8x128xbf16, #tpu.memory_space<vmem>>, vector<8x128xbf16>
    %39 = arith.truncf %37 : vector<16x128xf32> to vector<16x128xbf16>
    %cst_17 = arith.constant dense<0.000000e+00> : vector<8x16xf32>
    %40 = tpu.matmul %38, %39, %cst_17 {dimension_numbers = #tpu.dot_dimension_numbers<[1], [1], [0], [0], [0, 0, 1, 0], [], []>} : vector<8x128xbf16>, vector<16x128xbf16>, vector<8x16xf32> -> vector<8x16xf32>
    %cst_18 = arith.constant dense<0.000000e+00> : vector<16xf32>
    %41 = vector.multi_reduction <add>, %40, %cst_18 [0] : vector<8x16xf32> to vector<16xf32>
    %42 = vector.shape_cast %41 : vector<16xf32> to vector<1x16xf32>
    %cst_19 = arith.constant 8.000000e+00 : f32
    %43 = vector.broadcast %cst_19 : f32 to vector<1x16xf32>
    %44 = arith.divf %42, %43 : vector<1x16xf32>
    %45 = vector.broadcast %44 : vector<1x16xf32> to vector<8x16xf32>
    %46 = arith.subf %40, %45 : vector<8x16xf32>
    %47 = arith.mulf %46, %46 : vector<8x16xf32>
    %cst_20 = arith.constant dense<0.000000e+00> : vector<16xf32>
    %48 = vector.multi_reduction <add>, %47, %cst_20 [0] : vector<8x16xf32> to vector<16xf32>
    %49 = vector.shape_cast %48 : vector<16xf32> to vector<1x16xf32>
    %cst_21 = arith.constant 8.000000e+00 : f32
    %50 = vector.broadcast %cst_21 : f32 to vector<1x16xf32>
    %51 = arith.divf %49, %50 : vector<1x16xf32>
    %52 = vector.broadcast %44 : vector<1x16xf32> to vector<8x16xf32>
    %53 = arith.subf %40, %52 : vector<8x16xf32>
    %cst_22 = arith.constant 9.99999974E-6 : f32
    %54 = vector.broadcast %cst_22 : f32 to vector<1x16xf32>
    %55 = arith.addf %51, %54 : vector<1x16xf32>
    %56 = math.rsqrt %55 : vector<1x16xf32>
    %57 = vector.broadcast %56 : vector<1x16xf32> to vector<8x16xf32>
    %58 = arith.mulf %53, %57 : vector<8x16xf32>
    %c0_23 = arith.constant 0 : index
    %c0_24 = arith.constant 0 : index
    %59 = vector.load %arg8[%c0_23, %c0_24] : memref<8x1xf32, #tpu.memory_space<vmem>>, vector<8x1xf32>
    %60 = vector.broadcast %59 : vector<8x1xf32> to vector<8x16xf32>
    %61 = arith.mulf %58, %60 : vector<8x16xf32>
    %c0_25 = arith.constant 0 : index
    %c0_26 = arith.constant 0 : index
    %62 = vector.load %arg9[%c0_25, %c0_26] : memref<8x1xf32, #tpu.memory_space<vmem>>, vector<8x1xf32>
    %63 = vector.broadcast %62 : vector<8x1xf32> to vector<8x16xf32>
    %64 = arith.addf %61, %63 : vector<8x16xf32>
    %c0_27 = arith.constant 0 : index
    %c0_28 = arith.constant 0 : index
    %c0_29 = arith.constant 0 : index
    %65 = vector.load %arg10[%c0_27, %c0_28, %c0_29] : memref<1x8x16xf32, #tpu.memory_space<vmem>>, vector<1x8x16xf32>
    %66 = vector.shape_cast %65 : vector<1x8x16xf32> to vector<8x16xf32>
    %67 = vector.shape_cast %64 : vector<8x16xf32> to vector<1x8x16xf32>
    tpu.vector_store %arg10[%c0_27, %c0_28, %c0_29], %67 {strides = array<i32>} : memref<1x8x16xf32, #tpu.memory_space<vmem>>, vector<1x8x16xf32>,
    return
  }
  func.func @transform_0(%arg0: i32, %arg1: i32) -> (i32, i32, i32) {
    %c0_i32 = arith.constant 0 : i32
    %c0_i32_0 = arith.constant 0 : i32
    return %arg0, %arg1, %c0_i32 : i32, i32, i32
  }
  func.func @transform_1(%arg0: i32, %arg1: i32) -> (i32, i32, i32) {
    %c0_i32 = arith.constant 0 : i32
    %c0_i32_0 = arith.constant 0 : i32
    %c0_i32_1 = arith.constant 0 : i32
    return %arg0, %c0_i32, %c0_i32_0 : i32, i32, i32
  }
  func.func @transform_2(%arg0: i32, %arg1: i32) -> (i32, i32) {
    %c0_i32 = arith.constant 0 : i32
    %c0_i32_0 = arith.constant 0 : i32
    %c0_i32_1 = arith.constant 0 : i32
    return %c0_i32, %c0_i32_0 : i32, i32
  }
  func.func @transform_3(%arg0: i32, %arg1: i32) -> (i32, i32) {
    %c0_i32 = arith.constant 0 : i32
    %c0_i32_0 = arith.constant 0 : i32
    %c0_i32_1 = arith.constant 0 : i32
    return %c0_i32, %c0_i32_0 : i32, i32
  }
  func.func @transform_4(%arg0: i32, %arg1: i32) -> (i32, i32) {
    %c0_i32 = arith.constant 0 : i32
    %c0_i32_0 = arith.constant 0 : i32
    %c0_i32_1 = arith.constant 0 : i32
    return %c0_i32, %c0_i32_0 : i32, i32
  }
  func.func @transform_5(%arg0: i32, %arg1: i32) -> (i32, i32) {
    %c0_i32 = arith.constant 0 : i32
    %c0_i32_0 = arith.constant 0 : i32
    %c0_i32_1 = arith.constant 0 : i32
    return %c0_i32, %c0_i32_0 : i32, i32
  }
  func.func @transform_6(%arg0: i32, %arg1: i32) -> (i32, i32) {
    %c0_i32 = arith.constant 0 : i32
    %c0_i32_0 = arith.constant 0 : i32
    %c0_i32_1 = arith.constant 0 : i32
    return %c0_i32, %c0_i32_0 : i32, i32
  }
  func.func @transform_7(%arg0: i32, %arg1: i32) -> (i32, i32) {
    %c0_i32 = arith.constant 0 : i32
    %c0_i32_0 = arith.constant 0 : i32
    %c0_i32_1 = arith.constant 0 : i32
    return %c0_i32, %c0_i32_0 : i32, i32
  }
  func.func @transform_8(%arg0: i32, %arg1: i32) -> (i32, i32, i32) {
    %c0_i32 = arith.constant 0 : i32
    %c0_i32_0 = arith.constant 0 : i32
    return %arg0, %c0_i32, %arg1 : i32, i32, i32
  }
}

</mosaic_0001>

<llo_original>
// kernel: transformer_head_forward.4
$region0: #{transformer_head_forward.4}
  #allocation0 [shape = 'u32[]', space=smem, size = 0x4, offset = 0x4, fixed_abs, tag = 'smem constant byte address 0x4 - core index']
  #allocation1 [shape = 'u32[144,128]{1,0:T(1,128)}', space=vmem, size = 0x12000, scoped, tag = 'internal scratch']
  %s0 = inlined_call_operand.vmem [shape: f32[2,16,8], index: 0, kind: input, shape index: {}]
  %s1 = inlined_call_operand.vmem [shape: bf16[8,128], index: 1, kind: input, shape index: {}]
  %s2 = inlined_call_operand.vmem [shape: f32[1,128], index: 2, kind: input, shape index: {}]
  %s3 = inlined_call_operand.vmem [shape: f32[16,128], index: 3, kind: input, shape index: {}]
  %s4 = inlined_call_operand.vmem [shape: f32[2,16,128], index: 4, kind: output, shape index: {}]
  %s5 = sld [smem:[#allocation0]]
  $region49: #{transformer_head_forward.4} parent=0
    _
  %s7 = ssub.s32 1, %s5
  %s8 = scalar_select 0, %s7, %s5
  loop: start=0, step=1, limit=4
  $region2: #{transformer_head_forward.4} parent=0 // loop_pre_header
    _
  $region3: #{transformer_head_forward.4} parent=0 // loop_header
    %s10 = sphi 0, %s14
    %p11 = scmp.ge.s32.totalorder %s10, 4
    %s17 = sphi 0, %s29
    %s18 = sphi 0, %s25
    %s19 = sphi 0, %s17
    %s20 = sphi 0, %s18
    %s21 = sphi 0, %s19
    %s22 = sphi 0, %s20
    %s34 = sphi 0, %s36
    %s37 = sphi 0, %s34
    %s38 = sphi 0, %s37
    %s54 = sphi 0, %s38
    %s58 = sphi 0, %s58
    %s60 = sphi 0, %s58
    %s61 = sphi 0, %s60
    %s75 = sphi 0, %s61
    %s79 = sphi 0, %s79
    %s81 = sphi 0, %s79
    %s82 = sphi 0, %s81
    %s96 = sphi 0, %s82
    %s102 = sphi 0, %s104
    %s105 = sphi 0, %s102
    %s106 = sphi 0, %s105
    %s122 = sphi 0, %s106
    %s130 = sphi 0, %s132
    %s133 = sphi 0, %s130
    %s134 = sphi 0, %s133
    %s150 = sphi 0, %s134
  $region4: #{transformer_head_forward.4} parent=0 // loop_header_branch
    %13 = sbr.rel (%p11) target = $region8
  $region5: #{transformer_head_forward.4} parent=0 // loop_body
    %s15 = ssub.s32 %s10, 1
    %s16 = ssub.s32 %s10, 2
    %s23 = sadd.s32 1, %s18
    %p24 = scmp.ge.s32.totalorder %s23, 1
    %s25 = scalar_select %p24, 0, %s23
    %s26 = sadd.s32 1, %s17
    %s27 = scalar_select %p24, %s26, %s17
    %p28 = scmp.ge.s32.totalorder %s27, 2
    %s29 = scalar_select %p28, 0, %s27
    %s30 = ssub.s32 %s17, %s29
    %s31 = ssub.s32 %s18, %s25
    %s32 = sor.u32 %s30, %s31
    %p33 = scmp.eq.s32.totalorder %s32, 0
    %s35 = sadd.s32 %s34, 1
    %s36 = scalar_select %p33, %s34, %s35
    %p39 = pneg %p33
    %p40 = scmp.eq.s32.totalorder %s10, 1
    %p41 = por %p39, %p40
    %p42 = scmp.ne.s32.totalorder %s34, %s37
    %p43 = scmp.eq.s32.totalorder %s10, 0
    %p44 = por %p42, %p43
    %p45 = scmp.ne.s32.totalorder %s34, %s37
    %p46 = scmp.eq.s32.totalorder %s15, 1
    %p47 = por %p45, %p46
    %p48 = scmp.ne.s32.totalorder %s37, %s38
    %p49 = scmp.eq.s32.totalorder %s15, 0
    %p50 = por %p48, %p49
    %p51 = scmp.ne.s32.totalorder %s37, %s38
    %p52 = scmp.eq.s32.totalorder %s16, 1
    %p53 = por %p51, %p52
    %p55 = scmp.ne.s32.totalorder %s38, %s54
    %p56 = scmp.eq.s32.totalorder %s16, 0
    %p57 = por %p55, %p56
    %s59 = sadd.s32 %s58, 1
    %p62 = scmp.eq.s32.totalorder %s10, 1
    %p63 = scmp.ne.s32.totalorder %s58, %s60
    %p64 = scmp.eq.s32.totalorder %s10, 0
    %p65 = por %p63, %p64
    %p66 = scmp.ne.s32.totalorder %s58, %s60
    %p67 = scmp.eq.s32.totalorder %s15, 1
    %p68 = por %p66, %p67
    %p69 = scmp.ne.s32.totalorder %s60, %s61
    %p70 = scmp.eq.s32.totalorder %s15, 0
    %p71 = por %p69, %p70
    %p72 = scmp.ne.s32.totalorder %s60, %s61
    %p73 = scmp.eq.s32.totalorder %s16, 1
    %p74 = por %p72, %p73
    %p76 = scmp.ne.s32.totalorder %s61, %s75
    %p77 = scmp.eq.s32.totalorder %s16, 0
    %p78 = por %p76, %p77
    %s80 = sadd.s32 %s79, 1
    %p83 = scmp.eq.s32.totalorder %s10, 1
    %p84 = scmp.ne.s32.totalorder %s79, %s81
    %p85 = scmp.eq.s32.totalorder %s10, 0
    %p86 = por %p84, %p85
    %p87 = scmp.ne.s32.totalorder %s79, %s81
    %p88 = scmp.eq.s32.totalorder %s15, 1
    %p89 = por %p87, %p88
    %p90 = scmp.ne.s32.totalorder %s81, %s82
    %p91 = scmp.eq.s32.totalorder %s15, 0
    %p92 = por %p90, %p91
    %p93 = scmp.ne.s32.totalorder %s81, %s82
    %p94 = scmp.eq.s32.totalorder %s16, 1
    %p95 = por %p93, %p94
    %p97 = scmp.ne.s32.totalorder %s82, %s96
    %p98 = scmp.eq.s32.totalorder %s16, 0
    %p99 = por %p97, %p98
    %s100 = ssub.s32 %s18, %s25
    %p101 = scmp.eq.s32.totalorder %s100, 0
    %s103 = sadd.s32 %s102, 1
    %s104 = scalar_select %p101, %s102, %s103
    %p107 = pneg %p101
    %p108 = scmp.eq.s32.totalorder %s10, 1
    %p109 = por %p107, %p108
    %p110 = scmp.ne.s32.totalorder %s102, %s105
    %p111 = scmp.eq.s32.totalorder %s10, 0
    %p112 = por %p110, %p111
    %p113 = scmp.ne.s32.totalorder %s102, %s105
    %p114 = scmp.eq.s32.totalorder %s15, 1
    %p115 = por %p113, %p114
    %p116 = scmp.ne.s32.totalorder %s105, %s106
    %p117 = scmp.eq.s32.totalorder %s15, 0
    %p118 = por %p116, %p117
    %p119 = scmp.ne.s32.totalorder %s105, %s106
    %p120 = scmp.eq.s32.totalorder %s16, 1
    %p121 = por %p119, %p120
    %p123 = scmp.ne.s32.totalorder %s106, %s122
    %p124 = scmp.eq.s32.totalorder %s16, 0
    %p125 = por %p123, %p124
    %s126 = ssub.s32 %s17, %s29
    %s127 = ssub.s32 %s18, %s25
    %s128 = sor.u32 %s126, %s127
    %p129 = scmp.eq.s32.totalorder %s128, 0
    %s131 = sadd.s32 %s130, 1
    %s132 = scalar_select %p129, %s130, %s131
    %p135 = pneg %p129
    %p136 = scmp.eq.s32.totalorder %s10, 1
    %p137 = por %p135, %p136
    %p138 = scmp.ne.s32.totalorder %s130, %s133
    %p139 = scmp.eq.s32.totalorder %s10, 0
    %p140 = por %p138, %p139
    %p141 = scmp.ne.s32.totalorder %s130, %s133
    %p142 = scmp.eq.s32.totalorder %s15, 1
    %p143 = por %p141, %p142
    %p144 = scmp.ne.s32.totalorder %s133, %s134
    %p145 = scmp.eq.s32.totalorder %s15, 0
    %p146 = por %p144, %p145
    %p147 = scmp.ne.s32.totalorder %s133, %s134
    %p148 = scmp.eq.s32.totalorder %s16, 1
    %p149 = por %p147, %p148
    %p151 = scmp.ne.s32.totalorder %s134, %s150
    %p152 = scmp.eq.s32.totalorder %s16, 0
    %p153 = por %p151, %p152
    %p154 = scmp.le.s32.totalorder 1, %s10
    %p155 = scmp.lt.s32.totalorder %s10, 3
    %p156 = pnand %p154, %p155
    %p157 = pneg %p156
    // Predicated region
    $region9: #{transformer_head_forward.4} parent=5 // pred_check
      _
    $region10: #{transformer_head_forward.4} parent=5 // pred_check_branch
      %159 = sbr.rel (%p156) target = $region12
    $region11: #{transformer_head_forward.4} parent=5 // pred_region
      %s160 = ssub.s32 %s10, 1
      // Predicated region
      $region13: #{transformer_head_forward.4} parent=11 // pred_check
        %p161 = pneg %p71
      $region14: #{transformer_head_forward.4} parent=11 // pred_check_branch
        %163 = sbr.rel (%p161) target = $region16
      $region15: #{transformer_head_forward.4} parent=11 // pred_region
        _
      $region16: #{transformer_head_forward.4} parent=11 // pred_fallthru
        _
      // Predicated region
      $region17: #{transformer_head_forward.4} parent=11 // pred_check
        %p164 = pneg %p92
      $region18: #{transformer_head_forward.4} parent=11 // pred_check_branch
        %166 = sbr.rel (%p164) target = $region20
      $region19: #{transformer_head_forward.4} parent=11 // pred_region
        _
      $region20: #{transformer_head_forward.4} parent=11 // pred_fallthru
        _
      // Predicated region
      $region21: #{transformer_head_forward.4} parent=11 // pred_check
        %p167 = pneg %p118
      $region22: #{transformer_head_forward.4} parent=11 // pred_check_branch
        %169 = sbr.rel (%p167) target = $region24
      $region23: #{transformer_head_forward.4} parent=11 // pred_region
        %s170 = smul.u32 2, %s20
        %p171 = scmp.lt.s32.totalorder %s170, 1
        %s172 = scalar_select %p171, %s170, 1
        %s173 = smul.addr %s172, 8
        %s174 = scalar_lea.vmem %s3, %s173
        %s175 = smul.u32 2, %s20
      $region24: #{transformer_head_forward.4} parent=11 // pred_fallthru
        _
    $region12: #{transformer_head_forward.4} parent=5 // pred_fallthru
      _
    %p176 = scmp.lt.s32.totalorder %s10, 2
    // Predicated region
    $region25: #{transformer_head_forward.4} parent=5 // pred_check
      %p177 = pneg %p176
    $region26: #{transformer_head_forward.4} parent=5 // pred_check_branch
      %179 = sbr.rel (%p177) target = $region28
    $region27: #{transformer_head_forward.4} parent=5 // pred_region
      // Predicated region
      $region29: #{transformer_head_forward.4} parent=27 // pred_check
        %p180 = pneg %p44
      $region30: #{transformer_head_forward.4} parent=27 // pred_check_branch
        %182 = sbr.rel (%p180) target = $region32
      $region31: #{transformer_head_forward.4} parent=27 // pred_region
        %s183 = smul.u32 2, %s18
        %p184 = scmp.lt.s32.totalorder %s17, 1
        %s185 = scalar_select %p184, %s17, 1
        %p186 = scmp.lt.s32.totalorder %s183, 1
        %s187 = scalar_select %p186, %s183, 1
        %s188 = smul.addr %s185, 2
        %s189 = sadd.s32 %s187, %s188
        %s190 = smul.addr %s189, 8
        %s191 = scalar_lea.vmem %s0, %s190
        %s192 = smul.u32 2, %s18
      $region32: #{transformer_head_forward.4} parent=27 // pred_fallthru
        _
    $region28: #{transformer_head_forward.4} parent=5 // pred_fallthru
      _
    %p193 = scmp.le.s32.totalorder 1, %s10
    %p194 = scmp.lt.s32.totalorder %s10, 3
    %p195 = pnand %p193, %p194
    %p196 = pneg %p195
    // Predicated region
    $region33: #{transformer_head_forward.4} parent=5 // pred_check
      _
    $region34: #{transformer_head_forward.4} parent=5 // pred_check_branch
      %198 = sbr.rel (%p195) target = $region36
    $region35: #{transformer_head_forward.4} parent=5 // pred_region
      %s199 = ssub.s32 %s10, 1
      %s200 = smul.u32 2, %s20
      %p201 = scmp.lt.s32.totalorder %s19, 1
      %s202 = scalar_select %p201, %s19, 1
      %p203 = scmp.lt.s32.totalorder %s200, 1
      %s204 = scalar_select %p203, %s200, 1
      %s205 = smul.addr %s202, 2
      %s206 = sadd.s32 %s204, %s205
      %s207 = smul.addr %s206, 8
      %s208 = scalar_lea.vmem %s0, %s207
      %p209 = pneg %p50
      %p210 = pneg %p47
      %p211 = pneg %p71
      %p212 = pneg %p68
      %p213 = pneg %p92
      %p214 = pneg %p89
      %s215 = smul.u32 2, %s20
      %p216 = scmp.lt.s32.totalorder %s215, 1
      %s217 = scalar_select %p216, %s215, 1
      %s218 = smul.addr %s217, 8
      %s219 = scalar_lea.vmem %s3, %s218
      %p220 = pneg %p118
      %p221 = pneg %p115
      %p222 = pneg %p146
      %p223 = pneg %p143
      %s224 = smul.u32 2, %s20
      %p225 = scmp.lt.s32.totalorder %s19, 1
      %s226 = scalar_select %p225, %s19, 1
      %p227 = scmp.lt.s32.totalorder %s224, 1
      %s228 = scalar_select %p227, %s224, 1
      %s229 = smul.addr %s226, 2
      %s230 = sadd.s32 %s228, %s229
      %s231 = smul.addr %s230, 8
      %s232 = scalar_lea.vmem %s4, %s231
      %s233 = smul.u32 2, %s20
      %p234 = scmp.lt.s32.totalorder %s19, 1
      %s235 = scalar_select %p234, %s19, 1
      %p236 = scmp.lt.s32.totalorder %s233, 1
      %s237 = scalar_select %p236, %s233, 1
      %s238 = smul.addr %s235, 2
      %s239 = sadd.s32 %s237, %s238
      %s240 = smul.addr %s239, 8
      %s241 = scalar_lea.vmem %s0, %s240
      %s242 = smul.u32 2, %s20
      %s243 = smul.u32 2, %s20
      %p244 = scmp.lt.s32.totalorder %s243, 1
      %s245 = scalar_select %p244, %s243, 1
      %s246 = smul.addr %s245, 8
      %s247 = scalar_lea.vmem %s3, %s246
      %s248 = smul.u32 2, %s20
      %s249 = smul.u32 2, %s20
      %p250 = scmp.lt.s32.totalorder %s19, 1
      %s251 = scalar_select %p250, %s19, 1
      %p252 = scmp.lt.s32.totalorder %s249, 1
      %s253 = scalar_select %p252, %s249, 1
      %s254 = smul.addr %s251, 2
      %s255 = sadd.s32 %s253, %s254
      %s256 = smul.addr %s255, 8
      %s257 = scalar_lea.vmem %s4, %s256
      %s258 = smul.u32 2, %s20
      %v260 = vld [vmem:[%s241] sm:$0xff]
      %v261 = vld [vmem:[%s241 + $0x8] sm:$0xff]
      %v262 = vpack.c.bf16 %v261, %v260
      %v263 = vld [vmem:[%s1] sm:$0xf]
      %v264 = vld [vmem:[%s2] sm:$0x1]
      %v266 = vlaneseq
      %v267 = vshrl.u32 %v266, 7
      %v268 = vsub.s32 0, %v267
      %v269 = vrot.slane %v264, %v268
      %vm271 = vcmask 64512
      %v273 = vsel %vm271, %v262, 0
      %vm275 = vcmask 1043456
      %v277 = vsel %vm275, %v263, 0
      %279 = vmatprep.subr.bf16.mxu0 0
      %280 = vmatpush1.bf16.msra.mxu0 0
      %281 = vmatprep.subr.bf16.mxu0 0
      %282 = vmatpush1.bf16.msra.mxu0 0
      %283 = vmatprep.subr.bf16.mxu0 0
      %284 = vmatpush1.bf16.msra.mxu0 0
      %285 = vmatprep.subr.bf16.mxu0 0
      %286 = vmatpush1.bf16.msra.mxu0 0
      %287 = vmatprep.subr.bf16.mxu0 0
      %288 = vmatpush1.bf16.msra.mxu0 0
      %289 = vmatprep.subr.bf16.mxu0 0
      %290 = vmatpush1.bf16.msra.mxu0 0
      %291 = vmatprep.subr.bf16.mxu0 0
      %292 = vmatpush1.bf16.msra.mxu0 0
      %293 = vmatprep.subr.bf16.mxu0 0
      %294 = vmatpush1.bf16.msra.mxu0 %v277
      %295 = vmatprep.subr.bf16.mxu0 0
      %296 = vmatpush2.bf16.msra.mxu0 0
      %297 = vmatprep.subr.bf16.mxu0 0
      %298 = vmatpush2.bf16.msra.mxu0 0
      %299 = vmatprep.subr.bf16.mxu0 0
      %300 = vmatpush2.bf16.msra.mxu0 0
      %301 = vmatprep.subr.bf16.mxu0 0
      %302 = vmatpush2.bf16.msra.mxu0 0
      %303 = vmatprep.subr.bf16.mxu0 0
      %304 = vmatpush2.bf16.msra.mxu0 0
      %305 = vmatprep.subr.bf16.mxu0 0
      %306 = vmatpush2.bf16.msra.mxu0 0
      %307 = vmatprep.subr.bf16.mxu0 0
      %308 = vmatpush2.bf16.msra.mxu0 0
      %309 = vmatprep.subr.bf16.mxu0 0
      %310 = vmatpush2.bf16.msra.mxu0 0
      %311 = vmatprep.mubr.bf16.mxu0 0
      %312 = vmatmul.mubr.bf16.gmra.mxu0 %v273
      %v313 = vpop.f32.mrf.mxu0
      %v314 = vadd.f32 %v269, %v313
      %v315 = vpop.f32.mrf.mxu0
      %v316 = vpop.f32.mrf.mxu0
      %v317 = vadd.f32 %v269, %v316
      %v318 = vpop.f32.mrf.mxu0
      %319 = vdwg.mxu0
      %v320 = vld [vmem:[%s247] sm:$0xff]
      %v321 = vld [vmem:[%s247 + $0x8] sm:$0xff]
      %v322 = vadd.f32 %v314, %v320
      %v323 = vadd.f32 %v317, %v321
      %324 = vst [vmem:[%s257] sm:$0xff] %v322
      %325 = vst [vmem:[%s257 + $0x8] sm:$0xff] %v323
      %s326 = smul.u32 2, %s20
      %p327 = scmp.lt.s32.totalorder %s19, 1
      %s328 = scalar_select %p327, %s19, 1
      %p329 = scmp.lt.s32.totalorder %s326, 1
      %s330 = scalar_select %p329, %s326, 1
      %s331 = smul.addr %s328, 2
      %s332 = sadd.s32 %s330, %s331
      %s333 = smul.addr %s332, 8
      %s334 = scalar_lea.vmem %s4, %s333
      // Predicated region
      $region37: #{transformer_head_forward.4} parent=35 // pred_check
        %p335 = pneg %p143
      $region38: #{transformer_head_forward.4} parent=35 // pred_check_branch
        %337 = sbr.rel (%p335) target = $region40
      $region39: #{transformer_head_forward.4} parent=35 // pred_region
        %s338 = smul.u32 2, %s20
      $region40: #{transformer_head_forward.4} parent=35 // pred_fallthru
        _
    $region36: #{transformer_head_forward.4} parent=5 // pred_fallthru
      _
    %p339 = scmp.le.s32.totalorder 2, %s10
    // Predicated region
    $region41: #{transformer_head_forward.4} parent=5 // pred_check
      %p340 = pneg %p339
    $region42: #{transformer_head_forward.4} parent=5 // pred_check_branch
      %342 = sbr.rel (%p340) target = $region44
    $region43: #{transformer_head_forward.4} parent=5 // pred_region
      %s343 = ssub.s32 %s10, 2
      // Predicated region
      $region45: #{transformer_head_forward.4} parent=43 // pred_check
        %p344 = pneg %p149
      $region46: #{transformer_head_forward.4} parent=43 // pred_check_branch
        %346 = sbr.rel (%p344) target = $region48
      $region47: #{transformer_head_forward.4} parent=43 // pred_region
        %s347 = smul.u32 2, %s22
        %p348 = scmp.lt.s32.totalorder %s21, 1
        %s349 = scalar_select %p348, %s21, 1
        %p350 = scmp.lt.s32.totalorder %s347, 1
        %s351 = scalar_select %p350, %s347, 1
        %s352 = smul.addr %s349, 2
        %s353 = sadd.s32 %s351, %s352
        %s354 = smul.addr %s353, 8
        %s355 = scalar_lea.vmem %s4, %s354
      $region48: #{transformer_head_forward.4} parent=43 // pred_fallthru
        _
    $region44: #{transformer_head_forward.4} parent=5 // pred_fallthru
      _
  $region6: #{transformer_head_forward.4} parent=0 // loop_footer
    %s14 = sadd.s32 1, %s10
  $region7: #{transformer_head_forward.4} parent=0 // loop_footer_branch
    %9 = sbr.rel target = $region3
  $region8: #{transformer_head_forward.4} parent=0 // loop_exit
    _

// kernel: transformer_head_forward.7
$region0: #{transformer_head_forward.7}
  #allocation0 [shape = 'u32[]', space=smem, size = 0x4, offset = 0x4, fixed_abs, tag = 'smem constant byte address 0x4 - core index']
  #allocation1 [shape = 'u32[144,128]{1,0:T(1,128)}', space=vmem, size = 0x12000, scoped, tag = 'internal scratch']
  #allocation2 [shape = 'bf16[8,128]{1,0:T(8,128)(2,1)}', space=vmem, size = 0x800, scoped, tag = 'scratch operand']
  %s0 = inlined_call_operand.vmem [shape: f32[2,16,128], index: 0, kind: input, shape index: {}]
  %s1 = inlined_call_operand.vmem [shape: f32[2,8,128], index: 1, kind: input, shape index: {}]
  %s2 = inlined_call_operand.vmem [shape: f32[1,128], index: 2, kind: input, shape index: {}]
  %s3 = inlined_call_operand.vmem [shape: f32[1,128], index: 3, kind: input, shape index: {}]
  %s4 = inlined_call_operand.vmem [shape: bf16[128,128], index: 4, kind: input, shape index: {}]
  %s5 = inlined_call_operand.vmem [shape: bf16[128,128], index: 5, kind: input, shape index: {}]
  %s6 = inlined_call_operand.vmem [shape: f32[8,1], index: 6, kind: input, shape index: {}]
  %s7 = inlined_call_operand.vmem [shape: f32[8,1], index: 7, kind: input, shape index: {}]
  %s8 = inlined_call_operand.vmem [shape: f32[2,8,16], index: 8, kind: output, shape index: {}]
  %s9 = sld [smem:[#allocation0]]
  $region69: #{transformer_head_forward.7} parent=0
    _
  %s11 = ssub.s32 1, %s9
  %s12 = scalar_select 0, %s11, %s9
  loop: start=0, step=1, limit=4
  $region2: #{transformer_head_forward.7} parent=0 // loop_pre_header
    _
  $region3: #{transformer_head_forward.7} parent=0 // loop_header
    %s14 = sphi 0, %s18
    %p15 = scmp.ge.s32.totalorder %s14, 4
    %s21 = sphi 0, %s33
    %s22 = sphi 0, %s29
    %s23 = sphi 0, %s21
    %s24 = sphi 0, %s22
    %s25 = sphi 0, %s23
    %s26 = sphi 0, %s24
    %s38 = sphi 0, %s40
    %s41 = sphi 0, %s38
    %s42 = sphi 0, %s41
    %s58 = sphi 0, %s42
    %s64 = sphi 0, %s66
    %s67 = sphi 0, %s64
    %s68 = sphi 0, %s67
    %s84 = sphi 0, %s68
    %s88 = sphi 0, %s88
    %s90 = sphi 0, %s88
    %s91 = sphi 0, %s90
    %s105 = sphi 0, %s91
    %s109 = sphi 0, %s109
    %s111 = sphi 0, %s109
    %s112 = sphi 0, %s111
    %s126 = sphi 0, %s112
    %s130 = sphi 0, %s130
    %s132 = sphi 0, %s130
    %s133 = sphi 0, %s132
    %s147 = sphi 0, %s133
    %s151 = sphi 0, %s151
    %s153 = sphi 0, %s151
    %s154 = sphi 0, %s153
    %s168 = sphi 0, %s154
    %s172 = sphi 0, %s172
    %s174 = sphi 0, %s172
    %s175 = sphi 0, %s174
    %s189 = sphi 0, %s175
    %s193 = sphi 0, %s193
    %s195 = sphi 0, %s193
    %s196 = sphi 0, %s195
    %s210 = sphi 0, %s196
    %s218 = sphi 0, %s220
    %s221 = sphi 0, %s218
    %s222 = sphi 0, %s221
    %s238 = sphi 0, %s222
  $region4: #{transformer_head_forward.7} parent=0 // loop_header_branch
    %17 = sbr.rel (%p15) target = $region8
  $region5: #{transformer_head_forward.7} parent=0 // loop_body
    %s19 = ssub.s32 %s14, 1
    %s20 = ssub.s32 %s14, 2
    %s27 = sadd.s32 1, %s22
    %p28 = scmp.ge.s32.totalorder %s27, 1
    %s29 = scalar_select %p28, 0, %s27
    %s30 = sadd.s32 1, %s21
    %s31 = scalar_select %p28, %s30, %s21
    %p32 = scmp.ge.s32.totalorder %s31, 2
    %s33 = scalar_select %p32, 0, %s31
    %s34 = ssub.s32 %s21, %s33
    %s35 = ssub.s32 %s22, %s29
    %s36 = sor.u32 %s34, %s35
    %p37 = scmp.eq.s32.totalorder %s36, 0
    %s39 = sadd.s32 %s38, 1
    %s40 = scalar_select %p37, %s38, %s39
    %p43 = pneg %p37
    %p44 = scmp.eq.s32.totalorder %s14, 1
    %p45 = por %p43, %p44
    %p46 = scmp.ne.s32.totalorder %s38, %s41
    %p47 = scmp.eq.s32.totalorder %s14, 0
    %p48 = por %p46, %p47
    %p49 = scmp.ne.s32.totalorder %s38, %s41
    %p50 = scmp.eq.s32.totalorder %s19, 1
    %p51 = por %p49, %p50
    %p52 = scmp.ne.s32.totalorder %s41, %s42
    %p53 = scmp.eq.s32.totalorder %s19, 0
    %p54 = por %p52, %p53
    %p55 = scmp.ne.s32.totalorder %s41, %s42
    %p56 = scmp.eq.s32.totalorder %s20, 1
    %p57 = por %p55, %p56
    %p59 = scmp.ne.s32.totalorder %s42, %s58
    %p60 = scmp.eq.s32.totalorder %s20, 0
    %p61 = por %p59, %p60
    %s62 = ssub.s32 %s21, %s33
    %p63 = scmp.eq.s32.totalorder %s62, 0
    %s65 = sadd.s32 %s64, 1
    %s66 = scalar_select %p63, %s64, %s65
    %p69 = pneg %p63
    %p70 = scmp.eq.s32.totalorder %s14, 1
    %p71 = por %p69, %p70
    %p72 = scmp.ne.s32.totalorder %s64, %s67
    %p73 = scmp.eq.s32.totalorder %s14, 0
    %p74 = por %p72, %p73
    %p75 = scmp.ne.s32.totalorder %s64, %s67
    %p76 = scmp.eq.s32.totalorder %s19, 1
    %p77 = por %p75, %p76
    %p78 = scmp.ne.s32.totalorder %s67, %s68
    %p79 = scmp.eq.s32.totalorder %s19, 0
    %p80 = por %p78, %p79
    %p81 = scmp.ne.s32.totalorder %s67, %s68
    %p82 = scmp.eq.s32.totalorder %s20, 1
    %p83 = por %p81, %p82
    %p85 = scmp.ne.s32.totalorder %s68, %s84
    %p86 = scmp.eq.s32.totalorder %s20, 0
    %p87 = por %p85, %p86
    %s89 = sadd.s32 %s88, 1
    %p92 = scmp.eq.s32.totalorder %s14, 1
    %p93 = scmp.ne.s32.totalorder %s88, %s90
    %p94 = scmp.eq.s32.totalorder %s14, 0
    %p95 = por %p93, %p94
    %p96 = scmp.ne.s32.totalorder %s88, %s90
    %p97 = scmp.eq.s32.totalorder %s19, 1
    %p98 = por %p96, %p97
    %p99 = scmp.ne.s32.totalorder %s90, %s91
    %p100 = scmp.eq.s32.totalorder %s19, 0
    %p101 = por %p99, %p100
    %p102 = scmp.ne.s32.totalorder %s90, %s91
    %p103 = scmp.eq.s32.totalorder %s20, 1
    %p104 = por %p102, %p103
    %p106 = scmp.ne.s32.totalorder %s91, %s105
    %p107 = scmp.eq.s32.totalorder %s20, 0
    %p108 = por %p106, %p107
    %s110 = sadd.s32 %s109, 1
    %p113 = scmp.eq.s32.totalorder %s14, 1
    %p114 = scmp.ne.s32.totalorder %s109, %s111
    %p115 = scmp.eq.s32.totalorder %s14, 0
    %p116 = por %p114, %p115
    %p117 = scmp.ne.s32.totalorder %s109, %s111
    %p118 = scmp.eq.s32.totalorder %s19, 1
    %p119 = por %p117, %p118
    %p120 = scmp.ne.s32.totalorder %s111, %s112
    %p121 = scmp.eq.s32.totalorder %s19, 0
    %p122 = por %p120, %p121
    %p123 = scmp.ne.s32.totalorder %s111, %s112
    %p124 = scmp.eq.s32.totalorder %s20, 1
    %p125 = por %p123, %p124
    %p127 = scmp.ne.s32.totalorder %s112, %s126
    %p128 = scmp.eq.s32.totalorder %s20, 0
    %p129 = por %p127, %p128
    %s131 = sadd.s32 %s130, 1
    %p134 = scmp.eq.s32.totalorder %s14, 1
    %p135 = scmp.ne.s32.totalorder %s130, %s132
    %p136 = scmp.eq.s32.totalorder %s14, 0
    %p137 = por %p135, %p136
    %p138 = scmp.ne.s32.totalorder %s130, %s132
    %p139 = scmp.eq.s32.totalorder %s19, 1
    %p140 = por %p138, %p139
    %p141 = scmp.ne.s32.totalorder %s132, %s133
    %p142 = scmp.eq.s32.totalorder %s19, 0
    %p143 = por %p141, %p142
    %p144 = scmp.ne.s32.totalorder %s132, %s133
    %p145 = scmp.eq.s32.totalorder %s20, 1
    %p146 = por %p144, %p145
    %p148 = scmp.ne.s32.totalorder %s133, %s147
    %p149 = scmp.eq.s32.totalorder %s20, 0
    %p150 = por %p148, %p149
    %s152 = sadd.s32 %s151, 1
    %p155 = scmp.eq.s32.totalorder %s14, 1
    %p156 = scmp.ne.s32.totalorder %s151, %s153
    %p157 = scmp.eq.s32.totalorder %s14, 0
    %p158 = por %p156, %p157
    %p159 = scmp.ne.s32.totalorder %s151, %s153
    %p160 = scmp.eq.s32.totalorder %s19, 1
    %p161 = por %p159, %p160
    %p162 = scmp.ne.s32.totalorder %s153, %s154
    %p163 = scmp.eq.s32.totalorder %s19, 0
    %p164 = por %p162, %p163
    %p165 = scmp.ne.s32.totalorder %s153, %s154
    %p166 = scmp.eq.s32.totalorder %s20, 1
    %p167 = por %p165, %p166
    %p169 = scmp.ne.s32.totalorder %s154, %s168
    %p170 = scmp.eq.s32.totalorder %s20, 0
    %p171 = por %p169, %p170
    %s173 = sadd.s32 %s172, 1
    %p176 = scmp.eq.s32.totalorder %s14, 1
    %p177 = scmp.ne.s32.totalorder %s172, %s174
    %p178 = scmp.eq.s32.totalorder %s14, 0
    %p179 = por %p177, %p178
    %p180 = scmp.ne.s32.totalorder %s172, %s174
    %p181 = scmp.eq.s32.totalorder %s19, 1
    %p182 = por %p180, %p181
    %p183 = scmp.ne.s32.totalorder %s174, %s175
    %p184 = scmp.eq.s32.totalorder %s19, 0
    %p185 = por %p183, %p184
    %p186 = scmp.ne.s32.totalorder %s174, %s175
    %p187 = scmp.eq.s32.totalorder %s20, 1
    %p188 = por %p186, %p187
    %p190 = scmp.ne.s32.totalorder %s175, %s189
    %p191 = scmp.eq.s32.totalorder %s20, 0
    %p192 = por %p190, %p191
    %s194 = sadd.s32 %s193, 1
    %p197 = scmp.eq.s32.totalorder %s14, 1
    %p198 = scmp.ne.s32.totalorder %s193, %s195
    %p199 = scmp.eq.s32.totalorder %s14, 0
    %p200 = por %p198, %p199
    %p201 = scmp.ne.s32.totalorder %s193, %s195
    %p202 = scmp.eq.s32.totalorder %s19, 1
    %p203 = por %p201, %p202
    %p204 = scmp.ne.s32.totalorder %s195, %s196
    %p205 = scmp.eq.s32.totalorder %s19, 0
    %p206 = por %p204, %p205
    %p207 = scmp.ne.s32.totalorder %s195, %s196
    %p208 = scmp.eq.s32.totalorder %s20, 1
    %p209 = por %p207, %p208
    %p211 = scmp.ne.s32.totalorder %s196, %s210
    %p212 = scmp.eq.s32.totalorder %s20, 0
    %p213 = por %p211, %p212
    %s214 = ssub.s32 %s21, %s33
    %s215 = ssub.s32 %s22, %s29
    %s216 = sor.u32 %s214, %s215
    %p217 = scmp.eq.s32.totalorder %s216, 0
    %s219 = sadd.s32 %s218, 1
    %s220 = scalar_select %p217, %s218, %s219
    %p223 = pneg %p217
    %p224 = scmp.eq.s32.totalorder %s14, 1
    %p225 = por %p223, %p224
    %p226 = scmp.ne.s32.totalorder %s218, %s221
    %p227 = scmp.eq.s32.totalorder %s14, 0
    %p228 = por %p226, %p227
    %p229 = scmp.ne.s32.totalorder %s218, %s221
    %p230 = scmp.eq.s32.totalorder %s19, 1
    %p231 = por %p229, %p230
    %p232 = scmp.ne.s32.totalorder %s221, %s222
    %p233 = scmp.eq.s32.totalorder %s19, 0
    %p234 = por %p232, %p233
    %p235 = scmp.ne.s32.totalorder %s221, %s222
    %p236 = scmp.eq.s32.totalorder %s20, 1
    %p237 = por %p235, %p236
    %p239 = scmp.ne.s32.totalorder %s222, %s238
    %p240 = scmp.eq.s32.totalorder %s20, 0
    %p241 = por %p239, %p240
    %p242 = scmp.le.s32.totalorder 1, %s14
    %p243 = scmp.lt.s32.totalorder %s14, 3
    %p244 = pnand %p242, %p243
    %p245 = pneg %p244
    // Predicated region
    $region9: #{transformer_head_forward.7} parent=5 // pred_check
      _
    $region10: #{transformer_head_forward.7} parent=5 // pred_check_branch
      %247 = sbr.rel (%p244) target = $region12
    $region11: #{transformer_head_forward.7} parent=5 // pred_region
      %s248 = ssub.s32 %s14, 1
      // Predicated region
      $region13: #{transformer_head_forward.7} parent=11 // pred_check
        %p249 = pneg %p101
      $region14: #{transformer_head_forward.7} parent=11 // pred_check_branch
        %251 = sbr.rel (%p249) target = $region16
      $region15: #{transformer_head_forward.7} parent=11 // pred_region
        _
      $region16: #{transformer_head_forward.7} parent=11 // pred_fallthru
        _
      // Predicated region
      $region17: #{transformer_head_forward.7} parent=11 // pred_check
        %p252 = pneg %p122
      $region18: #{transformer_head_forward.7} parent=11 // pred_check_branch
        %254 = sbr.rel (%p252) target = $region20
      $region19: #{transformer_head_forward.7} parent=11 // pred_region
        _
      $region20: #{transformer_head_forward.7} parent=11 // pred_fallthru
        _
      // Predicated region
      $region21: #{transformer_head_forward.7} parent=11 // pred_check
        %p255 = pneg %p143
      $region22: #{transformer_head_forward.7} parent=11 // pred_check_branch
        %257 = sbr.rel (%p255) target = $region24
      $region23: #{transformer_head_forward.7} parent=11 // pred_region
        _
      $region24: #{transformer_head_forward.7} parent=11 // pred_fallthru
        _
      // Predicated region
      $region25: #{transformer_head_forward.7} parent=11 // pred_check
        %p258 = pneg %p164
      $region26: #{transformer_head_forward.7} parent=11 // pred_check_branch
        %260 = sbr.rel (%p258) target = $region28
      $region27: #{transformer_head_forward.7} parent=11 // pred_region
        _
      $region28: #{transformer_head_forward.7} parent=11 // pred_fallthru
        _
      // Predicated region
      $region29: #{transformer_head_forward.7} parent=11 // pred_check
        %p261 = pneg %p185
      $region30: #{transformer_head_forward.7} parent=11 // pred_check_branch
        %263 = sbr.rel (%p261) target = $region32
      $region31: #{transformer_head_forward.7} parent=11 // pred_region
        _
      $region32: #{transformer_head_forward.7} parent=11 // pred_fallthru
        _
      // Predicated region
      $region33: #{transformer_head_forward.7} parent=11 // pred_check
        %p264 = pneg %p206
      $region34: #{transformer_head_forward.7} parent=11 // pred_check_branch
        %266 = sbr.rel (%p264) target = $region36
      $region35: #{transformer_head_forward.7} parent=11 // pred_region
        _
      $region36: #{transformer_head_forward.7} parent=11 // pred_fallthru
        _
    $region12: #{transformer_head_forward.7} parent=5 // pred_fallthru
      _
    %p267 = scmp.lt.s32.totalorder %s14, 2
    // Predicated region
    $region37: #{transformer_head_forward.7} parent=5 // pred_check
      %p268 = pneg %p267
    $region38: #{transformer_head_forward.7} parent=5 // pred_check_branch
      %270 = sbr.rel (%p268) target = $region40
    $region39: #{transformer_head_forward.7} parent=5 // pred_region
      // Predicated region
      $region41: #{transformer_head_forward.7} parent=39 // pred_check
        %p271 = pneg %p48
      $region42: #{transformer_head_forward.7} parent=39 // pred_check_branch
        %273 = sbr.rel (%p271) target = $region44
      $region43: #{transformer_head_forward.7} parent=39 // pred_region
        %s274 = smul.u32 2, %s22
        %p275 = scmp.lt.s32.totalorder %s21, 1
        %s276 = scalar_select %p275, %s21, 1
        %p277 = scmp.lt.s32.totalorder %s274, 1
        %s278 = scalar_select %p277, %s274, 1
        %s279 = smul.addr %s276, 2
        %s280 = sadd.s32 %s278, %s279
        %s281 = smul.addr %s280, 8
        %s282 = scalar_lea.vmem %s0, %s281
        %s283 = smul.u32 2, %s22
      $region44: #{transformer_head_forward.7} parent=39 // pred_fallthru
        _
      // Predicated region
      $region45: #{transformer_head_forward.7} parent=39 // pred_check
        %p284 = pneg %p74
      $region46: #{transformer_head_forward.7} parent=39 // pred_check_branch
        %286 = sbr.rel (%p284) target = $region48
      $region47: #{transformer_head_forward.7} parent=39 // pred_region
        %p287 = scmp.lt.s32.totalorder %s21, 1
        %s288 = scalar_select %p287, %s21, 1
        %s289 = smul.addr %s288, 8
        %s290 = scalar_lea.vmem %s1, %s289
      $region48: #{transformer_head_forward.7} parent=39 // pred_fallthru
        _
    $region40: #{transformer_head_forward.7} parent=5 // pred_fallthru
      _
    %p291 = scmp.le.s32.totalorder 1, %s14
    %p292 = scmp.lt.s32.totalorder %s14, 3
    %p293 = pnand %p291, %p292
    %p294 = pneg %p293
    // Predicated region
    $region49: #{transformer_head_forward.7} parent=5 // pred_check
      _
    $region50: #{transformer_head_forward.7} parent=5 // pred_check_branch
      %296 = sbr.rel (%p293) target = $region52
    $region51: #{transformer_head_forward.7} parent=5 // pred_region
      %s297 = ssub.s32 %s14, 1
      %s298 = smul.u32 2, %s24
      %p299 = scmp.lt.s32.totalorder %s23, 1
      %s300 = scalar_select %p299, %s23, 1
      %p301 = scmp.lt.s32.totalorder %s298, 1
      %s302 = scalar_select %p301, %s298, 1
      %s303 = smul.addr %s300, 2
      %s304 = sadd.s32 %s302, %s303
      %s305 = smul.addr %s304, 8
      %s306 = scalar_lea.vmem %s0, %s305
      %p307 = pneg %p54
      %p308 = pneg %p51
      %p309 = scmp.lt.s32.totalorder %s23, 1
      %s310 = scalar_select %p309, %s23, 1
      %s311 = smul.addr %s310, 8
      %s312 = scalar_lea.vmem %s1, %s311
      %p313 = pneg %p80
      %p314 = pneg %p77
      %p315 = pneg %p101
      %p316 = pneg %p98
      %p317 = pneg %p122
      %p318 = pneg %p119
      %p319 = pneg %p143
      %p320 = pneg %p140
      %p321 = pneg %p164
      %p322 = pneg %p161
      %p323 = pneg %p185
      %p324 = pneg %p182
      %p325 = pneg %p206
      %p326 = pneg %p203
      %p327 = pneg %p234
      %p328 = pneg %p231
      %p329 = scmp.lt.s32.totalorder %s23, 1
      %s330 = scalar_select %p329, %s23, 1
      %p331 = scmp.lt.s32.totalorder %s24, 0
      %s332 = scalar_select %p331, %s24, 0
      %s333 = sadd.s32 %s332, %s330
      %s334 = smul.addr %s333, 8
      %s335 = scalar_lea.vmem %s8, %s334
      %s336 = smul.u32 2, %s24
      %p337 = scmp.lt.s32.totalorder %s23, 1
      %s338 = scalar_select %p337, %s23, 1
      %p339 = scmp.lt.s32.totalorder %s336, 1
      %s340 = scalar_select %p339, %s336, 1
      %s341 = smul.addr %s338, 2
      %s342 = sadd.s32 %s340, %s341
      %s343 = smul.addr %s342, 8
      %s344 = scalar_lea.vmem %s0, %s343
      %s345 = smul.u32 2, %s24
      %p346 = scmp.lt.s32.totalorder %s23, 1
      %s347 = scalar_select %p346, %s23, 1
      %s348 = smul.addr %s347, 8
      %s349 = scalar_lea.vmem %s1, %s348
      %p350 = scmp.lt.s32.totalorder %s23, 1
      %s351 = scalar_select %p350, %s23, 1
      %p352 = scmp.lt.s32.totalorder %s24, 0
      %s353 = scalar_select %p352, %s24, 0
      %s354 = sadd.s32 %s353, %s351
      %s355 = smul.addr %s354, 8
      %s356 = scalar_lea.vmem %s8, %s355
      %p358 = scmp.eq.s32.totalorder %s24, 0
      // Predicated region
      $region53: #{transformer_head_forward.7} parent=51 // pred_check
        %p359 = pneg %p358
      $region54: #{transformer_head_forward.7} parent=51 // pred_check_branch
        %361 = sbr.rel (%p359) target = $region56
      $region55: #{transformer_head_forward.7} parent=51 // pred_region
        %v362 = vld [vmem:[%s349] sm:$0xff]
        %v363 = vld [vmem:[%s2] sm:$0x1]
        %v364 = vld [vmem:[%s3] sm:$0x1]
        %365 = vadd.xlane.f32.xlu0 %v362
        %v366 = vpop.xlane.xlu0 %365
        %v367 = vrcp.pop 128.0
        %v368 = vmul.f32 %v366, %v367
        %v369 = vsub.f32 %v362, %v368
        %v370 = vmul.f32 %v369, %v369
        %371 = vadd.xlane.f32.xlu0 %v370
        %v372 = vpop.xlane.xlu0 %371
        %v373 = vmul.f32 %v372, %v367
        %v374 = vadd.f32 %v373, 1e-05
        %v375 = vrsqrt.pop %v374
        %v376 = vmul.f32 %v369, %v375
        %v378 = vlaneseq
        %v379 = vshrl.u32 %v378, 7
        %v380 = vsub.s32 0, %v379
        %v381 = vrot.slane %v363, %v380
        %v383 = vmul.f32 %v376, %v381
        %v385 = vlaneseq
        %v386 = vshrl.u32 %v385, 7
        %v387 = vsub.s32 0, %v386
        %v388 = vrot.slane %v364, %v387
        %v390 = vadd.f32 %v383, %v388
        %v391 = vpack.c.bf16 %v390, %v390
        %v392 = vld [vmem:[%s5] sm:$0xf]
        %v393 = vld [vmem:[%s5 + $0x4] sm:$0xf]
        %v394 = vld [vmem:[%s5 + $0x8] sm:$0xf]
        %v395 = vld [vmem:[%s5 + $0xc] sm:$0xf]
        %v396 = vld [vmem:[%s5 + $0x10] sm:$0xf]
        %v397 = vld [vmem:[%s5 + $0x14] sm:$0xf]
        %v398 = vld [vmem:[%s5 + $0x18] sm:$0xf]
        %v399 = vld [vmem:[%s5 + $0x1c] sm:$0xf]
        %v400 = vld [vmem:[%s5 + $0x20] sm:$0xf]
        %v401 = vld [vmem:[%s5 + $0x24] sm:$0xf]
        %v402 = vld [vmem:[%s5 + $0x28] sm:$0xf]
        %v403 = vld [vmem:[%s5 + $0x2c] sm:$0xf]
        %v404 = vld [vmem:[%s5 + $0x30] sm:$0xf]
        %v405 = vld [vmem:[%s5 + $0x34] sm:$0xf]
        %v406 = vld [vmem:[%s5 + $0x38] sm:$0xf]
        %v407 = vld [vmem:[%s5 + $0x3c] sm:$0xf]
        %v424 = vunpack.c.l.b16 %v392
        %v425 = vunpack.c.l.b16 %v393
        %v426 = vunpack.c.l.b16 %v394
        %v427 = vunpack.c.l.b16 %v395
        %v428 = vunpack.c.l.b16 %v396
        %v429 = vunpack.c.l.b16 %v397
        %v430 = vunpack.c.l.b16 %v398
        %v431 = vunpack.c.l.b16 %v399
        %v432 = vunpack.c.l.b16 %v400
        %v433 = vunpack.c.l.b16 %v401
        %v434 = vunpack.c.l.b16 %v402
        %v435 = vunpack.c.l.b16 %v403
        %v436 = vunpack.c.l.b16 %v404
        %v437 = vunpack.c.l.b16 %v405
        %v438 = vunpack.c.l.b16 %v406
        %v439 = vunpack.c.l.b16 %v407
        %v440 = vpack.c.b16 %v425, %v424
        %v441 = vpack.c.b16 %v427, %v426
        %v442 = vpack.c.b16 %v429, %v428
        %v443 = vpack.c.b16 %v431, %v430
        %v444 = vpack.c.b16 %v433, %v432
        %v445 = vpack.c.b16 %v435, %v434
        %v446 = vpack.c.b16 %v437, %v436
        %v447 = vpack.c.b16 %v439, %v438
        %456 = vmatprep.subr.bf16.mxu0 0
        %457 = vmatpush1.bf16.msra.mxu0 %v447
        %458 = vmatprep.subr.bf16.mxu0 0
        %459 = vmatpush1.bf16.msra.mxu0 %v446
        %460 = vmatprep.subr.bf16.mxu0 0
        %461 = vmatpush1.bf16.msra.mxu0 %v445
        %462 = vmatprep.subr.bf16.mxu0 0
        %463 = vmatpush1.bf16.msra.mxu0 %v444
        %464 = vmatprep.subr.bf16.mxu0 0
        %465 = vmatpush1.bf16.msra.mxu0 %v443
        %466 = vmatprep.subr.bf16.mxu0 0
        %467 = vmatpush1.bf16.msra.mxu0 %v442
        %468 = vmatprep.subr.bf16.mxu0 0
        %469 = vmatpush1.bf16.msra.mxu0 %v441
        %470 = vmatprep.subr.bf16.mxu0 0
        %471 = vmatpush1.bf16.msra.mxu0 %v440
        %472 = vmatprep.subr.bf16.mxu0 0
        %473 = vmatpush2.bf16.msra.mxu0 0
        %474 = vmatprep.subr.bf16.mxu0 0
        %475 = vmatpush2.bf16.msra.mxu0 0
        %476 = vmatprep.subr.bf16.mxu0 0
        %477 = vmatpush2.bf16.msra.mxu0 0
        %478 = vmatprep.subr.bf16.mxu0 0
        %479 = vmatpush2.bf16.msra.mxu0 0
        %480 = vmatprep.subr.bf16.mxu0 0
        %481 = vmatpush2.bf16.msra.mxu0 0
        %482 = vmatprep.subr.bf16.mxu0 0
        %483 = vmatpush2.bf16.msra.mxu0 0
        %484 = vmatprep.subr.bf16.mxu0 0
        %485 = vmatpush2.bf16.msra.mxu0 0
        %486 = vmatprep.subr.bf16.mxu0 0
        %487 = vmatpush2.bf16.msra.mxu0 0
        %488 = vmatprep.mubr.bf16.mxu0 0
        %489 = vmatmul.mubr.bf16.gmra.mxu0 %v391
        %v490 = vpop.f32.mrf.mxu0
        %v491 = vadd.f32 0.0, %v490
        %v492 = vpop.f32.mrf.mxu0
        %v493 = vpop.f32.mrf.mxu0
        %v494 = vpop.f32.mrf.mxu0
        %495 = vdwg.mxu0
        %v496 = vmul.f32 %v491, %v491
        %497 = vadd.xlane.f32.xlu0 %v496
        %v498 = vpop.xlane.xlu0 %497
        %v499 = vrsqrt.pop %v498
        %v500 = vmul.f32 %v491, %v499
        %v501 = vpack.c.bf16 %v500, %v500
        %502 = vst [vmem:[#allocation2] sm:$0xf] %v501
      $region56: #{transformer_head_forward.7} parent=51 // pred_fallthru
        _
      %v503 = vld [vmem:[%s344] sm:$0xff]
      %v504 = vld [vmem:[%s344 + $0x8] sm:$0xff]
      %v505 = vld [vmem:[%s2] sm:$0x1]
      %v506 = vld [vmem:[%s3] sm:$0x1]
      %507 = vadd.xlane.f32.xlu0 %v503
      %v508 = vpop.xlane.xlu0 %507
      %509 = vadd.xlane.f32.xlu0 %v504
      %v510 = vpop.xlane.xlu0 %509
      %v511 = vrcp.pop 128.0
      %v512 = vmul.f32 %v508, %v511
      %v513 = vmul.f32 %v510, %v511
      %v514 = vsub.f32 %v503, %v512
      %v515 = vsub.f32 %v504, %v513
      %v516 = vmul.f32 %v514, %v514
      %v517 = vmul.f32 %v515, %v515
      %518 = vadd.xlane.f32.xlu0 %v516
      %v519 = vpop.xlane.xlu0 %518
      %520 = vadd.xlane.f32.xlu0 %v517
      %v521 = vpop.xlane.xlu0 %520
      %v522 = vmul.f32 %v519, %v511
      %v523 = vmul.f32 %v521, %v511
      %v524 = vadd.f32 %v522, 1e-05
      %v525 = vadd.f32 %v523, 1e-05
      %v526 = vrsqrt.pop %v524
      %v527 = vrsqrt.pop %v525
      %v528 = vmul.f32 %v514, %v526
      %v529 = vmul.f32 %v515, %v527
      %v531 = vlaneseq
      %v532 = vshrl.u32 %v531, 7
      %v533 = vsub.s32 0, %v532
      %v534 = vrot.slane %v505, %v533
      %v536 = vmul.f32 %v528, %v534
      %v537 = vmul.f32 %v529, %v534
      %v539 = vlaneseq
      %v540 = vshrl.u32 %v539, 7
      %v541 = vsub.s32 0, %v540
      %v542 = vrot.slane %v506, %v541
      %v544 = vadd.f32 %v536, %v542
      %v545 = vadd.f32 %v537, %v542
      %v546 = vpack.c.bf16 %v545, %v544
      %v547 = vld [vmem:[%s4] sm:$0xf]
      %v548 = vld [vmem:[%s4 + $0x4] sm:$0xf]
      %v549 = vld [vmem:[%s4 + $0x8] sm:$0xf]
      %v550 = vld [vmem:[%s4 + $0xc] sm:$0xf]
      %v551 = vld [vmem:[%s4 + $0x10] sm:$0xf]
      %v552 = vld [vmem:[%s4 + $0x14] sm:$0xf]
      %v553 = vld [vmem:[%s4 + $0x18] sm:$0xf]
      %v554 = vld [vmem:[%s4 + $0x1c] sm:$0xf]
      %v555 = vld [vmem:[%s4 + $0x20] sm:$0xf]
      %v556 = vld [vmem:[%s4 + $0x24] sm:$0xf]
      %v557 = vld [vmem:[%s4 + $0x28] sm:$0xf]
      %v558 = vld [vmem:[%s4 + $0x2c] sm:$0xf]
      %v559 = vld [vmem:[%s4 + $0x30] sm:$0xf]
      %v560 = vld [vmem:[%s4 + $0x34] sm:$0xf]
      %v561 = vld [vmem:[%s4 + $0x38] sm:$0xf]
      %v562 = vld [vmem:[%s4 + $0x3c] sm:$0xf]
      %v579 = vunpack.c.l.b16 %v547
      %v580 = vunpack.c.l.b16 %v548
      %v581 = vunpack.c.l.b16 %v549
      %v582 = vunpack.c.l.b16 %v550
      %v583 = vunpack.c.l.b16 %v551
      %v584 = vunpack.c.l.b16 %v552
      %v585 = vunpack.c.l.b16 %v553
      %v586 = vunpack.c.l.b16 %v554
      %v587 = vunpack.c.l.b16 %v555
      %v588 = vunpack.c.l.b16 %v556
      %v589 = vunpack.c.l.b16 %v557
      %v590 = vunpack.c.l.b16 %v558
      %v591 = vunpack.c.l.b16 %v559
      %v592 = vunpack.c.l.b16 %v560
      %v593 = vunpack.c.l.b16 %v561
      %v594 = vunpack.c.l.b16 %v562
      %v595 = vpack.c.b16 %v580, %v579
      %v596 = vpack.c.b16 %v582, %v581
      %v597 = vpack.c.b16 %v584, %v583
      %v598 = vpack.c.b16 %v586, %v585
      %v599 = vpack.c.b16 %v588, %v587
      %v600 = vpack.c.b16 %v590, %v589
      %v601 = vpack.c.b16 %v592, %v591
      %v602 = vpack.c.b16 %v594, %v593
      %611 = vmatprep.subr.bf16.mxu0 0
      %612 = vmatpush1.bf16.msra.mxu0 %v602
      %613 = vmatprep.subr.bf16.mxu0 0
      %614 = vmatpush1.bf16.msra.mxu0 %v601
      %615 = vmatprep.subr.bf16.mxu0 0
      %616 = vmatpush1.bf16.msra.mxu0 %v600
      %617 = vmatprep.subr.bf16.mxu0 0
      %618 = vmatpush1.bf16.msra.mxu0 %v599
      %619 = vmatprep.subr.bf16.mxu0 0
      %620 = vmatpush1.bf16.msra.mxu0 %v598
      %621 = vmatprep.subr.bf16.mxu0 0
      %622 = vmatpush1.bf16.msra.mxu0 %v597
      %623 = vmatprep.subr.bf16.mxu0 0
      %624 = vmatpush1.bf16.msra.mxu0 %v596
      %625 = vmatprep.subr.bf16.mxu0 0
      %626 = vmatpush1.bf16.msra.mxu0 %v595
      %627 = vmatprep.subr.bf16.mxu0 0
      %628 = vmatpush2.bf16.msra.mxu0 0
      %629 = vmatprep.subr.bf16.mxu0 0
      %630 = vmatpush2.bf16.msra.mxu0 0
      %631 = vmatprep.subr.bf16.mxu0 0
      %632 = vmatpush2.bf16.msra.mxu0 0
      %633 = vmatprep.subr.bf16.mxu0 0
      %634 = vmatpush2.bf16.msra.mxu0 0
      %635 = vmatprep.subr.bf16.mxu0 0
      %636 = vmatpush2.bf16.msra.mxu0 0
      %637 = vmatprep.subr.bf16.mxu0 0
      %638 = vmatpush2.bf16.msra.mxu0 0
      %639 = vmatprep.subr.bf16.mxu0 0
      %640 = vmatpush2.bf16.msra.mxu0 0
      %641 = vmatprep.subr.bf16.mxu0 0
      %642 = vmatpush2.bf16.msra.mxu0 0
      %643 = vmatprep.mubr.bf16.mxu0 0
      %644 = vmatmul.mubr.bf16.gmra.mxu0 %v546
      %v645 = vpop.f32.mrf.mxu0
      %v646 = vadd.f32 0.0, %v645
      %v647 = vpop.f32.mrf.mxu0
      %v648 = vpop.f32.mrf.mxu0
      %v649 = vadd.f32 0.0, %v648
      %v650 = vpop.f32.mrf.mxu0
      %651 = vdwg.mxu0
      %v652 = vmul.f32 %v646, %v646
      %v653 = vmul.f32 %v649, %v649
      %654 = vadd.xlane.f32.xlu0 %v652
      %v655 = vpop.xlane.xlu0 %654
      %656 = vadd.xlane.f32.xlu0 %v653
      %v657 = vpop.xlane.xlu0 %656
      %v658 = vrsqrt.pop %v655
      %v659 = vrsqrt.pop %v657
      %v660 = vmul.f32 %v646, %v658
      %v661 = vmul.f32 %v649, %v659
      %v662 = vld [vmem:[#allocation2] sm:$0xf]
      %v663 = vpack.c.bf16 %v661, %v660
      %664 = vmatprep.subr.bf16.mxu0 0
      %665 = vmatpush1.bf16.xpose.msra.mxu0 0
      %666 = vmatprep.subr.bf16.mxu0 0
      %667 = vmatpush1.bf16.xpose.msra.mxu0 0
      %668 = vmatprep.subr.bf16.mxu0 0
      %669 = vmatpush1.bf16.xpose.msra.mxu0 0
      %670 = vmatprep.subr.bf16.mxu0 0
      %671 = vmatpush1.bf16.xpose.msra.mxu0 0
      %672 = vmatprep.subr.bf16.mxu0 0
      %673 = vmatpush1.bf16.xpose.msra.mxu0 0
      %674 = vmatprep.subr.bf16.mxu0 0
      %675 = vmatpush1.bf16.xpose.msra.mxu0 0
      %676 = vmatprep.subr.bf16.mxu0 0
      %677 = vmatpush1.bf16.xpose.msra.mxu0 0
      %678 = vmatprep.subr.bf16.mxu0 0
      %679 = vmatpush1.bf16.xpose.msra.mxu0 %v663
      %680 = vmatprep.subr.bf16.mxu0 0
      %681 = vmatpush2.bf16.xpose.msra.mxu0 0
      %682 = vmatprep.subr.bf16.mxu0 0
      %683 = vmatpush2.bf16.xpose.msra.mxu0 0
      %684 = vmatprep.subr.bf16.mxu0 0
      %685 = vmatpush2.bf16.xpose.msra.mxu0 0
      %686 = vmatprep.subr.bf16.mxu0 0
      %687 = vmatpush2.bf16.xpose.msra.mxu0 0
      %688 = vmatprep.subr.bf16.mxu0 0
      %689 = vmatpush2.bf16.xpose.msra.mxu0 0
      %690 = vmatprep.subr.bf16.mxu0 0
      %691 = vmatpush2.bf16.xpose.msra.mxu0 0
      %692 = vmatprep.subr.bf16.mxu0 0
      %693 = vmatpush2.bf16.xpose.msra.mxu0 0
      %694 = vmatprep.subr.bf16.mxu0 0
      %695 = vmatpush2.bf16.xpose.msra.mxu0 0
      %696 = vmatprep.mubr.bf16.mxu0 0
      %697 = vmatmul.mubr.bf16.gmra.mxu0 %v662
      %v698 = vpop.f32.mrf.mxu0
      %v699 = vadd.f32 0.0, %v698
      %v700 = vpop.f32.mrf.mxu0
      %v701 = vpop.f32.mrf.mxu0
      %v702 = vpop.f32.mrf.mxu0
      %703 = vdwg.mxu0
      %vm704 = vcmask 130048
      %v705 = vsel %vm704, %v699, 0.0
      %v706 = vrot.slane %v705, 4
      %v707 = vadd.f32 %v705, %v706
      %v708 = vrot.slane %v707, 2
      %v709 = vadd.f32 %v707, %v708
      %v710 = vrot.slane %v709, 1
      %v711 = vadd.f32 %v709, %v710
      %v712 = vrcp.pop 8.0
      %v713 = vmul.f32 %v711, %v712
      %v714 = vsub.f32 %v699, %v713
      %v715 = vmul.f32 %v714, %v714
      %v716 = vsel %vm704, %v715, 0.0
      %v717 = vrot.slane %v716, 4
      %v718 = vadd.f32 %v716, %v717
      %v719 = vrot.slane %v718, 2
      %v720 = vadd.f32 %v718, %v719
      %v721 = vrot.slane %v720, 1
      %v722 = vadd.f32 %v720, %v721
      %v723 = vmul.f32 %v722, %v712
      %v724 = vadd.f32 %v723, 1e-05
      %v725 = vrsqrt.pop %v724
      %v726 = vmul.f32 %v714, %v725
      %v727 = vld [vmem:[%s6] sm:$0xff]
      %729 = vset.pattern.permute.xlu0 0
      %730 = vperm.xlu0 %729, %v727
      %v731 = vpop.permute.xlu0 %730
      %v733 = vmul.f32 %v726, %v731
      %v734 = vld [vmem:[%s7] sm:$0xff]
      %736 = vset.pattern.permute.xlu0 0
      %737 = vperm.xlu0 %736, %v734
      %v738 = vpop.permute.xlu0 %737
      %v740 = vadd.f32 %v733, %v738
      %741 = vst.msk [vmem:[%s356] sm:$0xff] %vm704, %v740
      %p742 = scmp.lt.s32.totalorder %s23, 1
      %s743 = scalar_select %p742, %s23, 1
      %p744 = scmp.lt.s32.totalorder %s24, 0
      %s745 = scalar_select %p744, %s24, 0
      %s746 = sadd.s32 %s745, %s743
      %s747 = smul.addr %s746, 8
      %s748 = scalar_lea.vmem %s8, %s747
      // Predicated region
      $region57: #{transformer_head_forward.7} parent=51 // pred_check
        %p749 = pneg %p231
      $region58: #{transformer_head_forward.7} parent=51 // pred_check_branch
        %751 = sbr.rel (%p749) target = $region60
      $region59: #{transformer_head_forward.7} parent=51 // pred_region
        _
      $region60: #{transformer_head_forward.7} parent=51 // pred_fallthru
        _
    $region52: #{transformer_head_forward.7} parent=5 // pred_fallthru
      _
    %p752 = scmp.le.s32.totalorder 2, %s14
    // Predicated region
    $region61: #{transformer_head_forward.7} parent=5 // pred_check
      %p753 = pneg %p752
    $region62: #{transformer_head_forward.7} parent=5 // pred_check_branch
      %755 = sbr.rel (%p753) target = $region64
    $region63: #{transformer_head_forward.7} parent=5 // pred_region
      %s756 = ssub.s32 %s14, 2
      // Predicated region
      $region65: #{transformer_head_forward.7} parent=63 // pred_check
        %p757 = pneg %p237
      $region66: #{transformer_head_forward.7} parent=63 // pred_check_branch
        %759 = sbr.rel (%p757) target = $region68
      $region67: #{transformer_head_forward.7} parent=63 // pred_region
        %p760 = scmp.lt.s32.totalorder %s25, 1
        %s761 = scalar_select %p760, %s25, 1
        %p762 = scmp.lt.s32.totalorder %s26, 0
        %s763 = scalar_select %p762, %s26, 0
        %s764 = sadd.s32 %s763, %s761
        %s765 = smul.addr %s764, 8
        %s766 = scalar_lea.vmem %s8, %s765
      $region68: #{transformer_head_forward.7} parent=63 // pred_fallthru
        _
    $region64: #{transformer_head_forward.7} parent=5 // pred_fallthru
      _
  $region6: #{transformer_head_forward.7} parent=0 // loop_footer
    %s18 = sadd.s32 1, %s14
  $region7: #{transformer_head_forward.7} parent=0 // loop_footer_branch
    %13 = sbr.rel target = $region3
  $region8: #{transformer_head_forward.7} parent=0 // loop_exit
    _

// kernel: transformer_head_forward.5
$region0: #{transformer_head_forward.5}
  #allocation0 [shape = 'u32[]', space=smem, size = 0x4, offset = 0x4, fixed_abs, tag = 'smem constant byte address 0x4 - core index']
  #allocation1 [shape = 'u32[144,128]{1,0:T(1,128)}', space=vmem, size = 0x12000, scoped, tag = 'internal scratch']
  #allocation2 [shape = 'bf16[4,24,32]{2,1,0:T(8,128)(2,1)}', space=vmem, size = 0x6000, scoped, tag = 'scratch operand']
  #allocation3 [shape = 'bf16[4,24,32]{2,1,0:T(8,128)(2,1)}', space=vmem, size = 0x6000, scoped, tag = 'scratch operand']
  #allocation4 [shape = 'bf16[4,24,32]{2,1,0:T(8,128)(2,1)}', space=vmem, size = 0x6000, scoped, tag = 'scratch operand']
  #allocation5 [shape = 'bf16[24,128]{1,0:T(8,128)(2,1)}', space=vmem, size = 0x1800, scoped, tag = 'scratch operand']
  %s0 = inlined_call_operand.vmem [shape: f32[2,24,128], index: 0, kind: input, shape index: {}, may-alias: {0,13}]
  %s1 = inlined_call_operand.vmem [shape: f32[1,128], index: 1, kind: input, shape index: {}]
  %s2 = inlined_call_operand.vmem [shape: f32[1,128], index: 2, kind: input, shape index: {}]
  %s3 = inlined_call_operand.vmem [shape: bf16[128,384], index: 3, kind: input, shape index: {}]
  %s4 = inlined_call_operand.vmem [shape: f32[1,384], index: 4, kind: input, shape index: {}]
  %s5 = inlined_call_operand.vmem [shape: bf16[128,128], index: 5, kind: input, shape index: {}]
  %s6 = inlined_call_operand.vmem [shape: f32[1,128], index: 6, kind: input, shape index: {}]
  %s7 = inlined_call_operand.vmem [shape: f32[1,128], index: 7, kind: input, shape index: {}]
  %s8 = inlined_call_operand.vmem [shape: f32[1,128], index: 8, kind: input, shape index: {}]
  %s9 = inlined_call_operand.vmem [shape: bf16[128,256], index: 9, kind: input, shape index: {}]
  %s10 = inlined_call_operand.vmem [shape: f32[1,256], index: 10, kind: input, shape index: {}]
  %s11 = inlined_call_operand.vmem [shape: bf16[256,128], index: 11, kind: input, shape index: {}]
  %s12 = inlined_call_operand.vmem [shape: f32[1,128], index: 12, kind: input, shape index: {}]
  %s13 = inlined_call_operand.vmem [shape: f32[2,24,128], index: 13, kind: output, shape index: {}, may-alias: {0,13}]
  %s14 = sld [smem:[#allocation0]]
  $region89: #{transformer_head_forward.5} parent=0
    _
  %s16 = ssub.s32 1, %s14
  %s17 = scalar_select 0, %s16, %s14
  loop: start=0, step=1, limit=4
  $region2: #{transformer_head_forward.5} parent=0 // loop_pre_header
    _
  $region3: #{transformer_head_forward.5} parent=0 // loop_header
    %s19 = sphi 0, %s23
    %p20 = scmp.ge.s32.totalorder %s19, 4
    %s26 = sphi 0, %s38
    %s27 = sphi 0, %s34
    %s28 = sphi 0, %s26
    %s29 = sphi 0, %s27
    %s30 = sphi 0, %s28
    %s31 = sphi 0, %s29
    %s41 = sphi 0, %s43
    %s44 = sphi 0, %s41
    %s45 = sphi 0, %s44
    %s61 = sphi 0, %s45
    %s65 = sphi 0, %s65
    %s67 = sphi 0, %s65
    %s68 = sphi 0, %s67
    %s82 = sphi 0, %s68
    %s86 = sphi 0, %s86
    %s88 = sphi 0, %s86
    %s89 = sphi 0, %s88
    %s103 = sphi 0, %s89
    %s107 = sphi 0, %s107
    %s109 = sphi 0, %s107
    %s110 = sphi 0, %s109
    %s124 = sphi 0, %s110
    %s128 = sphi 0, %s128
    %s130 = sphi 0, %s128
    %s131 = sphi 0, %s130
    %s145 = sphi 0, %s131
    %s149 = sphi 0, %s149
    %s151 = sphi 0, %s149
    %s152 = sphi 0, %s151
    %s166 = sphi 0, %s152
    %s170 = sphi 0, %s170
    %s172 = sphi 0, %s170
    %s173 = sphi 0, %s172
    %s187 = sphi 0, %s173
    %s191 = sphi 0, %s191
    %s193 = sphi 0, %s191
    %s194 = sphi 0, %s193
    %s208 = sphi 0, %s194
    %s212 = sphi 0, %s212
    %s214 = sphi 0, %s212
    %s215 = sphi 0, %s214
    %s229 = sphi 0, %s215
    %s233 = sphi 0, %s233
    %s235 = sphi 0, %s233
    %s236 = sphi 0, %s235
    %s250 = sphi 0, %s236
    %s254 = sphi 0, %s254
    %s256 = sphi 0, %s254
    %s257 = sphi 0, %s256
    %s271 = sphi 0, %s257
    %s275 = sphi 0, %s275
    %s277 = sphi 0, %s275
    %s278 = sphi 0, %s277
    %s292 = sphi 0, %s278
    %s296 = sphi 0, %s296
    %s298 = sphi 0, %s296
    %s299 = sphi 0, %s298
    %s313 = sphi 0, %s299
    %s321 = sphi 0, %s323
    %s324 = sphi 0, %s321
    %s325 = sphi 0, %s324
    %s341 = sphi 0, %s325
  $region4: #{transformer_head_forward.5} parent=0 // loop_header_branch
    %22 = sbr.rel (%p20) target = $region8
  $region5: #{transformer_head_forward.5} parent=0 // loop_body
    %s24 = ssub.s32 %s19, 1
    %s25 = ssub.s32 %s19, 2
    %s32 = sadd.s32 1, %s27
    %p33 = scmp.ge.s32.totalorder %s32, 1
    %s34 = scalar_select %p33, 0, %s32
    %s35 = sadd.s32 1, %s26
    %s36 = scalar_select %p33, %s35, %s26
    %p37 = scmp.ge.s32.totalorder %s36, 2
    %s38 = scalar_select %p37, 0, %s36
    %s39 = ssub.s32 %s26, %s38
    %p40 = scmp.eq.s32.totalorder %s39, 0
    %s42 = sadd.s32 %s41, 1
    %s43 = scalar_select %p40, %s41, %s42
    %p46 = pneg %p40
    %p47 = scmp.eq.s32.totalorder %s19, 1
    %p48 = por %p46, %p47
    %p49 = scmp.ne.s32.totalorder %s41, %s44
    %p50 = scmp.eq.s32.totalorder %s19, 0
    %p51 = por %p49, %p50
    %p52 = scmp.ne.s32.totalorder %s41, %s44
    %p53 = scmp.eq.s32.totalorder %s24, 1
    %p54 = por %p52, %p53
    %p55 = scmp.ne.s32.totalorder %s44, %s45
    %p56 = scmp.eq.s32.totalorder %s24, 0
    %p57 = por %p55, %p56
    %p58 = scmp.ne.s32.totalorder %s44, %s45
    %p59 = scmp.eq.s32.totalorder %s25, 1
    %p60 = por %p58, %p59
    %p62 = scmp.ne.s32.totalorder %s45, %s61
    %p63 = scmp.eq.s32.totalorder %s25, 0
    %p64 = por %p62, %p63
    %s66 = sadd.s32 %s65, 1
    %p69 = scmp.eq.s32.totalorder %s19, 1
    %p70 = scmp.ne.s32.totalorder %s65, %s67
    %p71 = scmp.eq.s32.totalorder %s19, 0
    %p72 = por %p70, %p71
    %p73 = scmp.ne.s32.totalorder %s65, %s67
    %p74 = scmp.eq.s32.totalorder %s24, 1
    %p75 = por %p73, %p74
    %p76 = scmp.ne.s32.totalorder %s67, %s68
    %p77 = scmp.eq.s32.totalorder %s24, 0
    %p78 = por %p76, %p77
    %p79 = scmp.ne.s32.totalorder %s67, %s68
    %p80 = scmp.eq.s32.totalorder %s25, 1
    %p81 = por %p79, %p80
    %p83 = scmp.ne.s32.totalorder %s68, %s82
    %p84 = scmp.eq.s32.totalorder %s25, 0
    %p85 = por %p83, %p84
    %s87 = sadd.s32 %s86, 1
    %p90 = scmp.eq.s32.totalorder %s19, 1
    %p91 = scmp.ne.s32.totalorder %s86, %s88
    %p92 = scmp.eq.s32.totalorder %s19, 0
    %p93 = por %p91, %p92
    %p94 = scmp.ne.s32.totalorder %s86, %s88
    %p95 = scmp.eq.s32.totalorder %s24, 1
    %p96 = por %p94, %p95
    %p97 = scmp.ne.s32.totalorder %s88, %s89
    %p98 = scmp.eq.s32.totalorder %s24, 0
    %p99 = por %p97, %p98
    %p100 = scmp.ne.s32.totalorder %s88, %s89
    %p101 = scmp.eq.s32.totalorder %s25, 1
    %p102 = por %p100, %p101
    %p104 = scmp.ne.s32.totalorder %s89, %s103
    %p105 = scmp.eq.s32.totalorder %s25, 0
    %p106 = por %p104, %p105
    %s108 = sadd.s32 %s107, 1
    %p111 = scmp.eq.s32.totalorder %s19, 1
    %p112 = scmp.ne.s32.totalorder %s107, %s109
    %p113 = scmp.eq.s32.totalorder %s19, 0
    %p114 = por %p112, %p113
    %p115 = scmp.ne.s32.totalorder %s107, %s109
    %p116 = scmp.eq.s32.totalorder %s24, 1
    %p117 = por %p115, %p116
    %p118 = scmp.ne.s32.totalorder %s109, %s110
    %p119 = scmp.eq.s32.totalorder %s24, 0
    %p120 = por %p118, %p119
    %p121 = scmp.ne.s32.totalorder %s109, %s110
    %p122 = scmp.eq.s32.totalorder %s25, 1
    %p123 = por %p121, %p122
    %p125 = scmp.ne.s32.totalorder %s110, %s124
    %p126 = scmp.eq.s32.totalorder %s25, 0
    %p127 = por %p125, %p126
    %s129 = sadd.s32 %s128, 1
    %p132 = scmp.eq.s32.totalorder %s19, 1
    %p133 = scmp.ne.s32.totalorder %s128, %s130
    %p134 = scmp.eq.s32.totalorder %s19, 0
    %p135 = por %p133, %p134
    %p136 = scmp.ne.s32.totalorder %s128, %s130
    %p137 = scmp.eq.s32.totalorder %s24, 1
    %p138 = por %p136, %p137
    %p139 = scmp.ne.s32.totalorder %s130, %s131
    %p140 = scmp.eq.s32.totalorder %s24, 0
    %p141 = por %p139, %p140
    %p142 = scmp.ne.s32.totalorder %s130, %s131
    %p143 = scmp.eq.s32.totalorder %s25, 1
    %p144 = por %p142, %p143
    %p146 = scmp.ne.s32.totalorder %s131, %s145
    %p147 = scmp.eq.s32.totalorder %s25, 0
    %p148 = por %p146, %p147
    %s150 = sadd.s32 %s149, 1
    %p153 = scmp.eq.s32.totalorder %s19, 1
    %p154 = scmp.ne.s32.totalorder %s149, %s151
    %p155 = scmp.eq.s32.totalorder %s19, 0
    %p156 = por %p154, %p155
    %p157 = scmp.ne.s32.totalorder %s149, %s151
    %p158 = scmp.eq.s32.totalorder %s24, 1
    %p159 = por %p157, %p158
    %p160 = scmp.ne.s32.totalorder %s151, %s152
    %p161 = scmp.eq.s32.totalorder %s24, 0
    %p162 = por %p160, %p161
    %p163 = scmp.ne.s32.totalorder %s151, %s152
    %p164 = scmp.eq.s32.totalorder %s25, 1
    %p165 = por %p163, %p164
    %p167 = scmp.ne.s32.totalorder %s152, %s166
    %p168 = scmp.eq.s32.totalorder %s25, 0
    %p169 = por %p167, %p168
    %s171 = sadd.s32 %s170, 1
    %p174 = scmp.eq.s32.totalorder %s19, 1
    %p175 = scmp.ne.s32.totalorder %s170, %s172
    %p176 = scmp.eq.s32.totalorder %s19, 0
    %p177 = por %p175, %p176
    %p178 = scmp.ne.s32.totalorder %s170, %s172
    %p179 = scmp.eq.s32.totalorder %s24, 1
    %p180 = por %p178, %p179
    %p181 = scmp.ne.s32.totalorder %s172, %s173
    %p182 = scmp.eq.s32.totalorder %s24, 0
    %p183 = por %p181, %p182
    %p184 = scmp.ne.s32.totalorder %s172, %s173
    %p185 = scmp.eq.s32.totalorder %s25, 1
    %p186 = por %p184, %p185
    %p188 = scmp.ne.s32.totalorder %s173, %s187
    %p189 = scmp.eq.s32.totalorder %s25, 0
    %p190 = por %p188, %p189
    %s192 = sadd.s32 %s191, 1
    %p195 = scmp.eq.s32.totalorder %s19, 1
    %p196 = scmp.ne.s32.totalorder %s191, %s193
    %p197 = scmp.eq.s32.totalorder %s19, 0
    %p198 = por %p196, %p197
    %p199 = scmp.ne.s32.totalorder %s191, %s193
    %p200 = scmp.eq.s32.totalorder %s24, 1
    %p201 = por %p199, %p200
    %p202 = scmp.ne.s32.totalorder %s193, %s194
    %p203 = scmp.eq.s32.totalorder %s24, 0
    %p204 = por %p202, %p203
    %p205 = scmp.ne.s32.totalorder %s193, %s194
    %p206 = scmp.eq.s32.totalorder %s25, 1
    %p207 = por %p205, %p206
    %p209 = scmp.ne.s32.totalorder %s194, %s208
    %p210 = scmp.eq.s32.totalorder %s25, 0
    %p211 = por %p209, %p210
    %s213 = sadd.s32 %s212, 1
    %p216 = scmp.eq.s32.totalorder %s19, 1
    %p217 = scmp.ne.s32.totalorder %s212, %s214
    %p218 = scmp.eq.s32.totalorder %s19, 0
    %p219 = por %p217, %p218
    %p220 = scmp.ne.s32.totalorder %s212, %s214
    %p221 = scmp.eq.s32.totalorder %s24, 1
    %p222 = por %p220, %p221
    %p223 = scmp.ne.s32.totalorder %s214, %s215
    %p224 = scmp.eq.s32.totalorder %s24, 0
    %p225 = por %p223, %p224
    %p226 = scmp.ne.s32.totalorder %s214, %s215
    %p227 = scmp.eq.s32.totalorder %s25, 1
    %p228 = por %p226, %p227
    %p230 = scmp.ne.s32.totalorder %s215, %s229
    %p231 = scmp.eq.s32.totalorder %s25, 0
    %p232 = por %p230, %p231
    %s234 = sadd.s32 %s233, 1
    %p237 = scmp.eq.s32.totalorder %s19, 1
    %p238 = scmp.ne.s32.totalorder %s233, %s235
    %p239 = scmp.eq.s32.totalorder %s19, 0
    %p240 = por %p238, %p239
    %p241 = scmp.ne.s32.totalorder %s233, %s235
    %p242 = scmp.eq.s32.totalorder %s24, 1
    %p243 = por %p241, %p242
    %p244 = scmp.ne.s32.totalorder %s235, %s236
    %p245 = scmp.eq.s32.totalorder %s24, 0
    %p246 = por %p244, %p245
    %p247 = scmp.ne.s32.totalorder %s235, %s236
    %p248 = scmp.eq.s32.totalorder %s25, 1
    %p249 = por %p247, %p248
    %p251 = scmp.ne.s32.totalorder %s236, %s250
    %p252 = scmp.eq.s32.totalorder %s25, 0
    %p253 = por %p251, %p252
    %s255 = sadd.s32 %s254, 1
    %p258 = scmp.eq.s32.totalorder %s19, 1
    %p259 = scmp.ne.s32.totalorder %s254, %s256
    %p260 = scmp.eq.s32.totalorder %s19, 0
    %p261 = por %p259, %p260
    %p262 = scmp.ne.s32.totalorder %s254, %s256
    %p263 = scmp.eq.s32.totalorder %s24, 1
    %p264 = por %p262, %p263
    %p265 = scmp.ne.s32.totalorder %s256, %s257
    %p266 = scmp.eq.s32.totalorder %s24, 0
    %p267 = por %p265, %p266
    %p268 = scmp.ne.s32.totalorder %s256, %s257
    %p269 = scmp.eq.s32.totalorder %s25, 1
    %p270 = por %p268, %p269
    %p272 = scmp.ne.s32.totalorder %s257, %s271
    %p273 = scmp.eq.s32.totalorder %s25, 0
    %p274 = por %p272, %p273
    %s276 = sadd.s32 %s275, 1
    %p279 = scmp.eq.s32.totalorder %s19, 1
    %p280 = scmp.ne.s32.totalorder %s275, %s277
    %p281 = scmp.eq.s32.totalorder %s19, 0
    %p282 = por %p280, %p281
    %p283 = scmp.ne.s32.totalorder %s275, %s277
    %p284 = scmp.eq.s32.totalorder %s24, 1
    %p285 = por %p283, %p284
    %p286 = scmp.ne.s32.totalorder %s277, %s278
    %p287 = scmp.eq.s32.totalorder %s24, 0
    %p288 = por %p286, %p287
    %p289 = scmp.ne.s32.totalorder %s277, %s278
    %p290 = scmp.eq.s32.totalorder %s25, 1
    %p291 = por %p289, %p290
    %p293 = scmp.ne.s32.totalorder %s278, %s292
    %p294 = scmp.eq.s32.totalorder %s25, 0
    %p295 = por %p293, %p294
    %s297 = sadd.s32 %s296, 1
    %p300 = scmp.eq.s32.totalorder %s19, 1
    %p301 = scmp.ne.s32.totalorder %s296, %s298
    %p302 = scmp.eq.s32.totalorder %s19, 0
    %p303 = por %p301, %p302
    %p304 = scmp.ne.s32.totalorder %s296, %s298
    %p305 = scmp.eq.s32.totalorder %s24, 1
    %p306 = por %p304, %p305
    %p307 = scmp.ne.s32.totalorder %s298, %s299
    %p308 = scmp.eq.s32.totalorder %s24, 0
    %p309 = por %p307, %p308
    %p310 = scmp.ne.s32.totalorder %s298, %s299
    %p311 = scmp.eq.s32.totalorder %s25, 1
    %p312 = por %p310, %p311
    %p314 = scmp.ne.s32.totalorder %s299, %s313
    %p315 = scmp.eq.s32.totalorder %s25, 0
    %p316 = por %p314, %p315
    %s317 = ssub.s32 %s26, %s38
    %s318 = ssub.s32 %s27, %s34
    %s319 = sor.u32 %s317, %s318
    %p320 = scmp.eq.s32.totalorder %s319, 0
    %s322 = sadd.s32 %s321, 1
    %s323 = scalar_select %p320, %s321, %s322
    %p326 = pneg %p320
    %p327 = scmp.eq.s32.totalorder %s19, 1
    %p328 = por %p326, %p327
    %p329 = scmp.ne.s32.totalorder %s321, %s324
    %p330 = scmp.eq.s32.totalorder %s19, 0
    %p331 = por %p329, %p330
    %p332 = scmp.ne.s32.totalorder %s321, %s324
    %p333 = scmp.eq.s32.totalorder %s24, 1
    %p334 = por %p332, %p333
    %p335 = scmp.ne.s32.totalorder %s324, %s325
    %p336 = scmp.eq.s32.totalorder %s24, 0
    %p337 = por %p335, %p336
    %p338 = scmp.ne.s32.totalorder %s324, %s325
    %p339 = scmp.eq.s32.totalorder %s25, 1
    %p340 = por %p338, %p339
    %p342 = scmp.ne.s32.totalorder %s325, %s341
    %p343 = scmp.eq.s32.totalorder %s25, 0
    %p344 = por %p342, %p343
    %p345 = scmp.le.s32.totalorder 1, %s19
    %p346 = scmp.lt.s32.totalorder %s19, 3
    %p347 = pnand %p345, %p346
    %p348 = pneg %p347
    // Predicated region
    $region9: #{transformer_head_forward.5} parent=5 // pred_check
      _
    $region10: #{transformer_head_forward.5} parent=5 // pred_check_branch
      %350 = sbr.rel (%p347) target = $region12
    $region11: #{transformer_head_forward.5} parent=5 // pred_region
      %s351 = ssub.s32 %s19, 1
      // Predicated region
      $region13: #{transformer_head_forward.5} parent=11 // pred_check
        %p352 = pneg %p78
      $region14: #{transformer_head_forward.5} parent=11 // pred_check_branch
        %354 = sbr.rel (%p352) target = $region16
      $region15: #{transformer_head_forward.5} parent=11 // pred_region
        _
      $region16: #{transformer_head_forward.5} parent=11 // pred_fallthru
        _
      // Predicated region
      $region17: #{transformer_head_forward.5} parent=11 // pred_check
        %p355 = pneg %p99
      $region18: #{transformer_head_forward.5} parent=11 // pred_check_branch
        %357 = sbr.rel (%p355) target = $region20
      $region19: #{transformer_head_forward.5} parent=11 // pred_region
        _
      $region20: #{transformer_head_forward.5} parent=11 // pred_fallthru
        _
      // Predicated region
      $region21: #{transformer_head_forward.5} parent=11 // pred_check
        %p358 = pneg %p120
      $region22: #{transformer_head_forward.5} parent=11 // pred_check_branch
        %360 = sbr.rel (%p358) target = $region24
      $region23: #{transformer_head_forward.5} parent=11 // pred_region
        _
      $region24: #{transformer_head_forward.5} parent=11 // pred_fallthru
        _
      // Predicated region
      $region25: #{transformer_head_forward.5} parent=11 // pred_check
        %p361 = pneg %p141
      $region26: #{transformer_head_forward.5} parent=11 // pred_check_branch
        %363 = sbr.rel (%p361) target = $region28
      $region27: #{transformer_head_forward.5} parent=11 // pred_region
        _
      $region28: #{transformer_head_forward.5} parent=11 // pred_fallthru
        _
      // Predicated region
      $region29: #{transformer_head_forward.5} parent=11 // pred_check
        %p364 = pneg %p162
      $region30: #{transformer_head_forward.5} parent=11 // pred_check_branch
        %366 = sbr.rel (%p364) target = $region32
      $region31: #{transformer_head_forward.5} parent=11 // pred_region
        _
      $region32: #{transformer_head_forward.5} parent=11 // pred_fallthru
        _
      // Predicated region
      $region33: #{transformer_head_forward.5} parent=11 // pred_check
        %p367 = pneg %p183
      $region34: #{transformer_head_forward.5} parent=11 // pred_check_branch
        %369 = sbr.rel (%p367) target = $region36
      $region35: #{transformer_head_forward.5} parent=11 // pred_region
        _
      $region36: #{transformer_head_forward.5} parent=11 // pred_fallthru
        _
      // Predicated region
      $region37: #{transformer_head_forward.5} parent=11 // pred_check
        %p370 = pneg %p204
      $region38: #{transformer_head_forward.5} parent=11 // pred_check_branch
        %372 = sbr.rel (%p370) target = $region40
      $region39: #{transformer_head_forward.5} parent=11 // pred_region
        _
      $region40: #{transformer_head_forward.5} parent=11 // pred_fallthru
        _
      // Predicated region
      $region41: #{transformer_head_forward.5} parent=11 // pred_check
        %p373 = pneg %p225
      $region42: #{transformer_head_forward.5} parent=11 // pred_check_branch
        %375 = sbr.rel (%p373) target = $region44
      $region43: #{transformer_head_forward.5} parent=11 // pred_region
        _
      $region44: #{transformer_head_forward.5} parent=11 // pred_fallthru
        _
      // Predicated region
      $region45: #{transformer_head_forward.5} parent=11 // pred_check
        %p376 = pneg %p246
      $region46: #{transformer_head_forward.5} parent=11 // pred_check_branch
        %378 = sbr.rel (%p376) target = $region48
      $region47: #{transformer_head_forward.5} parent=11 // pred_region
        _
      $region48: #{transformer_head_forward.5} parent=11 // pred_fallthru
        _
      // Predicated region
      $region49: #{transformer_head_forward.5} parent=11 // pred_check
        %p379 = pneg %p267
      $region50: #{transformer_head_forward.5} parent=11 // pred_check_branch
        %381 = sbr.rel (%p379) target = $region52
      $region51: #{transformer_head_forward.5} parent=11 // pred_region
        _
      $region52: #{transformer_head_forward.5} parent=11 // pred_fallthru
        _
      // Predicated region
      $region53: #{transformer_head_forward.5} parent=11 // pred_check
        %p382 = pneg %p288
      $region54: #{transformer_head_forward.5} parent=11 // pred_check_branch
        %384 = sbr.rel (%p382) target = $region56
      $region55: #{transformer_head_forward.5} parent=11 // pred_region
        _
      $region56: #{transformer_head_forward.5} parent=11 // pred_fallthru
        _
      // Predicated region
      $region57: #{transformer_head_forward.5} parent=11 // pred_check
        %p385 = pneg %p309
      $region58: #{transformer_head_forward.5} parent=11 // pred_check_branch
        %387 = sbr.rel (%p385) target = $region60
      $region59: #{transformer_head_forward.5} parent=11 // pred_region
        _
      $region60: #{transformer_head_forward.5} parent=11 // pred_fallthru
        _
    $region12: #{transformer_head_forward.5} parent=5 // pred_fallthru
      _
    %p388 = scmp.lt.s32.totalorder %s19, 2
    // Predicated region
    $region61: #{transformer_head_forward.5} parent=5 // pred_check
      %p389 = pneg %p388
    $region62: #{transformer_head_forward.5} parent=5 // pred_check_branch
      %391 = sbr.rel (%p389) target = $region64
    $region63: #{transformer_head_forward.5} parent=5 // pred_region
      // Predicated region
      $region65: #{transformer_head_forward.5} parent=63 // pred_check
        %p392 = pneg %p51
      $region66: #{transformer_head_forward.5} parent=63 // pred_check_branch
        %394 = sbr.rel (%p392) target = $region68
      $region67: #{transformer_head_forward.5} parent=63 // pred_region
        %p395 = scmp.lt.s32.totalorder %s26, 1
        %s396 = scalar_select %p395, %s26, 1
        %s397 = smul.addr %s396, 3
        %s398 = smul.addr %s397, 8
        %s399 = scalar_lea.vmem %s0, %s398
      $region68: #{transformer_head_forward.5} parent=63 // pred_fallthru
        _
    $region64: #{transformer_head_forward.5} parent=5 // pred_fallthru
      _
    %p400 = scmp.le.s32.totalorder 1, %s19
    %p401 = scmp.lt.s32.totalorder %s19, 3
    %p402 = pnand %p400, %p401
    %p403 = pneg %p402
    // Predicated region
    $region69: #{transformer_head_forward.5} parent=5 // pred_check
      _
    $region70: #{transformer_head_forward.5} parent=5 // pred_check_branch
      %405 = sbr.rel (%p402) target = $region72
    $region71: #{transformer_head_forward.5} parent=5 // pred_region
      %s406 = ssub.s32 %s19, 1
      %p407 = scmp.lt.s32.totalorder %s28, 1
      %s408 = scalar_select %p407, %s28, 1
      %s409 = smul.addr %s408, 3
      %s410 = smul.addr %s409, 8
      %s411 = scalar_lea.vmem %s0, %s410
      %p412 = pneg %p57
      %p413 = pneg %p54
      %p414 = pneg %p78
      %p415 = pneg %p75
      %p416 = pneg %p99
      %p417 = pneg %p96
      %p418 = pneg %p120
      %p419 = pneg %p117
      %p420 = pneg %p141
      %p421 = pneg %p138
      %p422 = pneg %p162
      %p423 = pneg %p159
      %p424 = pneg %p183
      %p425 = pneg %p180
      %p426 = pneg %p204
      %p427 = pneg %p201
      %p428 = pneg %p225
      %p429 = pneg %p222
      %p430 = pneg %p246
      %p431 = pneg %p243
      %p432 = pneg %p267
      %p433 = pneg %p264
      %p434 = pneg %p288
      %p435 = pneg %p285
      %p436 = pneg %p309
      %p437 = pneg %p306
      %p438 = pneg %p337
      %p439 = pneg %p334
      %s440 = smul.u32 3, %s29
      %p441 = scmp.lt.s32.totalorder %s28, 1
      %s442 = scalar_select %p441, %s28, 1
      %p443 = scmp.lt.s32.totalorder %s440, 2
      %s444 = scalar_select %p443, %s440, 2
      %s445 = smul.addr %s442, 3
      %s446 = sadd.s32 %s444, %s445
      %s447 = smul.addr %s446, 8
      %s448 = scalar_lea.vmem %s13, %s447
      %p449 = scmp.lt.s32.totalorder %s28, 1
      %s450 = scalar_select %p449, %s28, 1
      %s451 = smul.addr %s450, 3
      %s452 = smul.addr %s451, 8
      %s453 = scalar_lea.vmem %s0, %s452
      %s454 = smul.u32 3, %s29
      %p455 = scmp.lt.s32.totalorder %s28, 1
      %s456 = scalar_select %p455, %s28, 1
      %p457 = scmp.lt.s32.totalorder %s454, 2
      %s458 = scalar_select %p457, %s454, 2
      %s459 = smul.addr %s456, 3
      %s460 = sadd.s32 %s458, %s459
      %s461 = smul.addr %s460, 8
      %s462 = scalar_lea.vmem %s13, %s461
      %s463 = smul.u32 3, %s29
      %p465 = scmp.eq.s32.totalorder %s29, 0
      // Predicated region
      $region73: #{transformer_head_forward.5} parent=71 // pred_check
        %p466 = pneg %p465
      $region74: #{transformer_head_forward.5} parent=71 // pred_check_branch
        %468 = sbr.rel (%p466) target = $region76
      $region75: #{transformer_head_forward.5} parent=71 // pred_region
        %v469 = vld [vmem:[%s453] sm:$0xff]
        %v470 = vld [vmem:[%s453 + $0x8] sm:$0xff]
        %v471 = vld [vmem:[%s453 + $0x10] sm:$0xff]
        %v472 = vld [vmem:[%s1] sm:$0x1]
        %v473 = vld [vmem:[%s2] sm:$0x1]
        %474 = vadd.xlane.f32.xlu0 %v469
        %v475 = vpop.xlane.xlu0 %474
        %476 = vadd.xlane.f32.xlu0 %v470
        %v477 = vpop.xlane.xlu0 %476
        %478 = vadd.xlane.f32.xlu0 %v471
        %v479 = vpop.xlane.xlu0 %478
        %v480 = vrcp.pop 128.0
        %v481 = vmul.f32 %v475, %v480
        %v482 = vmul.f32 %v477, %v480
        %v483 = vmul.f32 %v479, %v480
        %v484 = vsub.f32 %v469, %v481
        %v485 = vsub.f32 %v470, %v482
        %v486 = vsub.f32 %v471, %v483
        %v487 = vmul.f32 %v484, %v484
        %v488 = vmul.f32 %v485, %v485
        %v489 = vmul.f32 %v486, %v486
        %490 = vadd.xlane.f32.xlu0 %v487
        %v491 = vpop.xlane.xlu0 %490
        %492 = vadd.xlane.f32.xlu0 %v488
        %v493 = vpop.xlane.xlu0 %492
        %494 = vadd.xlane.f32.xlu0 %v489
        %v495 = vpop.xlane.xlu0 %494
        %v496 = vmul.f32 %v491, %v480
        %v497 = vmul.f32 %v493, %v480
        %v498 = vmul.f32 %v495, %v480
        %v499 = vadd.f32 %v496, 1e-05
        %v500 = vadd.f32 %v497, 1e-05
        %v501 = vadd.f32 %v498, 1e-05
        %v502 = vrsqrt.pop %v499
        %v503 = vrsqrt.pop %v500
        %v504 = vrsqrt.pop %v501
        %v505 = vmul.f32 %v484, %v502
        %v506 = vmul.f32 %v485, %v503
        %v507 = vmul.f32 %v486, %v504
        %v509 = vlaneseq
        %v510 = vshrl.u32 %v509, 7
        %v511 = vsub.s32 0, %v510
        %v512 = vrot.slane %v472, %v511
        %v514 = vmul.f32 %v505, %v512
        %v515 = vmul.f32 %v506, %v512
        %v516 = vmul.f32 %v507, %v512
        %v518 = vlaneseq
        %v519 = vshrl.u32 %v518, 7
        %v520 = vsub.s32 0, %v519
        %v521 = vrot.slane %v473, %v520
        %v523 = vadd.f32 %v514, %v521
        %v524 = vadd.f32 %v515, %v521
        %v525 = vadd.f32 %v516, %v521
        %v526 = vpack.c.bf16 %v524, %v523
        %v527 = vpack.c.bf16 %v525, %v525
        %v528 = vld [vmem:[%s3] sm:$0xff]
        %v529 = vld [vmem:[%s3 + $0x8] sm:$0xf]
        %v530 = vld [vmem:[%s3 + $0xc] sm:$0xff]
        %v531 = vld [vmem:[%s3 + $0x14] sm:$0xf]
        %v532 = vld [vmem:[%s3 + $0x18] sm:$0xff]
        %v533 = vld [vmem:[%s3 + $0x20] sm:$0xf]
        %v534 = vld [vmem:[%s3 + $0x24] sm:$0xff]
        %v535 = vld [vmem:[%s3 + $0x2c] sm:$0xf]
        %v536 = vld [vmem:[%s3 + $0x30] sm:$0xff]
        %v537 = vld [vmem:[%s3 + $0x38] sm:$0xf]
        %v538 = vld [vmem:[%s3 + $0x3c] sm:$0xff]
        %v539 = vld [vmem:[%s3 + $0x44] sm:$0xf]
        %v540 = vld [vmem:[%s3 + $0x48] sm:$0xff]
        %v541 = vld [vmem:[%s3 + $0x50] sm:$0xf]
        %v542 = vld [vmem:[%s3 + $0x54] sm:$0xff]
        %v543 = vld [vmem:[%s3 + $0x5c] sm:$0xf]
        %v544 = vld [vmem:[%s3 + $0x60] sm:$0xff]
        %v545 = vld [vmem:[%s3 + $0x68] sm:$0xf]
        %v546 = vld [vmem:[%s3 + $0x6c] sm:$0xff]
        %v547 = vld [vmem:[%s3 + $0x74] sm:$0xf]
        %v548 = vld [vmem:[%s3 + $0x78] sm:$0xff]
        %v549 = vld [vmem:[%s3 + $0x80] sm:$0xf]
        %v550 = vld [vmem:[%s3 + $0x84] sm:$0xff]
        %v551 = vld [vmem:[%s3 + $0x8c] sm:$0xf]
        %v552 = vld [vmem:[%s3 + $0x90] sm:$0xff]
        %v553 = vld [vmem:[%s3 + $0x98] sm:$0xf]
        %v554 = vld [vmem:[%s3 + $0x9c] sm:$0xff]
        %v555 = vld [vmem:[%s3 + $0xa4] sm:$0xf]
        %v556 = vld [vmem:[%s3 + $0xa8] sm:$0xff]
        %v557 = vld [vmem:[%s3 + $0xb0] sm:$0xf]
        %v558 = vld [vmem:[%s3 + $0xb4] sm:$0xff]
        %v559 = vld [vmem:[%s3 + $0xbc] sm:$0xf]
        %v560 = vld [vmem:[%s4] sm:$0x7]
        %v562 = vlaneseq
        %v563 = vshrl.u32 %v562, 7
        %v564 = vsub.s32 0, %v563
        %v565 = vrot.slane %v560, %v564
        %v566 = vlaneseq
        %v567 = vshrl.u32 %v566, 7
        %v568 = vsub.s32 1, %v567
        %v569 = vrot.slane %v560, %v568
        %v570 = vlaneseq
        %v571 = vshrl.u32 %v570, 7
        %v572 = vsub.s32 2, %v571
        %v573 = vrot.slane %v560, %v572
        %v609 = vunpack.c.l.b16 %v528
        %v610 = vunpack.c.h.b16 %v528
        %v611 = vunpack.c.l.b16 %v529
        %v612 = vunpack.c.l.b16 %v530
        %v613 = vunpack.c.h.b16 %v530
        %v614 = vunpack.c.l.b16 %v531
        %v615 = vunpack.c.l.b16 %v532
        %v616 = vunpack.c.h.b16 %v532
        %v617 = vunpack.c.l.b16 %v533
        %v618 = vunpack.c.l.b16 %v534
        %v619 = vunpack.c.h.b16 %v534
        %v620 = vunpack.c.l.b16 %v535
        %v621 = vunpack.c.l.b16 %v536
        %v622 = vunpack.c.h.b16 %v536
        %v623 = vunpack.c.l.b16 %v537
        %v624 = vunpack.c.l.b16 %v538
        %v625 = vunpack.c.h.b16 %v538
        %v626 = vunpack.c.l.b16 %v539
        %v627 = vunpack.c.l.b16 %v540
        %v628 = vunpack.c.h.b16 %v540
        %v629 = vunpack.c.l.b16 %v541
        %v630 = vunpack.c.l.b16 %v542
        %v631 = vunpack.c.h.b16 %v542
        %v632 = vunpack.c.l.b16 %v543
        %v633 = vunpack.c.l.b16 %v544
        %v634 = vunpack.c.h.b16 %v544
        %v635 = vunpack.c.l.b16 %v545
        %v636 = vunpack.c.l.b16 %v546
        %v637 = vunpack.c.h.b16 %v546
        %v638 = vunpack.c.l.b16 %v547
        %v639 = vunpack.c.l.b16 %v548
        %v640 = vunpack.c.h.b16 %v548
        %v641 = vunpack.c.l.b16 %v549
        %v642 = vunpack.c.l.b16 %v550
        %v643 = vunpack.c.h.b16 %v550
        %v644 = vunpack.c.l.b16 %v551
        %v645 = vunpack.c.l.b16 %v552
        %v646 = vunpack.c.h.b16 %v552
        %v647 = vunpack.c.l.b16 %v553
        %v648 = vunpack.c.l.b16 %v554
        %v649 = vunpack.c.h.b16 %v554
        %v650 = vunpack.c.l.b16 %v555
        %v651 = vunpack.c.l.b16 %v556
        %v652 = vunpack.c.h.b16 %v556
        %v653 = vunpack.c.l.b16 %v557
        %v654 = vunpack.c.l.b16 %v558
        %v655 = vunpack.c.h.b16 %v558
        %v656 = vunpack.c.l.b16 %v559
        %v657 = vpack.c.b16 %v612, %v609
        %v658 = vpack.c.b16 %v613, %v610
        %v659 = vpack.c.b16 %v614, %v611
        %v660 = vpack.c.b16 %v618, %v615
        %v661 = vpack.c.b16 %v619, %v616
        %v662 = vpack.c.b16 %v620, %v617
        %v663 = vpack.c.b16 %v624, %v621
        %v664 = vpack.c.b16 %v625, %v622
        %v665 = vpack.c.b16 %v626, %v623
        %v666 = vpack.c.b16 %v630, %v627
        %v667 = vpack.c.b16 %v631, %v628
        %v668 = vpack.c.b16 %v632, %v629
        %v669 = vpack.c.b16 %v636, %v633
        %v670 = vpack.c.b16 %v637, %v634
        %v671 = vpack.c.b16 %v638, %v635
        %v672 = vpack.c.b16 %v642, %v639
        %v673 = vpack.c.b16 %v643, %v640
        %v674 = vpack.c.b16 %v644, %v641
        %v675 = vpack.c.b16 %v648, %v645
        %v676 = vpack.c.b16 %v649, %v646
        %v677 = vpack.c.b16 %v650, %v647
        %v678 = vpack.c.b16 %v654, %v651
        %v679 = vpack.c.b16 %v655, %v652
        %v680 = vpack.c.b16 %v656, %v653
        %705 = vmatprep.subr.bf16.mxu0 %v679
        %706 = vmatpush1.bf16.msra.mxu0 %v678
        %707 = vmatprep.subr.bf16.mxu0 %v676
        %708 = vmatpush1.bf16.msra.mxu0 %v675
        %709 = vmatprep.subr.bf16.mxu0 %v673
        %710 = vmatpush1.bf16.msra.mxu0 %v672
        %711 = vmatprep.subr.bf16.mxu0 %v670
        %712 = vmatpush1.bf16.msra.mxu0 %v669
        %713 = vmatprep.subr.bf16.mxu0 %v667
        %714 = vmatpush1.bf16.msra.mxu0 %v666
        %715 = vmatprep.subr.bf16.mxu0 %v664
        %716 = vmatpush1.bf16.msra.mxu0 %v663
        %717 = vmatprep.subr.bf16.mxu0 %v661
        %718 = vmatpush1.bf16.msra.mxu0 %v660
        %719 = vmatprep.subr.bf16.mxu0 %v658
        %720 = vmatpush1.bf16.msra.mxu0 %v657
        %721 = vmatprep.subr.bf16.mxu0 0
        %722 = vmatpush2.bf16.msra.mxu0 0
        %723 = vmatprep.subr.bf16.mxu0 0
        %724 = vmatpush2.bf16.msra.mxu0 0
        %725 = vmatprep.subr.bf16.mxu0 0
        %726 = vmatpush2.bf16.msra.mxu0 0
        %727 = vmatprep.subr.bf16.mxu0 0
        %728 = vmatpush2.bf16.msra.mxu0 0
        %729 = vmatprep.subr.bf16.mxu0 0
        %730 = vmatpush2.bf16.msra.mxu0 0
        %731 = vmatprep.subr.bf16.mxu0 0
        %732 = vmatpush2.bf16.msra.mxu0 0
        %733 = vmatprep.subr.bf16.mxu0 0
        %734 = vmatpush2.bf16.msra.mxu0 0
        %735 = vmatprep.subr.bf16.mxu0 0
        %736 = vmatpush2.bf16.msra.mxu0 0
        %737 = vmatprep.mubr.bf16.mxu0 0
        %738 = vmatmul.mubr.bf16.gmra.mxu0 %v526
        %v739 = vpop.f32.mrf.mxu0
        %v740 = vadd.f32 %v565, %v739
        %v741 = vpop.f32.mrf.mxu0
        %v742 = vadd.f32 %v569, %v741
        %v743 = vpop.f32.mrf.mxu0
        %v744 = vadd.f32 %v565, %v743
        %v745 = vpop.f32.mrf.mxu0
        %v746 = vadd.f32 %v569, %v745
        %747 = vmatprep.mubr.bf16.mxu0 0
        %748 = vmatmul.mubr.bf16.gmra.mxu0 %v527
        %v749 = vpop.f32.mrf.mxu0
        %v750 = vadd.f32 %v565, %v749
        %v751 = vpop.f32.mrf.mxu0
        %v752 = vadd.f32 %v569, %v751
        %v753 = vpop.f32.mrf.mxu0
        %v754 = vpop.f32.mrf.mxu0
        %755 = vdwg.mxu0
        %756 = vmatprep.subr.bf16.mxu0 0
        %757 = vmatpush1.bf16.msra.mxu0 %v680
        %758 = vmatprep.subr.bf16.mxu0 0
        %759 = vmatpush1.bf16.msra.mxu0 %v677
        %760 = vmatprep.subr.bf16.mxu0 0
        %761 = vmatpush1.bf16.msra.mxu0 %v674
        %762 = vmatprep.subr.bf16.mxu0 0
        %763 = vmatpush1.bf16.msra.mxu0 %v671
        %764 = vmatprep.subr.bf16.mxu0 0
        %765 = vmatpush1.bf16.msra.mxu0 %v668
        %766 = vmatprep.subr.bf16.mxu0 0
        %767 = vmatpush1.bf16.msra.mxu0 %v665
        %768 = vmatprep.subr.bf16.mxu0 0
        %769 = vmatpush1.bf16.msra.mxu0 %v662
        %770 = vmatprep.subr.bf16.mxu0 0
        %771 = vmatpush1.bf16.msra.mxu0 %v659
        %772 = vmatprep.subr.bf16.mxu0 0
        %773 = vmatpush2.bf16.msra.mxu0 0
        %774 = vmatprep.subr.bf16.mxu0 0
        %775 = vmatpush2.bf16.msra.mxu0 0
        %776 = vmatprep.subr.bf16.mxu0 0
        %777 = vmatpush2.bf16.msra.mxu0 0
        %778 = vmatprep.subr.bf16.mxu0 0
        %779 = vmatpush2.bf16.msra.mxu0 0
        %780 = vmatprep.subr.bf16.mxu0 0
        %781 = vmatpush2.bf16.msra.mxu0 0
        %782 = vmatprep.subr.bf16.mxu0 0
        %783 = vmatpush2.bf16.msra.mxu0 0
        %784 = vmatprep.subr.bf16.mxu0 0
        %785 = vmatpush2.bf16.msra.mxu0 0
        %786 = vmatprep.subr.bf16.mxu0 0
        %787 = vmatpush2.bf16.msra.mxu0 0
        %788 = vmatprep.mubr.bf16.mxu0 0
        %789 = vmatmul.mubr.bf16.gmra.mxu0 %v526
        %v790 = vpop.f32.mrf.mxu0
        %v791 = vadd.f32 %v573, %v790
        %v792 = vpop.f32.mrf.mxu0
        %v793 = vpop.f32.mrf.mxu0
        %v794 = vadd.f32 %v573, %v793
        %v795 = vpop.f32.mrf.mxu0
        %796 = vmatprep.mubr.bf16.mxu0 0
        %797 = vmatmul.mubr.bf16.gmra.mxu0 %v527
        %v798 = vpop.f32.mrf.mxu0
        %v799 = vadd.f32 %v573, %v798
        %v800 = vpop.f32.mrf.mxu0
        %v801 = vpop.f32.mrf.mxu0
        %v802 = vpop.f32.mrf.mxu0
        %803 = vdwg.mxu0
        %v804 = vmul.f32 %v740, 0.17677669
        %v805 = vmul.f32 %v744, 0.17677669
        %v806 = vmul.f32 %v750, 0.17677669
        %v807 = vpack.c.bf16 %v805, %v804
        %v808 = vpack.c.bf16 %v806, %v806
        %v811 = vunpack.c.l.b16 %v807
        %v812 = vunpack.c.h.b16 %v807
        %v813 = vunpack.c.l.b16 %v808
        %v814 = vpack.c.b16 %v811, %v811
        %v815 = vpack.c.b16 %v812, %v812
        %v816 = vpack.c.b16 %v813, %v813
        %vm820 = vcmask 257024
        %821 = vst.msk [vmem:[#allocation2] sm:$0xf] %vm820, %v814
        %822 = vst.msk [vmem:[#allocation2 + $0x4] sm:$0xf] %vm820, %v815
        %823 = vst.msk [vmem:[#allocation2 + $0x8] sm:$0xf] %vm820, %v816
        %v824 = vpack.c.bf16 %v746, %v742
        %v825 = vpack.c.bf16 %v752, %v752
        %v828 = vunpack.c.l.b16 %v824
        %v829 = vunpack.c.h.b16 %v824
        %v830 = vunpack.c.l.b16 %v825
        %v831 = vpack.c.b16 %v828, %v828
        %v832 = vpack.c.b16 %v829, %v829
        %v833 = vpack.c.b16 %v830, %v830
        %837 = vst.msk [vmem:[#allocation3] sm:$0xf] %vm820, %v831
        %838 = vst.msk [vmem:[#allocation3 + $0x4] sm:$0xf] %vm820, %v832
        %839 = vst.msk [vmem:[#allocation3 + $0x8] sm:$0xf] %vm820, %v833
        %v840 = vpack.c.bf16 %v794, %v791
        %v841 = vpack.c.bf16 %v799, %v799
        %v844 = vunpack.c.l.b16 %v840
        %v845 = vunpack.c.h.b16 %v840
        %v846 = vunpack.c.l.b16 %v841
        %v847 = vpack.c.b16 %v844, %v844
        %v848 = vpack.c.b16 %v845, %v845
        %v849 = vpack.c.b16 %v846, %v846
        %853 = vst.msk [vmem:[#allocation4] sm:$0xf] %vm820, %v847
        %854 = vst.msk [vmem:[#allocation4 + $0x4] sm:$0xf] %vm820, %v848
        %855 = vst.msk [vmem:[#allocation4 + $0x8] sm:$0xf] %vm820, %v849
        %856 = vrot.lane.b32.xlu0 %v814, 96
        %v857 = vpop.permute.xlu0 %856
        %858 = vrot.lane.b32.xlu0 %v815, 96
        %v859 = vpop.permute.xlu0 %858
        %860 = vrot.lane.b32.xlu0 %v816, 96
        %v861 = vpop.permute.xlu0 %860
        %s865 = scalar_lea.vmem [#allocation2], 12
        %866 = vst.msk [vmem:[%s865] sm:$0xf] %vm820, %v857
        %867 = vst.msk [vmem:[%s865 + $0x4] sm:$0xf] %vm820, %v859
        %868 = vst.msk [vmem:[%s865 + $0x8] sm:$0xf] %vm820, %v861
        %869 = vrot.lane.b32.xlu0 %v831, 96
        %v870 = vpop.permute.xlu0 %869
        %871 = vrot.lane.b32.xlu0 %v832, 96
        %v872 = vpop.permute.xlu0 %871
        %873 = vrot.lane.b32.xlu0 %v833, 96
        %v874 = vpop.permute.xlu0 %873
        %s878 = scalar_lea.vmem [#allocation3], 12
        %879 = vst.msk [vmem:[%s878] sm:$0xf] %vm820, %v870
        %880 = vst.msk [vmem:[%s878 + $0x4] sm:$0xf] %vm820, %v872
        %881 = vst.msk [vmem:[%s878 + $0x8] sm:$0xf] %vm820, %v874
        %882 = vrot.lane.b32.xlu0 %v847, 96
        %v883 = vpop.permute.xlu0 %882
        %884 = vrot.lane.b32.xlu0 %v848, 96
        %v885 = vpop.permute.xlu0 %884
        %886 = vrot.lane.b32.xlu0 %v849, 96
        %v887 = vpop.permute.xlu0 %886
        %s891 = scalar_lea.vmem [#allocation4], 12
        %892 = vst.msk [vmem:[%s891] sm:$0xf] %vm820, %v883
        %893 = vst.msk [vmem:[%s891 + $0x4] sm:$0xf] %vm820, %v885
        %894 = vst.msk [vmem:[%s891 + $0x8] sm:$0xf] %vm820, %v887
        %895 = vrot.lane.b32.xlu0 %v814, 64
        %v896 = vpop.permute.xlu0 %895
        %897 = vrot.lane.b32.xlu0 %v815, 64
        %v898 = vpop.permute.xlu0 %897
        %899 = vrot.lane.b32.xlu0 %v816, 64
        %v900 = vpop.permute.xlu0 %899
        %s904 = scalar_lea.vmem [#allocation2], 24
        %905 = vst.msk [vmem:[%s904] sm:$0xf] %vm820, %v896
        %906 = vst.msk [vmem:[%s904 + $0x4] sm:$0xf] %vm820, %v898
        %907 = vst.msk [vmem:[%s904 + $0x8] sm:$0xf] %vm820, %v900
        %908 = vrot.lane.b32.xlu0 %v831, 64
        %v909 = vpop.permute.xlu0 %908
        %910 = vrot.lane.b32.xlu0 %v832, 64
        %v911 = vpop.permute.xlu0 %910
        %912 = vrot.lane.b32.xlu0 %v833, 64
        %v913 = vpop.permute.xlu0 %912
        %s917 = scalar_lea.vmem [#allocation3], 24
        %918 = vst.msk [vmem:[%s917] sm:$0xf] %vm820, %v909
        %919 = vst.msk [vmem:[%s917 + $0x4] sm:$0xf] %vm820, %v911
        %920 = vst.msk [vmem:[%s917 + $0x8] sm:$0xf] %vm820, %v913
        %921 = vrot.lane.b32.xlu0 %v847, 64
        %v922 = vpop.permute.xlu0 %921
        %923 = vrot.lane.b32.xlu0 %v848, 64
        %v924 = vpop.permute.xlu0 %923
        %925 = vrot.lane.b32.xlu0 %v849, 64
        %v926 = vpop.permute.xlu0 %925
        %s930 = scalar_lea.vmem [#allocation4], 24
        %931 = vst.msk [vmem:[%s930] sm:$0xf] %vm820, %v922
        %932 = vst.msk [vmem:[%s930 + $0x4] sm:$0xf] %vm820, %v924
        %933 = vst.msk [vmem:[%s930 + $0x8] sm:$0xf] %vm820, %v926
        %934 = vrot.lane.b32.xlu0 %v814, 32
        %v935 = vpop.permute.xlu0 %934
        %936 = vrot.lane.b32.xlu0 %v815, 32
        %v937 = vpop.permute.xlu0 %936
        %938 = vrot.lane.b32.xlu0 %v816, 32
        %v939 = vpop.permute.xlu0 %938
        %s943 = scalar_lea.vmem [#allocation2], 36
        %944 = vst.msk [vmem:[%s943] sm:$0xf] %vm820, %v935
        %945 = vst.msk [vmem:[%s943 + $0x4] sm:$0xf] %vm820, %v937
        %946 = vst.msk [vmem:[%s943 + $0x8] sm:$0xf] %vm820, %v939
        %947 = vrot.lane.b32.xlu0 %v831, 32
        %v948 = vpop.permute.xlu0 %947
        %949 = vrot.lane.b32.xlu0 %v832, 32
        %v950 = vpop.permute.xlu0 %949
        %951 = vrot.lane.b32.xlu0 %v833, 32
        %v952 = vpop.permute.xlu0 %951
        %s956 = scalar_lea.vmem [#allocation3], 36
        %957 = vst.msk [vmem:[%s956] sm:$0xf] %vm820, %v948
        %958 = vst.msk [vmem:[%s956 + $0x4] sm:$0xf] %vm820, %v950
        %959 = vst.msk [vmem:[%s956 + $0x8] sm:$0xf] %vm820, %v952
        %960 = vrot.lane.b32.xlu0 %v847, 32
        %v961 = vpop.permute.xlu0 %960
        %962 = vrot.lane.b32.xlu0 %v848, 32
        %v963 = vpop.permute.xlu0 %962
        %964 = vrot.lane.b32.xlu0 %v849, 32
        %v965 = vpop.permute.xlu0 %964
        %s969 = scalar_lea.vmem [#allocation4], 36
        %970 = vst.msk [vmem:[%s969] sm:$0xf] %vm820, %v961
        %971 = vst.msk [vmem:[%s969 + $0x4] sm:$0xf] %vm820, %v963
        %972 = vst.msk [vmem:[%s969 + $0x8] sm:$0xf] %vm820, %v965
      $region76: #{transformer_head_forward.5} parent=71 // pred_fallthru
        _
      %s973 = smul.u32 %s29, 24
      %s974 = scalar_lea.vmem %s453, %s973
      %v975 = vld [vmem:[%s974] sm:$0xff]
      %v976 = vld [vmem:[%s974 + $0x8] sm:$0xff]
      %v977 = vld [vmem:[%s974 + $0x10] sm:$0xff]
      %s978 = sshra.s32 %s973, 3
      %s979 = sand.u32 %s973, 7
      %s980 = smul.addr %s978, 4
      %s981 = scalar_lea.vmem [#allocation2], %s980
      %v982 = vld [vmem:[%s981] sm:$0xf]
      %v983 = vld [vmem:[%s981 + $0x4] sm:$0xf]
      %v984 = vld [vmem:[%s981 + $0x8] sm:$0xf]
      %v985 = vld [vmem:[%s981 + $0xc] sm:$0xf]
      %v986 = vld [vmem:[%s981 + $0x10] sm:$0xf]
      %v987 = vld [vmem:[%s981 + $0x14] sm:$0xf]
      %v988 = vld [vmem:[%s981 + $0x18] sm:$0xf]
      %v989 = vld [vmem:[%s981 + $0x1c] sm:$0xf]
      %v990 = vld [vmem:[%s981 + $0x20] sm:$0xf]
      %v991 = vld [vmem:[%s981 + $0x24] sm:$0xf]
      %v992 = vld [vmem:[%s981 + $0x28] sm:$0xf]
      %v993 = vld [vmem:[%s981 + $0x2c] sm:$0xf]
      %v994 = vld [vmem:[#allocation3] sm:$0xf]
      %v995 = vld [vmem:[#allocation3 + $0x4] sm:$0xf]
      %v996 = vld [vmem:[#allocation3 + $0x8] sm:$0xf]
      %v997 = vld [vmem:[#allocation3 + $0xc] sm:$0xf]
      %v998 = vld [vmem:[#allocation3 + $0x10] sm:$0xf]
      %v999 = vld [vmem:[#allocation3 + $0x14] sm:$0xf]
      %v1000 = vld [vmem:[#allocation3 + $0x18] sm:$0xf]
      %v1001 = vld [vmem:[#allocation3 + $0x1c] sm:$0xf]
      %v1002 = vld [vmem:[#allocation3 + $0x20] sm:$0xf]
      %v1003 = vld [vmem:[#allocation3 + $0x24] sm:$0xf]
      %v1004 = vld [vmem:[#allocation3 + $0x28] sm:$0xf]
      %v1005 = vld [vmem:[#allocation3 + $0x2c] sm:$0xf]
      %v1009 = vunpack.c.l.b16 %v982
      %v1010 = vunpack.c.l.b16 %v983
      %v1011 = vunpack.c.l.b16 %v984
      %v1012 = vpack.c.b16 %v1010, %v1009
      %v1013 = vpack.c.b16 %v1011, %v1011
      %v1017 = vunpack.c.l.b16 %v994
      %v1018 = vunpack.c.l.b16 %v995
      %v1019 = vunpack.c.l.b16 %v996
      %v1020 = vpack.c.b16 %v1018, %v1017
      %v1021 = vpack.c.b16 %v1019, %v1019
      %vm1022 = vcmask 261120
      %v1024 = vsel %vm1022, %v1012, 0
      %v1027 = vsel %vm1022, %v1013, 0
      %v1030 = vsel %vm1022, %v1020, 0
      %v1033 = vsel %vm1022, %v1021, 0
      %1035 = vmatprep.subr.bf16.mxu0 0
      %1036 = vmatpush1.bf16.xpose.msra.mxu0 0
      %1037 = vmatprep.subr.bf16.mxu0 0
      %1038 = vmatpush1.bf16.xpose.msra.mxu0 0
      %1039 = vmatprep.subr.bf16.mxu0 0
      %1040 = vmatpush1.bf16.xpose.msra.mxu0 0
      %1041 = vmatprep.subr.bf16.mxu0 0
      %1042 = vmatpush1.bf16.xpose.msra.mxu0 0
      %1043 = vmatprep.subr.bf16.mxu0 0
      %1044 = vmatpush1.bf16.xpose.msra.mxu0 0
      %1045 = vmatprep.subr.bf16.mxu0 0
      %1046 = vmatpush1.bf16.xpose.msra.mxu0 0
      %1047 = vmatprep.subr.bf16.mxu0 0
      %1048 = vmatpush1.bf16.xpose.msra.mxu0 %v1033
      %1049 = vmatprep.subr.bf16.mxu0 0
      %1050 = vmatpush1.bf16.xpose.msra.mxu0 %v1030
      %1051 = vmatprep.subr.bf16.mxu0 0
      %1052 = vmatpush2.bf16.xpose.msra.mxu0 0
      %1053 = vmatprep.subr.bf16.mxu0 0
      %1054 = vmatpush2.bf16.xpose.msra.mxu0 0
      %1055 = vmatprep.subr.bf16.mxu0 0
      %1056 = vmatpush2.bf16.xpose.msra.mxu0 0
      %1057 = vmatprep.subr.bf16.mxu0 0
      %1058 = vmatpush2.bf16.xpose.msra.mxu0 0
      %1059 = vmatprep.subr.bf16.mxu0 0
      %1060 = vmatpush2.bf16.xpose.msra.mxu0 0
      %1061 = vmatprep.subr.bf16.mxu0 0
      %1062 = vmatpush2.bf16.xpose.msra.mxu0 0
      %1063 = vmatprep.subr.bf16.mxu0 0
      %1064 = vmatpush2.bf16.xpose.msra.mxu0 0
      %1065 = vmatprep.subr.bf16.mxu0 0
      %1066 = vmatpush2.bf16.xpose.msra.mxu0 0
      %1067 = vmatprep.mubr.bf16.mxu0 0
      %1068 = vmatmul.mubr.bf16.gmra.mxu0 %v1024
      %v1069 = vpop.f32.mrf.mxu0
      %v1070 = vadd.f32 0.0, %v1069
      %v1071 = vpop.f32.mrf.mxu0
      %v1072 = vpop.f32.mrf.mxu0
      %v1073 = vadd.f32 0.0, %v1072
      %v1074 = vpop.f32.mrf.mxu0
      %1075 = vmatprep.mubr.bf16.mxu0 0
      %1076 = vmatmul.mubr.bf16.gmra.mxu0 %v1027
      %v1077 = vpop.f32.mrf.mxu0
      %v1078 = vadd.f32 0.0, %v1077
      %v1079 = vpop.f32.mrf.mxu0
      %v1080 = vpop.f32.mrf.mxu0
      %v1081 = vpop.f32.mrf.mxu0
      %1082 = vdwg.mxu0
      %v1086 = vunpack.c.l.b16 %v985
      %v1087 = vunpack.c.l.b16 %v986
      %v1088 = vunpack.c.l.b16 %v987
      %v1089 = vpack.c.b16 %v1087, %v1086
      %v1090 = vpack.c.b16 %v1088, %v1088
      %v1094 = vunpack.c.l.b16 %v997
      %v1095 = vunpack.c.l.b16 %v998
      %v1096 = vunpack.c.l.b16 %v999
      %v1097 = vpack.c.b16 %v1095, %v1094
      %v1098 = vpack.c.b16 %v1096, %v1096
      %v1100 = vsel %vm1022, %v1089, 0
      %v1103 = vsel %vm1022, %v1090, 0
      %v1106 = vsel %vm1022, %v1097, 0
      %v1109 = vsel %vm1022, %v1098, 0
      %1111 = vmatprep.subr.bf16.mxu0 0
      %1112 = vmatpush1.bf16.xpose.msra.mxu0 0
      %1113 = vmatprep.subr.bf16.mxu0 0
      %1114 = vmatpush1.bf16.xpose.msra.mxu0 0
      %1115 = vmatprep.subr.bf16.mxu0 0
      %1116 = vmatpush1.bf16.xpose.msra.mxu0 0
      %1117 = vmatprep.subr.bf16.mxu0 0
      %1118 = vmatpush1.bf16.xpose.msra.mxu0 0
      %1119 = vmatprep.subr.bf16.mxu0 0
      %1120 = vmatpush1.bf16.xpose.msra.mxu0 0
      %1121 = vmatprep.subr.bf16.mxu0 0
      %1122 = vmatpush1.bf16.xpose.msra.mxu0 0
      %1123 = vmatprep.subr.bf16.mxu0 0
      %1124 = vmatpush1.bf16.xpose.msra.mxu0 %v1109
      %1125 = vmatprep.subr.bf16.mxu0 0
      %1126 = vmatpush1.bf16.xpose.msra.mxu0 %v1106
      %1127 = vmatprep.subr.bf16.mxu0 0
      %1128 = vmatpush2.bf16.xpose.msra.mxu0 0
      %1129 = vmatprep.subr.bf16.mxu0 0
      %1130 = vmatpush2.bf16.xpose.msra.mxu0 0
      %1131 = vmatprep.subr.bf16.mxu0 0
      %1132 = vmatpush2.bf16.xpose.msra.mxu0 0
      %1133 = vmatprep.subr.bf16.mxu0 0
      %1134 = vmatpush2.bf16.xpose.msra.mxu0 0
      %1135 = vmatprep.subr.bf16.mxu0 0
      %1136 = vmatpush2.bf16.xpose.msra.mxu0 0
      %1137 = vmatprep.subr.bf16.mxu0 0
      %1138 = vmatpush2.bf16.xpose.msra.mxu0 0
      %1139 = vmatprep.subr.bf16.mxu0 0
      %1140 = vmatpush2.bf16.xpose.msra.mxu0 0
      %1141 = vmatprep.subr.bf16.mxu0 0
      %1142 = vmatpush2.bf16.xpose.msra.mxu0 0
      %1143 = vmatprep.mubr.bf16.mxu0 0
      %1144 = vmatmul.mubr.bf16.gmra.mxu0 %v1100
      %v1145 = vpop.f32.mrf.mxu0
      %v1146 = vadd.f32 0.0, %v1145
      %v1147 = vpop.f32.mrf.mxu0
      %v1148 = vpop.f32.mrf.mxu0
      %v1149 = vadd.f32 0.0, %v1148
      %v1150 = vpop.f32.mrf.mxu0
      %1151 = vmatprep.mubr.bf16.mxu0 0
      %1152 = vmatmul.mubr.bf16.gmra.mxu0 %v1103
      %v1153 = vpop.f32.mrf.mxu0
      %v1154 = vadd.f32 0.0, %v1153
      %v1155 = vpop.f32.mrf.mxu0
      %v1156 = vpop.f32.mrf.mxu0
      %v1157 = vpop.f32.mrf.mxu0
      %1158 = vdwg.mxu0
      %v1162 = vunpack.c.l.b16 %v988
      %v1163 = vunpack.c.l.b16 %v989
      %v1164 = vunpack.c.l.b16 %v990
      %v1165 = vpack.c.b16 %v1163, %v1162
      %v1166 = vpack.c.b16 %v1164, %v1164
      %v1170 = vunpack.c.l.b16 %v1000
      %v1171 = vunpack.c.l.b16 %v1001
      %v1172 = vunpack.c.l.b16 %v1002
      %v1173 = vpack.c.b16 %v1171, %v1170
      %v1174 = vpack.c.b16 %v1172, %v1172
      %v1176 = vsel %vm1022, %v1165, 0
      %v1179 = vsel %vm1022, %v1166, 0
      %v1182 = vsel %vm1022, %v1173, 0
      %v1185 = vsel %vm1022, %v1174, 0
      %1187 = vmatprep.subr.bf16.mxu0 0
      %1188 = vmatpush1.bf16.xpose.msra.mxu0 0
      %1189 = vmatprep.subr.bf16.mxu0 0
      %1190 = vmatpush1.bf16.xpose.msra.mxu0 0
      %1191 = vmatprep.subr.bf16.mxu0 0
      %1192 = vmatpush1.bf16.xpose.msra.mxu0 0
      %1193 = vmatprep.subr.bf16.mxu0 0
      %1194 = vmatpush1.bf16.xpose.msra.mxu0 0
      %1195 = vmatprep.subr.bf16.mxu0 0
      %1196 = vmatpush1.bf16.xpose.msra.mxu0 0
      %1197 = vmatprep.subr.bf16.mxu0 0
      %1198 = vmatpush1.bf16.xpose.msra.mxu0 0
      %1199 = vmatprep.subr.bf16.mxu0 0
      %1200 = vmatpush1.bf16.xpose.msra.mxu0 %v1185
      %1201 = vmatprep.subr.bf16.mxu0 0
      %1202 = vmatpush1.bf16.xpose.msra.mxu0 %v1182
      %1203 = vmatprep.subr.bf16.mxu0 0
      %1204 = vmatpush2.bf16.xpose.msra.mxu0 0
      %1205 = vmatprep.subr.bf16.mxu0 0
      %1206 = vmatpush2.bf16.xpose.msra.mxu0 0
      %1207 = vmatprep.subr.bf16.mxu0 0
      %1208 = vmatpush2.bf16.xpose.msra.mxu0 0
      %1209 = vmatprep.subr.bf16.mxu0 0
      %1210 = vmatpush2.bf16.xpose.msra.mxu0 0
      %1211 = vmatprep.subr.bf16.mxu0 0
      %1212 = vmatpush2.bf16.xpose.msra.mxu0 0
      %1213 = vmatprep.subr.bf16.mxu0 0
      %1214 = vmatpush2.bf16.xpose.msra.mxu0 0
      %1215 = vmatprep.subr.bf16.mxu0 0
      %1216 = vmatpush2.bf16.xpose.msra.mxu0 0
      %1217 = vmatprep.subr.bf16.mxu0 0
      %1218 = vmatpush2.bf16.xpose.msra.mxu0 0
      %1219 = vmatprep.mubr.bf16.mxu0 0
      %1220 = vmatmul.mubr.bf16.gmra.mxu0 %v1176
      %v1221 = vpop.f32.mrf.mxu0
      %v1222 = vadd.f32 0.0, %v1221
      %v1223 = vpop.f32.mrf.mxu0
      %v1224 = vpop.f32.mrf.mxu0
      %v1225 = vadd.f32 0.0, %v1224
      %v1226 = vpop.f32.mrf.mxu0
      %1227 = vmatprep.mubr.bf16.mxu0 0
      %1228 = vmatmul.mubr.bf16.gmra.mxu0 %v1179
      %v1229 = vpop.f32.mrf.mxu0
      %v1230 = vadd.f32 0.0, %v1229
      %v1231 = vpop.f32.mrf.mxu0
      %v1232 = vpop.f32.mrf.mxu0
      %v1233 = vpop.f32.mrf.mxu0
      %1234 = vdwg.mxu0
      %v1238 = vunpack.c.l.b16 %v991
      %v1239 = vunpack.c.l.b16 %v992
      %v1240 = vunpack.c.l.b16 %v993
      %v1241 = vpack.c.b16 %v1239, %v1238
      %v1242 = vpack.c.b16 %v1240, %v1240
      %v1246 = vunpack.c.l.b16 %v1003
      %v1247 = vunpack.c.l.b16 %v1004
      %v1248 = vunpack.c.l.b16 %v1005
      %v1249 = vpack.c.b16 %v1247, %v1246
      %v1250 = vpack.c.b16 %v1248, %v1248
      %v1252 = vsel %vm1022, %v1241, 0
      %v1255 = vsel %vm1022, %v1242, 0
      %v1258 = vsel %vm1022, %v1249, 0
      %v1261 = vsel %vm1022, %v1250, 0
      %1263 = vmatprep.subr.bf16.mxu0 0
      %1264 = vmatpush1.bf16.xpose.msra.mxu0 0
      %1265 = vmatprep.subr.bf16.mxu0 0
      %1266 = vmatpush1.bf16.xpose.msra.mxu0 0
      %1267 = vmatprep.subr.bf16.mxu0 0
      %1268 = vmatpush1.bf16.xpose.msra.mxu0 0
      %1269 = vmatprep.subr.bf16.mxu0 0
      %1270 = vmatpush1.bf16.xpose.msra.mxu0 0
      %1271 = vmatprep.subr.bf16.mxu0 0
      %1272 = vmatpush1.bf16.xpose.msra.mxu0 0
      %1273 = vmatprep.subr.bf16.mxu0 0
      %1274 = vmatpush1.bf16.xpose.msra.mxu0 0
      %1275 = vmatprep.subr.bf16.mxu0 0
      %1276 = vmatpush1.bf16.xpose.msra.mxu0 %v1261
      %1277 = vmatprep.subr.bf16.mxu0 0
      %1278 = vmatpush1.bf16.xpose.msra.mxu0 %v1258
      %1279 = vmatprep.subr.bf16.mxu0 0
      %1280 = vmatpush2.bf16.xpose.msra.mxu0 0
      %1281 = vmatprep.subr.bf16.mxu0 0
      %1282 = vmatpush2.bf16.xpose.msra.mxu0 0
      %1283 = vmatprep.subr.bf16.mxu0 0
      %1284 = vmatpush2.bf16.xpose.msra.mxu0 0
      %1285 = vmatprep.subr.bf16.mxu0 0
      %1286 = vmatpush2.bf16.xpose.msra.mxu0 0
      %1287 = vmatprep.subr.bf16.mxu0 0
      %1288 = vmatpush2.bf16.xpose.msra.mxu0 0
      %1289 = vmatprep.subr.bf16.mxu0 0
      %1290 = vmatpush2.bf16.xpose.msra.mxu0 0
      %1291 = vmatprep.subr.bf16.mxu0 0
      %1292 = vmatpush2.bf16.xpose.msra.mxu0 0
      %1293 = vmatprep.subr.bf16.mxu0 0
      %1294 = vmatpush2.bf16.xpose.msra.mxu0 0
      %1295 = vmatprep.mubr.bf16.mxu0 0
      %1296 = vmatmul.mubr.bf16.gmra.mxu0 %v1252
      %v1297 = vpop.f32.mrf.mxu0
      %v1298 = vadd.f32 0.0, %v1297
      %v1299 = vpop.f32.mrf.mxu0
      %v1300 = vpop.f32.mrf.mxu0
      %v1301 = vadd.f32 0.0, %v1300
      %v1302 = vpop.f32.mrf.mxu0
      %1303 = vmatprep.mubr.bf16.mxu0 0
      %1304 = vmatmul.mubr.bf16.gmra.mxu0 %v1255
      %v1305 = vpop.f32.mrf.mxu0
      %v1306 = vadd.f32 0.0, %v1305
      %v1307 = vpop.f32.mrf.mxu0
      %v1308 = vpop.f32.mrf.mxu0
      %v1309 = vpop.f32.mrf.mxu0
      %1310 = vdwg.mxu0
      %vm1311 = vcmask 195584
      %v1312 = vsel %vm1311, %v1070, -inf
      %1313 = vmax.xlane.f32.xlu0 %v1312
      %v1314 = vpop.xlane.xlu0 %1313
      %v1315 = vsel %vm1311, %v1073, -inf
      %1316 = vmax.xlane.f32.xlu0 %v1315
      %v1317 = vpop.xlane.xlu0 %1316
      %v1318 = vsel %vm1311, %v1078, -inf
      %1319 = vmax.xlane.f32.xlu0 %v1318
      %v1320 = vpop.xlane.xlu0 %1319
      %v1321 = vsel %vm1311, %v1146, -inf
      %1322 = vmax.xlane.f32.xlu0 %v1321
      %v1323 = vpop.xlane.xlu0 %1322
      %v1324 = vsel %vm1311, %v1149, -inf
      %1325 = vmax.xlane.f32.xlu0 %v1324
      %v1326 = vpop.xlane.xlu0 %1325
      %v1327 = vsel %vm1311, %v1154, -inf
      %1328 = vmax.xlane.f32.xlu0 %v1327
      %v1329 = vpop.xlane.xlu0 %1328
      %v1330 = vsel %vm1311, %v1222, -inf
      %1331 = vmax.xlane.f32.xlu0 %v1330
      %v1332 = vpop.xlane.xlu0 %1331
      %v1333 = vsel %vm1311, %v1225, -inf
      %1334 = vmax.xlane.f32.xlu0 %v1333
      %v1335 = vpop.xlane.xlu0 %1334
      %v1336 = vsel %vm1311, %v1230, -inf
      %1337 = vmax.xlane.f32.xlu0 %v1336
      %v1338 = vpop.xlane.xlu0 %1337
      %v1339 = vsel %vm1311, %v1298, -inf
      %1340 = vmax.xlane.f32.xlu0 %v1339
      %v1341 = vpop.xlane.xlu0 %1340
      %v1342 = vsel %vm1311, %v1301, -inf
      %1343 = vmax.xlane.f32.xlu0 %v1342
      %v1344 = vpop.xlane.xlu0 %1343
      %v1345 = vsel %vm1311, %v1306, -inf
      %1346 = vmax.xlane.f32.xlu0 %v1345
      %v1347 = vpop.xlane.xlu0 %1346
      %v1348 = vsub.f32 %v1070, %v1314
      %v1349 = vsub.f32 %v1073, %v1317
      %v1350 = vsub.f32 %v1078, %v1320
      %v1351 = vsub.f32 %v1146, %v1323
      %v1352 = vsub.f32 %v1149, %v1326
      %v1353 = vsub.f32 %v1154, %v1329
      %v1354 = vsub.f32 %v1222, %v1332
      %v1355 = vsub.f32 %v1225, %v1335
      %v1356 = vsub.f32 %v1230, %v1338
      %v1357 = vsub.f32 %v1298, %v1341
      %v1358 = vsub.f32 %v1301, %v1344
      %v1359 = vsub.f32 %v1306, %v1347
      %v1360 = vmul.f32 %v1348, 1.442695
      %v1361 = vpow.pop %v1360
      %v1362 = vmul.f32 %v1349, 1.442695
      %v1363 = vpow.pop %v1362
      %v1364 = vmul.f32 %v1350, 1.442695
      %v1365 = vpow.pop %v1364
      %v1366 = vmul.f32 %v1351, 1.442695
      %v1367 = vpow.pop %v1366
      %v1368 = vmul.f32 %v1352, 1.442695
      %v1369 = vpow.pop %v1368
      %v1370 = vmul.f32 %v1353, 1.442695
      %v1371 = vpow.pop %v1370
      %v1372 = vmul.f32 %v1354, 1.442695
      %v1373 = vpow.pop %v1372
      %v1374 = vmul.f32 %v1355, 1.442695
      %v1375 = vpow.pop %v1374
      %v1376 = vmul.f32 %v1356, 1.442695
      %v1377 = vpow.pop %v1376
      %v1378 = vmul.f32 %v1357, 1.442695
      %v1379 = vpow.pop %v1378
      %v1380 = vmul.f32 %v1358, 1.442695
      %v1381 = vpow.pop %v1380
      %v1382 = vmul.f32 %v1359, 1.442695
      %v1383 = vpow.pop %v1382
      %v1384 = vsel %vm1311, %v1361, 0.0
      %1385 = vadd.xlane.f32.xlu0 %v1384
      %v1386 = vpop.xlane.xlu0 %1385
      %v1387 = vsel %vm1311, %v1363, 0.0
      %1388 = vadd.xlane.f32.xlu0 %v1387
      %v1389 = vpop.xlane.xlu0 %1388
      %v1390 = vsel %vm1311, %v1365, 0.0
      %1391 = vadd.xlane.f32.xlu0 %v1390
      %v1392 = vpop.xlane.xlu0 %1391
      %v1393 = vsel %vm1311, %v1367, 0.0
      %1394 = vadd.xlane.f32.xlu0 %v1393
      %v1395 = vpop.xlane.xlu0 %1394
      %v1396 = vsel %vm1311, %v1369, 0.0
      %1397 = vadd.xlane.f32.xlu0 %v1396
      %v1398 = vpop.xlane.xlu0 %1397
      %v1399 = vsel %vm1311, %v1371, 0.0
      %1400 = vadd.xlane.f32.xlu0 %v1399
      %v1401 = vpop.xlane.xlu0 %1400
      %v1402 = vsel %vm1311, %v1373, 0.0
      %1403 = vadd.xlane.f32.xlu0 %v1402
      %v1404 = vpop.xlane.xlu0 %1403
      %v1405 = vsel %vm1311, %v1375, 0.0
      %1406 = vadd.xlane.f32.xlu0 %v1405
      %v1407 = vpop.xlane.xlu0 %1406
      %v1408 = vsel %vm1311, %v1377, 0.0
      %1409 = vadd.xlane.f32.xlu0 %v1408
      %v1410 = vpop.xlane.xlu0 %1409
      %v1411 = vsel %vm1311, %v1379, 0.0
      %1412 = vadd.xlane.f32.xlu0 %v1411
      %v1413 = vpop.xlane.xlu0 %1412
      %v1414 = vsel %vm1311, %v1381, 0.0
      %1415 = vadd.xlane.f32.xlu0 %v1414
      %v1416 = vpop.xlane.xlu0 %1415
      %v1417 = vsel %vm1311, %v1383, 0.0
      %1418 = vadd.xlane.f32.xlu0 %v1417
      %v1419 = vpop.xlane.xlu0 %1418
      %v1420 = vrcp.pop %v1386
      %v1421 = vrcp.pop %v1389
      %v1422 = vrcp.pop %v1392
      %v1423 = vrcp.pop %v1395
      %v1424 = vrcp.pop %v1398
      %v1425 = vrcp.pop %v1401
      %v1426 = vrcp.pop %v1404
      %v1427 = vrcp.pop %v1407
      %v1428 = vrcp.pop %v1410
      %v1429 = vrcp.pop %v1413
      %v1430 = vrcp.pop %v1416
      %v1431 = vrcp.pop %v1419
      %v1432 = vmul.f32 %v1361, %v1420
      %v1433 = vmul.f32 %v1363, %v1421
      %v1434 = vmul.f32 %v1365, %v1422
      %v1435 = vmul.f32 %v1367, %v1423
      %v1436 = vmul.f32 %v1369, %v1424
      %v1437 = vmul.f32 %v1371, %v1425
      %v1438 = vmul.f32 %v1373, %v1426
      %v1439 = vmul.f32 %v1375, %v1427
      %v1440 = vmul.f32 %v1377, %v1428
      %v1441 = vmul.f32 %v1379, %v1429
      %v1442 = vmul.f32 %v1381, %v1430
      %v1443 = vmul.f32 %v1383, %v1431
      %v1444 = vpack.c.bf16 %v1433, %v1432
      %v1445 = vpack.c.bf16 %v1434, %v1434
      %v1446 = vpack.c.bf16 %v1436, %v1435
      %v1447 = vpack.c.bf16 %v1437, %v1437
      %v1448 = vpack.c.bf16 %v1439, %v1438
      %v1449 = vpack.c.bf16 %v1440, %v1440
      %v1450 = vpack.c.bf16 %v1442, %v1441
      %v1451 = vpack.c.bf16 %v1443, %v1443
      %v1452 = vld [vmem:[#allocation4] sm:$0xf]
      %v1453 = vld [vmem:[#allocation4 + $0x4] sm:$0xf]
      %v1454 = vld [vmem:[#allocation4 + $0x8] sm:$0xf]
      %v1455 = vld [vmem:[#allocation4 + $0xc] sm:$0xf]
      %v1456 = vld [vmem:[#allocation4 + $0x10] sm:$0xf]
      %v1457 = vld [vmem:[#allocation4 + $0x14] sm:$0xf]
      %v1458 = vld [vmem:[#allocation4 + $0x18] sm:$0xf]
      %v1459 = vld [vmem:[#allocation4 + $0x1c] sm:$0xf]
      %v1460 = vld [vmem:[#allocation4 + $0x20] sm:$0xf]
      %v1461 = vld [vmem:[#allocation4 + $0x24] sm:$0xf]
      %v1462 = vld [vmem:[#allocation4 + $0x28] sm:$0xf]
      %v1463 = vld [vmem:[#allocation4 + $0x2c] sm:$0xf]
      %v1467 = vunpack.c.l.b16 %v1452
      %v1468 = vunpack.c.l.b16 %v1453
      %v1469 = vunpack.c.l.b16 %v1454
      %v1470 = vpack.c.b16 %v1468, %v1467
      %v1471 = vpack.c.b16 %v1469, %v1469
      %v1474 = vsel %vm1311, %v1444, 0
      %v1477 = vsel %vm1311, %v1445, 0
      %vm1479 = vcmask 1043456
      %v1481 = vsel %vm1479, %v1471, 0
      %1483 = vmatprep.subr.bf16.mxu0 0
      %1484 = vmatpush1.bf16.msra.mxu0 0
      %1485 = vmatprep.subr.bf16.mxu0 0
      %1486 = vmatpush1.bf16.msra.mxu0 0
      %1487 = vmatprep.subr.bf16.mxu0 0
      %1488 = vmatpush1.bf16.msra.mxu0 0
      %1489 = vmatprep.subr.bf16.mxu0 0
      %1490 = vmatpush1.bf16.msra.mxu0 0
      %1491 = vmatprep.subr.bf16.mxu0 0
      %1492 = vmatpush1.bf16.msra.mxu0 0
      %1493 = vmatprep.subr.bf16.mxu0 0
      %1494 = vmatpush1.bf16.msra.mxu0 0
      %1495 = vmatprep.subr.bf16.mxu0 0
      %1496 = vmatpush1.bf16.msra.mxu0 %v1481
      %1497 = vmatprep.subr.bf16.mxu0 0
      %1498 = vmatpush1.bf16.msra.mxu0 %v1470
      %1499 = vmatprep.subr.bf16.mxu0 0
      %1500 = vmatpush2.bf16.msra.mxu0 0
      %1501 = vmatprep.subr.bf16.mxu0 0
      %1502 = vmatpush2.bf16.msra.mxu0 0
      %1503 = vmatprep.subr.bf16.mxu0 0
      %1504 = vmatpush2.bf16.msra.mxu0 0
      %1505 = vmatprep.subr.bf16.mxu0 0
      %1506 = vmatpush2.bf16.msra.mxu0 0
      %1507 = vmatprep.subr.bf16.mxu0 0
      %1508 = vmatpush2.bf16.msra.mxu0 0
      %1509 = vmatprep.subr.bf16.mxu0 0
      %1510 = vmatpush2.bf16.msra.mxu0 0
      %1511 = vmatprep.subr.bf16.mxu0 0
      %1512 = vmatpush2.bf16.msra.mxu0 0
      %1513 = vmatprep.subr.bf16.mxu0 0
      %1514 = vmatpush2.bf16.msra.mxu0 0
      %1515 = vmatprep.mubr.bf16.mxu0 0
      %1516 = vmatmul.mubr.bf16.gmra.mxu0 %v1474
      %v1517 = vpop.f32.mrf.mxu0
      %v1518 = vadd.f32 0.0, %v1517
      %v1519 = vpop.f32.mrf.mxu0
      %v1520 = vpop.f32.mrf.mxu0
      %v1521 = vadd.f32 0.0, %v1520
      %v1522 = vpop.f32.mrf.mxu0
      %1523 = vmatprep.mubr.bf16.mxu0 0
      %1524 = vmatmul.mubr.bf16.gmra.mxu0 %v1477
      %v1525 = vpop.f32.mrf.mxu0
      %v1526 = vadd.f32 0.0, %v1525
      %v1527 = vpop.f32.mrf.mxu0
      %v1528 = vpop.f32.mrf.mxu0
      %v1529 = vpop.f32.mrf.mxu0
      %1530 = vdwg.mxu0
      %v1534 = vunpack.c.l.b16 %v1455
      %v1535 = vunpack.c.l.b16 %v1456
      %v1536 = vunpack.c.l.b16 %v1457
      %v1537 = vpack.c.b16 %v1535, %v1534
      %v1538 = vpack.c.b16 %v1536, %v1536
      %v1541 = vsel %vm1311, %v1446, 0
      %v1544 = vsel %vm1311, %v1447, 0
      %v1547 = vsel %vm1479, %v1538, 0
      %1549 = vmatprep.subr.bf16.mxu0 0
      %1550 = vmatpush1.bf16.msra.mxu0 0
      %1551 = vmatprep.subr.bf16.mxu0 0
      %1552 = vmatpush1.bf16.msra.mxu0 0
      %1553 = vmatprep.subr.bf16.mxu0 0
      %1554 = vmatpush1.bf16.msra.mxu0 0
      %1555 = vmatprep.subr.bf16.mxu0 0
      %1556 = vmatpush1.bf16.msra.mxu0 0
      %1557 = vmatprep.subr.bf16.mxu0 0
      %1558 = vmatpush1.bf16.msra.mxu0 0
      %1559 = vmatprep.subr.bf16.mxu0 0
      %1560 = vmatpush1.bf16.msra.mxu0 0
      %1561 = vmatprep.subr.bf16.mxu0 0
      %1562 = vmatpush1.bf16.msra.mxu0 %v1547
      %1563 = vmatprep.subr.bf16.mxu0 0
      %1564 = vmatpush1.bf16.msra.mxu0 %v1537
      %1565 = vmatprep.subr.bf16.mxu0 0
      %1566 = vmatpush2.bf16.msra.mxu0 0
      %1567 = vmatprep.subr.bf16.mxu0 0
      %1568 = vmatpush2.bf16.msra.mxu0 0
      %1569 = vmatprep.subr.bf16.mxu0 0
      %1570 = vmatpush2.bf16.msra.mxu0 0
      %1571 = vmatprep.subr.bf16.mxu0 0
      %1572 = vmatpush2.bf16.msra.mxu0 0
      %1573 = vmatprep.subr.bf16.mxu0 0
      %1574 = vmatpush2.bf16.msra.mxu0 0
      %1575 = vmatprep.subr.bf16.mxu0 0
      %1576 = vmatpush2.bf16.msra.mxu0 0
      %1577 = vmatprep.subr.bf16.mxu0 0
      %1578 = vmatpush2.bf16.msra.mxu0 0
      %1579 = vmatprep.subr.bf16.mxu0 0
      %1580 = vmatpush2.bf16.msra.mxu0 0
      %1581 = vmatprep.mubr.bf16.mxu0 0
      %1582 = vmatmul.mubr.bf16.gmra.mxu0 %v1541
      %v1583 = vpop.f32.mrf.mxu0
      %v1584 = vadd.f32 0.0, %v1583
      %v1585 = vpop.f32.mrf.mxu0
      %v1586 = vpop.f32.mrf.mxu0
      %v1587 = vadd.f32 0.0, %v1586
      %v1588 = vpop.f32.mrf.mxu0
      %1589 = vmatprep.mubr.bf16.mxu0 0
      %1590 = vmatmul.mubr.bf16.gmra.mxu0 %v1544
      %v1591 = vpop.f32.mrf.mxu0
      %v1592 = vadd.f32 0.0, %v1591
      %v1593 = vpop.f32.mrf.mxu0
      %v1594 = vpop.f32.mrf.mxu0
      %v1595 = vpop.f32.mrf.mxu0
      %1596 = vdwg.mxu0
      %v1600 = vunpack.c.l.b16 %v1458
      %v1601 = vunpack.c.l.b16 %v1459
      %v1602 = vunpack.c.l.b16 %v1460
      %v1603 = vpack.c.b16 %v1601, %v1600
      %v1604 = vpack.c.b16 %v1602, %v1602
      %v1607 = vsel %vm1311, %v1448, 0
      %v1610 = vsel %vm1311, %v1449, 0
      %v1613 = vsel %vm1479, %v1604, 0
      %1615 = vmatprep.subr.bf16.mxu0 0
      %1616 = vmatpush1.bf16.msra.mxu0 0
      %1617 = vmatprep.subr.bf16.mxu0 0
      %1618 = vmatpush1.bf16.msra.mxu0 0
      %1619 = vmatprep.subr.bf16.mxu0 0
      %1620 = vmatpush1.bf16.msra.mxu0 0
      %1621 = vmatprep.subr.bf16.mxu0 0
      %1622 = vmatpush1.bf16.msra.mxu0 0
      %1623 = vmatprep.subr.bf16.mxu0 0
      %1624 = vmatpush1.bf16.msra.mxu0 0
      %1625 = vmatprep.subr.bf16.mxu0 0
      %1626 = vmatpush1.bf16.msra.mxu0 0
      %1627 = vmatprep.subr.bf16.mxu0 0
      %1628 = vmatpush1.bf16.msra.mxu0 %v1613
      %1629 = vmatprep.subr.bf16.mxu0 0
      %1630 = vmatpush1.bf16.msra.mxu0 %v1603
      %1631 = vmatprep.subr.bf16.mxu0 0
      %1632 = vmatpush2.bf16.msra.mxu0 0
      %1633 = vmatprep.subr.bf16.mxu0 0
      %1634 = vmatpush2.bf16.msra.mxu0 0
      %1635 = vmatprep.subr.bf16.mxu0 0
      %1636 = vmatpush2.bf16.msra.mxu0 0
      %1637 = vmatprep.subr.bf16.mxu0 0
      %1638 = vmatpush2.bf16.msra.mxu0 0
      %1639 = vmatprep.subr.bf16.mxu0 0
      %1640 = vmatpush2.bf16.msra.mxu0 0
      %1641 = vmatprep.subr.bf16.mxu0 0
      %1642 = vmatpush2.bf16.msra.mxu0 0
      %1643 = vmatprep.subr.bf16.mxu0 0
      %1644 = vmatpush2.bf16.msra.mxu0 0
      %1645 = vmatprep.subr.bf16.mxu0 0
      %1646 = vmatpush2.bf16.msra.mxu0 0
      %1647 = vmatprep.mubr.bf16.mxu0 0
      %1648 = vmatmul.mubr.bf16.gmra.mxu0 %v1607
      %v1649 = vpop.f32.mrf.mxu0
      %v1650 = vadd.f32 0.0, %v1649
      %v1651 = vpop.f32.mrf.mxu0
      %v1652 = vpop.f32.mrf.mxu0
      %v1653 = vadd.f32 0.0, %v1652
      %v1654 = vpop.f32.mrf.mxu0
      %1655 = vmatprep.mubr.bf16.mxu0 0
      %1656 = vmatmul.mubr.bf16.gmra.mxu0 %v1610
      %v1657 = vpop.f32.mrf.mxu0
      %v1658 = vadd.f32 0.0, %v1657
      %v1659 = vpop.f32.mrf.mxu0
      %v1660 = vpop.f32.mrf.mxu0
      %v1661 = vpop.f32.mrf.mxu0
      %1662 = vdwg.mxu0
      %v1666 = vunpack.c.l.b16 %v1461
      %v1667 = vunpack.c.l.b16 %v1462
      %v1668 = vunpack.c.l.b16 %v1463
      %v1669 = vpack.c.b16 %v1667, %v1666
      %v1670 = vpack.c.b16 %v1668, %v1668
      %v1673 = vsel %vm1311, %v1450, 0
      %v1676 = vsel %vm1311, %v1451, 0
      %v1679 = vsel %vm1479, %v1670, 0
      %1681 = vmatprep.subr.bf16.mxu0 0
      %1682 = vmatpush1.bf16.msra.mxu0 0
      %1683 = vmatprep.subr.bf16.mxu0 0
      %1684 = vmatpush1.bf16.msra.mxu0 0
      %1685 = vmatprep.subr.bf16.mxu0 0
      %1686 = vmatpush1.bf16.msra.mxu0 0
      %1687 = vmatprep.subr.bf16.mxu0 0
      %1688 = vmatpush1.bf16.msra.mxu0 0
      %1689 = vmatprep.subr.bf16.mxu0 0
      %1690 = vmatpush1.bf16.msra.mxu0 0
      %1691 = vmatprep.subr.bf16.mxu0 0
      %1692 = vmatpush1.bf16.msra.mxu0 0
      %1693 = vmatprep.subr.bf16.mxu0 0
      %1694 = vmatpush1.bf16.msra.mxu0 %v1679
      %1695 = vmatprep.subr.bf16.mxu0 0
      %1696 = vmatpush1.bf16.msra.mxu0 %v1669
      %1697 = vmatprep.subr.bf16.mxu0 0
      %1698 = vmatpush2.bf16.msra.mxu0 0
      %1699 = vmatprep.subr.bf16.mxu0 0
      %1700 = vmatpush2.bf16.msra.mxu0 0
      %1701 = vmatprep.subr.bf16.mxu0 0
      %1702 = vmatpush2.bf16.msra.mxu0 0
      %1703 = vmatprep.subr.bf16.mxu0 0
      %1704 = vmatpush2.bf16.msra.mxu0 0
      %1705 = vmatprep.subr.bf16.mxu0 0
      %1706 = vmatpush2.bf16.msra.mxu0 0
      %1707 = vmatprep.subr.bf16.mxu0 0
      %1708 = vmatpush2.bf16.msra.mxu0 0
      %1709 = vmatprep.subr.bf16.mxu0 0
      %1710 = vmatpush2.bf16.msra.mxu0 0
      %1711 = vmatprep.subr.bf16.mxu0 0
      %1712 = vmatpush2.bf16.msra.mxu0 0
      %1713 = vmatprep.mubr.bf16.mxu0 0
      %1714 = vmatmul.mubr.bf16.gmra.mxu0 %v1673
      %v1715 = vpop.f32.mrf.mxu0
      %v1716 = vadd.f32 0.0, %v1715
      %v1717 = vpop.f32.mrf.mxu0
      %v1718 = vpop.f32.mrf.mxu0
      %v1719 = vadd.f32 0.0, %v1718
      %v1720 = vpop.f32.mrf.mxu0
      %1721 = vmatprep.mubr.bf16.mxu0 0
      %1722 = vmatmul.mubr.bf16.gmra.mxu0 %v1676
      %v1723 = vpop.f32.mrf.mxu0
      %v1724 = vadd.f32 0.0, %v1723
      %v1725 = vpop.f32.mrf.mxu0
      %v1726 = vpop.f32.mrf.mxu0
      %v1727 = vpop.f32.mrf.mxu0
      %1728 = vdwg.mxu0
      %v1729 = vpack.c.bf16 %v1521, %v1518
      %v1730 = vpack.c.bf16 %v1526, %v1526
      %v1733 = vunpack.c.l.b16 %v1729
      %v1734 = vunpack.c.h.b16 %v1729
      %v1735 = vunpack.c.l.b16 %v1730
      %v1736 = vpack.c.b16 %v1733, %v1733
      %v1737 = vpack.c.b16 %v1734, %v1734
      %v1738 = vpack.c.b16 %v1735, %v1735
      %vm1742 = vcmask 257024
      %1743 = vst.msk [vmem:[#allocation5] sm:$0xf] %vm1742, %v1736
      %1744 = vst.msk [vmem:[#allocation5 + $0x4] sm:$0xf] %vm1742, %v1737
      %1745 = vst.msk [vmem:[#allocation5 + $0x8] sm:$0xf] %vm1742, %v1738
      %v1746 = vpack.c.bf16 %v1587, %v1584
      %v1747 = vpack.c.bf16 %v1592, %v1592
      %v1750 = vunpack.c.l.b16 %v1746
      %v1751 = vunpack.c.h.b16 %v1746
      %v1752 = vunpack.c.l.b16 %v1747
      %v1753 = vpack.c.b16 %v1750, %v1750
      %v1754 = vpack.c.b16 %v1751, %v1751
      %v1755 = vpack.c.b16 %v1752, %v1752
      %1756 = vrot.lane.b32.xlu0 %v1753, 32
      %v1757 = vpop.permute.xlu0 %1756
      %1758 = vrot.lane.b32.xlu0 %v1754, 32
      %v1759 = vpop.permute.xlu0 %1758
      %1760 = vrot.lane.b32.xlu0 %v1755, 32
      %v1761 = vpop.permute.xlu0 %1760
      %vm1765 = vcmask 519424
      %1766 = vst.msk [vmem:[#allocation5] sm:$0xf] %vm1765, %v1757
      %1767 = vst.msk [vmem:[#allocation5 + $0x4] sm:$0xf] %vm1765, %v1759
      %1768 = vst.msk [vmem:[#allocation5 + $0x8] sm:$0xf] %vm1765, %v1761
      %v1769 = vpack.c.bf16 %v1653, %v1650
      %v1770 = vpack.c.bf16 %v1658, %v1658
      %v1773 = vunpack.c.l.b16 %v1769
      %v1774 = vunpack.c.h.b16 %v1769
      %v1775 = vunpack.c.l.b16 %v1770
      %v1776 = vpack.c.b16 %v1773, %v1773
      %v1777 = vpack.c.b16 %v1774, %v1774
      %v1778 = vpack.c.b16 %v1775, %v1775
      %1779 = vrot.lane.b32.xlu0 %v1776, 64
      %v1780 = vpop.permute.xlu0 %1779
      %1781 = vrot.lane.b32.xlu0 %v1777, 64
      %v1782 = vpop.permute.xlu0 %1781
      %1783 = vrot.lane.b32.xlu0 %v1778, 64
      %v1784 = vpop.permute.xlu0 %1783
      %vm1788 = vcmask 781824
      %1789 = vst.msk [vmem:[#allocation5] sm:$0xf] %vm1788, %v1780
      %1790 = vst.msk [vmem:[#allocation5 + $0x4] sm:$0xf] %vm1788, %v1782
      %1791 = vst.msk [vmem:[#allocation5 + $0x8] sm:$0xf] %vm1788, %v1784
      %v1792 = vpack.c.bf16 %v1719, %v1716
      %v1793 = vpack.c.bf16 %v1724, %v1724
      %v1796 = vunpack.c.l.b16 %v1792
      %v1797 = vunpack.c.h.b16 %v1792
      %v1798 = vunpack.c.l.b16 %v1793
      %v1799 = vpack.c.b16 %v1796, %v1796
      %v1800 = vpack.c.b16 %v1797, %v1797
      %v1801 = vpack.c.b16 %v1798, %v1798
      %1802 = vrot.lane.b32.xlu0 %v1799, 96
      %v1803 = vpop.permute.xlu0 %1802
      %1804 = vrot.lane.b32.xlu0 %v1800, 96
      %v1805 = vpop.permute.xlu0 %1804
      %1806 = vrot.lane.b32.xlu0 %v1801, 96
      %v1807 = vpop.permute.xlu0 %1806
      %vm1811 = vcmask 1044224
      %1812 = vst.msk [vmem:[#allocation5] sm:$0xf] %vm1811, %v1803
      %1813 = vst.msk [vmem:[#allocation5 + $0x4] sm:$0xf] %vm1811, %v1805
      %1814 = vst.msk [vmem:[#allocation5 + $0x8] sm:$0xf] %vm1811, %v1807
      %v1815 = vld [vmem:[#allocation5] sm:$0xf]
      %v1816 = vld [vmem:[#allocation5 + $0x4] sm:$0xf]
      %v1817 = vld [vmem:[#allocation5 + $0x8] sm:$0xf]
      %v1818 = vld [vmem:[%s5] sm:$0xf]
      %v1819 = vld [vmem:[%s5 + $0x4] sm:$0xf]
      %v1820 = vld [vmem:[%s5 + $0x8] sm:$0xf]
      %v1821 = vld [vmem:[%s5 + $0xc] sm:$0xf]
      %v1822 = vld [vmem:[%s5 + $0x10] sm:$0xf]
      %v1823 = vld [vmem:[%s5 + $0x14] sm:$0xf]
      %v1824 = vld [vmem:[%s5 + $0x18] sm:$0xf]
      %v1825 = vld [vmem:[%s5 + $0x1c] sm:$0xf]
      %v1826 = vld [vmem:[%s5 + $0x20] sm:$0xf]
      %v1827 = vld [vmem:[%s5 + $0x24] sm:$0xf]
      %v1828 = vld [vmem:[%s5 + $0x28] sm:$0xf]
      %v1829 = vld [vmem:[%s5 + $0x2c] sm:$0xf]
      %v1830 = vld [vmem:[%s5 + $0x30] sm:$0xf]
      %v1831 = vld [vmem:[%s5 + $0x34] sm:$0xf]
      %v1832 = vld [vmem:[%s5 + $0x38] sm:$0xf]
      %v1833 = vld [vmem:[%s5 + $0x3c] sm:$0xf]
      %v1834 = vld [vmem:[%s6] sm:$0x1]
      %v1836 = vlaneseq
      %v1837 = vshrl.u32 %v1836, 7
      %v1838 = vsub.s32 0, %v1837
      %v1839 = vrot.slane %v1834, %v1838
      %v1844 = vunpack.c.l.b16 %v1815
      %v1845 = vunpack.c.l.b16 %v1816
      %v1846 = vunpack.c.l.b16 %v1817
      %v1847 = vpack.c.b16 %v1845, %v1844
      %v1848 = vpack.c.b16 %v1846, %v1846
      %v1867 = vunpack.c.l.b16 %v1818
      %v1868 = vunpack.c.l.b16 %v1819
      %v1869 = vunpack.c.l.b16 %v1820
      %v1870 = vunpack.c.l.b16 %v1821
      %v1871 = vunpack.c.l.b16 %v1822
      %v1872 = vunpack.c.l.b16 %v1823
      %v1873 = vunpack.c.l.b16 %v1824
      %v1874 = vunpack.c.l.b16 %v1825
      %v1875 = vunpack.c.l.b16 %v1826
      %v1876 = vunpack.c.l.b16 %v1827
      %v1877 = vunpack.c.l.b16 %v1828
      %v1878 = vunpack.c.l.b16 %v1829
      %v1879 = vunpack.c.l.b16 %v1830
      %v1880 = vunpack.c.l.b16 %v1831
      %v1881 = vunpack.c.l.b16 %v1832
      %v1882 = vunpack.c.l.b16 %v1833
      %v1883 = vpack.c.b16 %v1868, %v1867
      %v1884 = vpack.c.b16 %v1870, %v1869
      %v1885 = vpack.c.b16 %v1872, %v1871
      %v1886 = vpack.c.b16 %v1874, %v1873
      %v1887 = vpack.c.b16 %v1876, %v1875
      %v1888 = vpack.c.b16 %v1878, %v1877
      %v1889 = vpack.c.b16 %v1880, %v1879
      %v1890 = vpack.c.b16 %v1882, %v1881
      %1899 = vmatprep.subr.bf16.mxu0 0
      %1900 = vmatpush1.bf16.msra.mxu0 %v1890
      %1901 = vmatprep.subr.bf16.mxu0 0
      %1902 = vmatpush1.bf16.msra.mxu0 %v1889
      %1903 = vmatprep.subr.bf16.mxu0 0
      %1904 = vmatpush1.bf16.msra.mxu0 %v1888
      %1905 = vmatprep.subr.bf16.mxu0 0
      %1906 = vmatpush1.bf16.msra.mxu0 %v1887
      %1907 = vmatprep.subr.bf16.mxu0 0
      %1908 = vmatpush1.bf16.msra.mxu0 %v1886
      %1909 = vmatprep.subr.bf16.mxu0 0
      %1910 = vmatpush1.bf16.msra.mxu0 %v1885
      %1911 = vmatprep.subr.bf16.mxu0 0
      %1912 = vmatpush1.bf16.msra.mxu0 %v1884
      %1913 = vmatprep.subr.bf16.mxu0 0
      %1914 = vmatpush1.bf16.msra.mxu0 %v1883
      %1915 = vmatprep.subr.bf16.mxu0 0
      %1916 = vmatpush2.bf16.msra.mxu0 0
      %1917 = vmatprep.subr.bf16.mxu0 0
      %1918 = vmatpush2.bf16.msra.mxu0 0
      %1919 = vmatprep.subr.bf16.mxu0 0
      %1920 = vmatpush2.bf16.msra.mxu0 0
      %1921 = vmatprep.subr.bf16.mxu0 0
      %1922 = vmatpush2.bf16.msra.mxu0 0
      %1923 = vmatprep.subr.bf16.mxu0 0
      %1924 = vmatpush2.bf16.msra.mxu0 0
      %1925 = vmatprep.subr.bf16.mxu0 0
      %1926 = vmatpush2.bf16.msra.mxu0 0
      %1927 = vmatprep.subr.bf16.mxu0 0
      %1928 = vmatpush2.bf16.msra.mxu0 0
      %1929 = vmatprep.subr.bf16.mxu0 0
      %1930 = vmatpush2.bf16.msra.mxu0 0
      %1931 = vmatprep.mubr.bf16.mxu0 0
      %1932 = vmatmul.mubr.bf16.gmra.mxu0 %v1847
      %v1933 = vpop.f32.mrf.mxu0
      %v1934 = vadd.f32 %v1839, %v1933
      %v1935 = vpop.f32.mrf.mxu0
      %v1936 = vpop.f32.mrf.mxu0
      %v1937 = vadd.f32 %v1839, %v1936
      %v1938 = vpop.f32.mrf.mxu0
      %1939 = vmatprep.mubr.bf16.mxu0 0
      %1940 = vmatmul.mubr.bf16.gmra.mxu0 %v1848
      %v1941 = vpop.f32.mrf.mxu0
      %v1942 = vadd.f32 %v1839, %v1941
      %v1943 = vpop.f32.mrf.mxu0
      %v1944 = vpop.f32.mrf.mxu0
      %v1945 = vpop.f32.mrf.mxu0
      %1946 = vdwg.mxu0
      %v1947 = vadd.f32 %v975, %v1934
      %v1948 = vadd.f32 %v976, %v1937
      %v1949 = vadd.f32 %v977, %v1942
      %v1950 = vld [vmem:[%s7] sm:$0x1]
      %v1951 = vld [vmem:[%s8] sm:$0x1]
      %1952 = vadd.xlane.f32.xlu0 %v1947
      %v1953 = vpop.xlane.xlu0 %1952
      %1954 = vadd.xlane.f32.xlu0 %v1948
      %v1955 = vpop.xlane.xlu0 %1954
      %1956 = vadd.xlane.f32.xlu0 %v1949
      %v1957 = vpop.xlane.xlu0 %1956
      %v1958 = vrcp.pop 128.0
      %v1959 = vmul.f32 %v1953, %v1958
      %v1960 = vmul.f32 %v1955, %v1958
      %v1961 = vmul.f32 %v1957, %v1958
      %v1962 = vsub.f32 %v1947, %v1959
      %v1963 = vsub.f32 %v1948, %v1960
      %v1964 = vsub.f32 %v1949, %v1961
      %v1965 = vmul.f32 %v1962, %v1962
      %v1966 = vmul.f32 %v1963, %v1963
      %v1967 = vmul.f32 %v1964, %v1964
      %1968 = vadd.xlane.f32.xlu0 %v1965
      %v1969 = vpop.xlane.xlu0 %1968
      %1970 = vadd.xlane.f32.xlu0 %v1966
      %v1971 = vpop.xlane.xlu0 %1970
      %1972 = vadd.xlane.f32.xlu0 %v1967
      %v1973 = vpop.xlane.xlu0 %1972
      %v1974 = vmul.f32 %v1969, %v1958
      %v1975 = vmul.f32 %v1971, %v1958
      %v1976 = vmul.f32 %v1973, %v1958
      %v1977 = vadd.f32 %v1974, 1e-05
      %v1978 = vadd.f32 %v1975, 1e-05
      %v1979 = vadd.f32 %v1976, 1e-05
      %v1980 = vrsqrt.pop %v1977
      %v1981 = vrsqrt.pop %v1978
      %v1982 = vrsqrt.pop %v1979
      %v1983 = vmul.f32 %v1962, %v1980
      %v1984 = vmul.f32 %v1963, %v1981
      %v1985 = vmul.f32 %v1964, %v1982
      %v1987 = vlaneseq
      %v1988 = vshrl.u32 %v1987, 7
      %v1989 = vsub.s32 0, %v1988
      %v1990 = vrot.slane %v1950, %v1989
      %v1992 = vmul.f32 %v1983, %v1990
      %v1993 = vmul.f32 %v1984, %v1990
      %v1994 = vmul.f32 %v1985, %v1990
      %v1996 = vlaneseq
      %v1997 = vshrl.u32 %v1996, 7
      %v1998 = vsub.s32 0, %v1997
      %v1999 = vrot.slane %v1951, %v1998
      %v2001 = vadd.f32 %v1992, %v1999
      %v2002 = vadd.f32 %v1993, %v1999
      %v2003 = vadd.f32 %v1994, %v1999
      %v2004 = vpack.c.bf16 %v2002, %v2001
      %v2005 = vpack.c.bf16 %v2003, %v2003
      %v2006 = vld [vmem:[%s9] sm:$0xff]
      %v2007 = vld [vmem:[%s9 + $0x8] sm:$0xff]
      %v2008 = vld [vmem:[%s9 + $0x10] sm:$0xff]
      %v2009 = vld [vmem:[%s9 + $0x18] sm:$0xff]
      %v2010 = vld [vmem:[%s9 + $0x20] sm:$0xff]
      %v2011 = vld [vmem:[%s9 + $0x28] sm:$0xff]
      %v2012 = vld [vmem:[%s9 + $0x30] sm:$0xff]
      %v2013 = vld [vmem:[%s9 + $0x38] sm:$0xff]
      %v2014 = vld [vmem:[%s9 + $0x40] sm:$0xff]
      %v2015 = vld [vmem:[%s9 + $0x48] sm:$0xff]
      %v2016 = vld [vmem:[%s9 + $0x50] sm:$0xff]
      %v2017 = vld [vmem:[%s9 + $0x58] sm:$0xff]
      %v2018 = vld [vmem:[%s9 + $0x60] sm:$0xff]
      %v2019 = vld [vmem:[%s9 + $0x68] sm:$0xff]
      %v2020 = vld [vmem:[%s9 + $0x70] sm:$0xff]
      %v2021 = vld [vmem:[%s9 + $0x78] sm:$0xff]
      %v2022 = vld [vmem:[%s10] sm:$0x3]
      %v2024 = vlaneseq
      %v2025 = vshrl.u32 %v2024, 7
      %v2026 = vsub.s32 0, %v2025
      %v2027 = vrot.slane %v2022, %v2026
      %v2028 = vlaneseq
      %v2029 = vshrl.u32 %v2028, 7
      %v2030 = vsub.s32 1, %v2029
      %v2031 = vrot.slane %v2022, %v2030
      %v2050 = vunpack.c.l.b16 %v2006
      %v2051 = vunpack.c.h.b16 %v2006
      %v2052 = vunpack.c.l.b16 %v2007
      %v2053 = vunpack.c.h.b16 %v2007
      %v2054 = vunpack.c.l.b16 %v2008
      %v2055 = vunpack.c.h.b16 %v2008
      %v2056 = vunpack.c.l.b16 %v2009
      %v2057 = vunpack.c.h.b16 %v2009
      %v2058 = vunpack.c.l.b16 %v2010
      %v2059 = vunpack.c.h.b16 %v2010
      %v2060 = vunpack.c.l.b16 %v2011
      %v2061 = vunpack.c.h.b16 %v2011
      %v2062 = vunpack.c.l.b16 %v2012
      %v2063 = vunpack.c.h.b16 %v2012
      %v2064 = vunpack.c.l.b16 %v2013
      %v2065 = vunpack.c.h.b16 %v2013
      %v2066 = vunpack.c.l.b16 %v2014
      %v2067 = vunpack.c.h.b16 %v2014
      %v2068 = vunpack.c.l.b16 %v2015
      %v2069 = vunpack.c.h.b16 %v2015
      %v2070 = vunpack.c.l.b16 %v2016
      %v2071 = vunpack.c.h.b16 %v2016
      %v2072 = vunpack.c.l.b16 %v2017
      %v2073 = vunpack.c.h.b16 %v2017
      %v2074 = vunpack.c.l.b16 %v2018
      %v2075 = vunpack.c.h.b16 %v2018
      %v2076 = vunpack.c.l.b16 %v2019
      %v2077 = vunpack.c.h.b16 %v2019
      %v2078 = vunpack.c.l.b16 %v2020
      %v2079 = vunpack.c.h.b16 %v2020
      %v2080 = vunpack.c.l.b16 %v2021
      %v2081 = vunpack.c.h.b16 %v2021
      %v2082 = vpack.c.b16 %v2052, %v2050
      %v2083 = vpack.c.b16 %v2053, %v2051
      %v2084 = vpack.c.b16 %v2056, %v2054
      %v2085 = vpack.c.b16 %v2057, %v2055
      %v2086 = vpack.c.b16 %v2060, %v2058
      %v2087 = vpack.c.b16 %v2061, %v2059
      %v2088 = vpack.c.b16 %v2064, %v2062
      %v2089 = vpack.c.b16 %v2065, %v2063
      %v2090 = vpack.c.b16 %v2068, %v2066
      %v2091 = vpack.c.b16 %v2069, %v2067
      %v2092 = vpack.c.b16 %v2072, %v2070
      %v2093 = vpack.c.b16 %v2073, %v2071
      %v2094 = vpack.c.b16 %v2076, %v2074
      %v2095 = vpack.c.b16 %v2077, %v2075
      %v2096 = vpack.c.b16 %v2080, %v2078
      %v2097 = vpack.c.b16 %v2081, %v2079
      %2114 = vmatprep.subr.bf16.mxu0 %v2097
      %2115 = vmatpush1.bf16.msra.mxu0 %v2096
      %2116 = vmatprep.subr.bf16.mxu0 %v2095
      %2117 = vmatpush1.bf16.msra.mxu0 %v2094
      %2118 = vmatprep.subr.bf16.mxu0 %v2093
      %2119 = vmatpush1.bf16.msra.mxu0 %v2092
      %2120 = vmatprep.subr.bf16.mxu0 %v2091
      %2121 = vmatpush1.bf16.msra.mxu0 %v2090
      %2122 = vmatprep.subr.bf16.mxu0 %v2089
      %2123 = vmatpush1.bf16.msra.mxu0 %v2088
      %2124 = vmatprep.subr.bf16.mxu0 %v2087
      %2125 = vmatpush1.bf16.msra.mxu0 %v2086
      %2126 = vmatprep.subr.bf16.mxu0 %v2085
      %2127 = vmatpush1.bf16.msra.mxu0 %v2084
      %2128 = vmatprep.subr.bf16.mxu0 %v2083
      %2129 = vmatpush1.bf16.msra.mxu0 %v2082
      %2130 = vmatprep.subr.bf16.mxu0 0
      %2131 = vmatpush2.bf16.msra.mxu0 0
      %2132 = vmatprep.subr.bf16.mxu0 0
      %2133 = vmatpush2.bf16.msra.mxu0 0
      %2134 = vmatprep.subr.bf16.mxu0 0
      %2135 = vmatpush2.bf16.msra.mxu0 0
      %2136 = vmatprep.subr.bf16.mxu0 0
      %2137 = vmatpush2.bf16.msra.mxu0 0
      %2138 = vmatprep.subr.bf16.mxu0 0
      %2139 = vmatpush2.bf16.msra.mxu0 0
      %2140 = vmatprep.subr.bf16.mxu0 0
      %2141 = vmatpush2.bf16.msra.mxu0 0
      %2142 = vmatprep.subr.bf16.mxu0 0
      %2143 = vmatpush2.bf16.msra.mxu0 0
      %2144 = vmatprep.subr.bf16.mxu0 0
      %2145 = vmatpush2.bf16.msra.mxu0 0
      %2146 = vmatprep.mubr.bf16.mxu0 0
      %2147 = vmatmul.mubr.bf16.gmra.mxu0 %v2004
      %v2148 = vpop.f32.mrf.mxu0
      %v2149 = vadd.f32 %v2027, %v2148
      %v2150 = vpop.f32.mrf.mxu0
      %v2151 = vadd.f32 %v2031, %v2150
      %v2152 = vpop.f32.mrf.mxu0
      %v2153 = vadd.f32 %v2027, %v2152
      %v2154 = vpop.f32.mrf.mxu0
      %v2155 = vadd.f32 %v2031, %v2154
      %2156 = vmatprep.mubr.bf16.mxu0 0
      %2157 = vmatmul.mubr.bf16.gmra.mxu0 %v2005
      %v2158 = vpop.f32.mrf.mxu0
      %v2159 = vadd.f32 %v2027, %v2158
      %v2160 = vpop.f32.mrf.mxu0
      %v2161 = vadd.f32 %v2031, %v2160
      %v2162 = vpop.f32.mrf.mxu0
      %v2163 = vpop.f32.mrf.mxu0
      %2164 = vdwg.mxu0
      %v2165 = vmul.f32 %v2149, %v2149
      %v2166 = vmul.f32 %v2151, %v2151
      %v2167 = vmul.f32 %v2153, %v2153
      %v2168 = vmul.f32 %v2155, %v2155
      %v2169 = vmul.f32 %v2159, %v2159
      %v2170 = vmul.f32 %v2161, %v2161
      %v2171 = vmul.f32 %v2149, %v2165
      %v2172 = vmul.f32 %v2151, %v2166
      %v2173 = vmul.f32 %v2153, %v2167
      %v2174 = vmul.f32 %v2155, %v2168
      %v2175 = vmul.f32 %v2159, %v2169
      %v2176 = vmul.f32 %v2161, %v2170
      %v2177 = vmul.f32 %v2171, 0.044715
      %v2178 = vmul.f32 %v2172, 0.044715
      %v2179 = vmul.f32 %v2173, 0.044715
      %v2180 = vmul.f32 %v2174, 0.044715
      %v2181 = vmul.f32 %v2175, 0.044715
      %v2182 = vmul.f32 %v2176, 0.044715
      %v2183 = vadd.f32 %v2149, %v2177
      %v2184 = vadd.f32 %v2151, %v2178
      %v2185 = vadd.f32 %v2153, %v2179
      %v2186 = vadd.f32 %v2155, %v2180
      %v2187 = vadd.f32 %v2159, %v2181
      %v2188 = vadd.f32 %v2161, %v2182
      %v2189 = vmul.f32 %v2183, 0.7978846
      %v2190 = vmul.f32 %v2184, 0.7978846
      %v2191 = vmul.f32 %v2185, 0.7978846
      %v2192 = vmul.f32 %v2186, 0.7978846
      %v2193 = vmul.f32 %v2187, 0.7978846
      %v2194 = vmul.f32 %v2188, 0.7978846
      %v2195 = vtanh.pop %v2189
      %v2196 = vtanh.pop %v2190
      %v2197 = vtanh.pop %v2191
      %v2198 = vtanh.pop %v2192
      %v2199 = vtanh.pop %v2193
      %v2200 = vtanh.pop %v2194
      %v2201 = vadd.f32 %v2195, 1.0
      %v2202 = vadd.f32 %v2196, 1.0
      %v2203 = vadd.f32 %v2197, 1.0
      %v2204 = vadd.f32 %v2198, 1.0
      %v2205 = vadd.f32 %v2199, 1.0
      %v2206 = vadd.f32 %v2200, 1.0
      %v2207 = vmul.f32 %v2201, 0.5
      %v2208 = vmul.f32 %v2202, 0.5
      %v2209 = vmul.f32 %v2203, 0.5
      %v2210 = vmul.f32 %v2204, 0.5
      %v2211 = vmul.f32 %v2205, 0.5
      %v2212 = vmul.f32 %v2206, 0.5
      %v2213 = vmul.f32 %v2149, %v2207
      %v2214 = vmul.f32 %v2151, %v2208
      %v2215 = vmul.f32 %v2153, %v2209
      %v2216 = vmul.f32 %v2155, %v2210
      %v2217 = vmul.f32 %v2159, %v2211
      %v2218 = vmul.f32 %v2161, %v2212
      %v2219 = vpack.c.bf16 %v2215, %v2213
      %v2220 = vpack.c.bf16 %v2216, %v2214
      %v2221 = vpack.c.bf16 %v2217, %v2217
      %v2222 = vpack.c.bf16 %v2218, %v2218
      %v2223 = vld [vmem:[%s11] sm:$0xf]
      %v2224 = vld [vmem:[%s11 + $0x4] sm:$0xf]
      %v2225 = vld [vmem:[%s11 + $0x8] sm:$0xf]
      %v2226 = vld [vmem:[%s11 + $0xc] sm:$0xf]
      %v2227 = vld [vmem:[%s11 + $0x10] sm:$0xf]
      %v2228 = vld [vmem:[%s11 + $0x14] sm:$0xf]
      %v2229 = vld [vmem:[%s11 + $0x18] sm:$0xf]
      %v2230 = vld [vmem:[%s11 + $0x1c] sm:$0xf]
      %v2231 = vld [vmem:[%s11 + $0x20] sm:$0xf]
      %v2232 = vld [vmem:[%s11 + $0x24] sm:$0xf]
      %v2233 = vld [vmem:[%s11 + $0x28] sm:$0xf]
      %v2234 = vld [vmem:[%s11 + $0x2c] sm:$0xf]
      %v2235 = vld [vmem:[%s11 + $0x30] sm:$0xf]
      %v2236 = vld [vmem:[%s11 + $0x34] sm:$0xf]
      %v2237 = vld [vmem:[%s11 + $0x38] sm:$0xf]
      %v2238 = vld [vmem:[%s11 + $0x3c] sm:$0xf]
      %v2239 = vld [vmem:[%s11 + $0x40] sm:$0xf]
      %v2240 = vld [vmem:[%s11 + $0x44] sm:$0xf]
      %v2241 = vld [vmem:[%s11 + $0x48] sm:$0xf]
      %v2242 = vld [vmem:[%s11 + $0x4c] sm:$0xf]
      %v2243 = vld [vmem:[%s11 + $0x50] sm:$0xf]
      %v2244 = vld [vmem:[%s11 + $0x54] sm:$0xf]
      %v2245 = vld [vmem:[%s11 + $0x58] sm:$0xf]
      %v2246 = vld [vmem:[%s11 + $0x5c] sm:$0xf]
      %v2247 = vld [vmem:[%s11 + $0x60] sm:$0xf]
      %v2248 = vld [vmem:[%s11 + $0x64] sm:$0xf]
      %v2249 = vld [vmem:[%s11 + $0x68] sm:$0xf]
      %v2250 = vld [vmem:[%s11 + $0x6c] sm:$0xf]
      %v2251 = vld [vmem:[%s11 + $0x70] sm:$0xf]
      %v2252 = vld [vmem:[%s11 + $0x74] sm:$0xf]
      %v2253 = vld [vmem:[%s11 + $0x78] sm:$0xf]
      %v2254 = vld [vmem:[%s11 + $0x7c] sm:$0xf]
      %v2255 = vld [vmem:[%s12] sm:$0x1]
      %v2257 = vlaneseq
      %v2258 = vshrl.u32 %v2257, 7
      %v2259 = vsub.s32 0, %v2258
      %v2260 = vrot.slane %v2255, %v2259
      %v2294 = vunpack.c.l.b16 %v2223
      %v2295 = vunpack.c.l.b16 %v2224
      %v2296 = vunpack.c.l.b16 %v2225
      %v2297 = vunpack.c.l.b16 %v2226
      %v2298 = vunpack.c.l.b16 %v2227
      %v2299 = vunpack.c.l.b16 %v2228
      %v2300 = vunpack.c.l.b16 %v2229
      %v2301 = vunpack.c.l.b16 %v2230
      %v2302 = vunpack.c.l.b16 %v2231
      %v2303 = vunpack.c.l.b16 %v2232
      %v2304 = vunpack.c.l.b16 %v2233
      %v2305 = vunpack.c.l.b16 %v2234
      %v2306 = vunpack.c.l.b16 %v2235
      %v2307 = vunpack.c.l.b16 %v2236
      %v2308 = vunpack.c.l.b16 %v2237
      %v2309 = vunpack.c.l.b16 %v2238
      %v2310 = vunpack.c.l.b16 %v2239
      %v2311 = vunpack.c.l.b16 %v2240
      %v2312 = vunpack.c.l.b16 %v2241
      %v2313 = vunpack.c.l.b16 %v2242
      %v2314 = vunpack.c.l.b16 %v2243
      %v2315 = vunpack.c.l.b16 %v2244
      %v2316 = vunpack.c.l.b16 %v2245
      %v2317 = vunpack.c.l.b16 %v2246
      %v2318 = vunpack.c.l.b16 %v2247
      %v2319 = vunpack.c.l.b16 %v2248
      %v2320 = vunpack.c.l.b16 %v2249
      %v2321 = vunpack.c.l.b16 %v2250
      %v2322 = vunpack.c.l.b16 %v2251
      %v2323 = vunpack.c.l.b16 %v2252
      %v2324 = vunpack.c.l.b16 %v2253
      %v2325 = vunpack.c.l.b16 %v2254
      %v2326 = vpack.c.b16 %v2295, %v2294
      %v2327 = vpack.c.b16 %v2297, %v2296
      %v2328 = vpack.c.b16 %v2299, %v2298
      %v2329 = vpack.c.b16 %v2301, %v2300
      %v2330 = vpack.c.b16 %v2303, %v2302
      %v2331 = vpack.c.b16 %v2305, %v2304
      %v2332 = vpack.c.b16 %v2307, %v2306
      %v2333 = vpack.c.b16 %v2309, %v2308
      %v2334 = vpack.c.b16 %v2311, %v2310
      %v2335 = vpack.c.b16 %v2313, %v2312
      %v2336 = vpack.c.b16 %v2315, %v2314
      %v2337 = vpack.c.b16 %v2317, %v2316
      %v2338 = vpack.c.b16 %v2319, %v2318
      %v2339 = vpack.c.b16 %v2321, %v2320
      %v2340 = vpack.c.b16 %v2323, %v2322
      %v2341 = vpack.c.b16 %v2325, %v2324
      %2358 = vmatprep.subr.bf16.mxu0 0
      %2359 = vmatpush1.bf16.msra.mxu0 %v2333
      %2360 = vmatprep.subr.bf16.mxu0 0
      %2361 = vmatpush1.bf16.msra.mxu0 %v2332
      %2362 = vmatprep.subr.bf16.mxu0 0
      %2363 = vmatpush1.bf16.msra.mxu0 %v2331
      %2364 = vmatprep.subr.bf16.mxu0 0
      %2365 = vmatpush1.bf16.msra.mxu0 %v2330
      %2366 = vmatprep.subr.bf16.mxu0 0
      %2367 = vmatpush1.bf16.msra.mxu0 %v2329
      %2368 = vmatprep.subr.bf16.mxu0 0
      %2369 = vmatpush1.bf16.msra.mxu0 %v2328
      %2370 = vmatprep.subr.bf16.mxu0 0
      %2371 = vmatpush1.bf16.msra.mxu0 %v2327
      %2372 = vmatprep.subr.bf16.mxu0 0
      %2373 = vmatpush1.bf16.msra.mxu0 %v2326
      %2374 = vmatprep.subr.bf16.mxu0 0
      %2375 = vmatpush2.bf16.msra.mxu0 %v2341
      %2376 = vmatprep.subr.bf16.mxu0 0
      %2377 = vmatpush2.bf16.msra.mxu0 %v2340
      %2378 = vmatprep.subr.bf16.mxu0 0
      %2379 = vmatpush2.bf16.msra.mxu0 %v2339
      %2380 = vmatprep.subr.bf16.mxu0 0
      %2381 = vmatpush2.bf16.msra.mxu0 %v2338
      %2382 = vmatprep.subr.bf16.mxu0 0
      %2383 = vmatpush2.bf16.msra.mxu0 %v2337
      %2384 = vmatprep.subr.bf16.mxu0 0
      %2385 = vmatpush2.bf16.msra.mxu0 %v2336
      %2386 = vmatprep.subr.bf16.mxu0 0
      %2387 = vmatpush2.bf16.msra.mxu0 %v2335
      %2388 = vmatprep.subr.bf16.mxu0 0
      %2389 = vmatpush2.bf16.msra.mxu0 %v2334
      %2390 = vmatprep.mubr.bf16.mxu0 %v2220
      %2391 = vmatmul.mubr.bf16.gmra.mxu0 %v2219
      %v2392 = vpop.f32.mrf.mxu0
      %v2393 = vadd.f32 %v2260, %v2392
      %v2394 = vpop.f32.mrf.mxu0
      %v2395 = vpop.f32.mrf.mxu0
      %v2396 = vadd.f32 %v2260, %v2395
      %v2397 = vpop.f32.mrf.mxu0
      %2398 = vmatprep.mubr.bf16.mxu0 %v2222
      %2399 = vmatmul.mubr.bf16.gmra.mxu0 %v2221
      %v2400 = vpop.f32.mrf.mxu0
      %v2401 = vadd.f32 %v2260, %v2400
      %v2402 = vpop.f32.mrf.mxu0
      %v2403 = vpop.f32.mrf.mxu0
      %v2404 = vpop.f32.mrf.mxu0
      %2405 = vdwg.mxu0
      %v2406 = vadd.f32 %v1947, %v2393
      %v2407 = vadd.f32 %v1948, %v2396
      %v2408 = vadd.f32 %v1949, %v2401
      %2409 = vst [vmem:[%s462] sm:$0xff] %v2406
      %2410 = vst [vmem:[%s462 + $0x8] sm:$0xff] %v2407
      %2411 = vst [vmem:[%s462 + $0x10] sm:$0xff] %v2408
      %s2412 = smul.u32 3, %s29
      %p2413 = scmp.lt.s32.totalorder %s28, 1
      %s2414 = scalar_select %p2413, %s28, 1
      %p2415 = scmp.lt.s32.totalorder %s2412, 2
      %s2416 = scalar_select %p2415, %s2412, 2
      %s2417 = smul.addr %s2414, 3
      %s2418 = sadd.s32 %s2416, %s2417
      %s2419 = smul.addr %s2418, 8
      %s2420 = scalar_lea.vmem %s13, %s2419
      // Predicated region
      $region77: #{transformer_head_forward.5} parent=71 // pred_check
        %p2421 = pneg %p334
      $region78: #{transformer_head_forward.5} parent=71 // pred_check_branch
        %2423 = sbr.rel (%p2421) target = $region80
      $region79: #{transformer_head_forward.5} parent=71 // pred_region
        %s2424 = smul.u32 3, %s29
      $region80: #{transformer_head_forward.5} parent=71 // pred_fallthru
        _
    $region72: #{transformer_head_forward.5} parent=5 // pred_fallthru
      _
    %p2425 = scmp.le.s32.totalorder 2, %s19
    // Predicated region
    $region81: #{transformer_head_forward.5} parent=5 // pred_check
      %p2426 = pneg %p2425
    $region82: #{transformer_head_forward.5} parent=5 // pred_check_branch
      %2428 = sbr.rel (%p2426) target = $region84
    $region83: #{transformer_head_forward.5} parent=5 // pred_region
      %s2429 = ssub.s32 %s19, 2
      // Predicated region
      $region85: #{transformer_head_forward.5} parent=83 // pred_check
        %p2430 = pneg %p340
      $region86: #{transformer_head_forward.5} parent=83 // pred_check_branch
        %2432 = sbr.rel (%p2430) target = $region88
      $region87: #{transformer_head_forward.5} parent=83 // pred_region
        %s2433 = smul.u32 3, %s31
        %p2434 = scmp.lt.s32.totalorder %s30, 1
        %s2435 = scalar_select %p2434, %s30, 1
        %p2436 = scmp.lt.s32.totalorder %s2433, 2
        %s2437 = scalar_select %p2436, %s2433, 2
        %s2438 = smul.addr %s2435, 3
        %s2439 = sadd.s32 %s2437, %s2438
        %s2440 = smul.addr %s2439, 8
        %s2441 = scalar_lea.vmem %s13, %s2440
      $region88: #{transformer_head_forward.5} parent=83 // pred_fallthru
        _
    $region84: #{transformer_head_forward.5} parent=5 // pred_fallthru
      _
  $region6: #{transformer_head_forward.5} parent=0 // loop_footer
    %s23 = sadd.s32 1, %s19
  $region7: #{transformer_head_forward.5} parent=0 // loop_footer_branch
    %18 = sbr.rel target = $region3
  $region8: #{transformer_head_forward.5} parent=0 // loop_exit
    _

</llo_original>
